<compile_context>
chip_gen: v5e
topology: v5e:2x2
jax: 0.10.0
libtpu: 0.0.40
codegen_flags: <defaults>
</compile_context>

<pallas_src>
import functools

import jax
import jax.numpy as jnp
from jax.experimental import pallas as pl
from jax.experimental.pallas import tpu as pltpu


# ------------------------------------------------------------------ helpers
def get_sizes_list(dim, chunks):
    split_size = (dim + chunks - 1) // chunks
    sizes_list = [split_size] * chunks
    sizes_list[-1] = sizes_list[-1] - (sum(sizes_list) - dim)
    assert sum(sizes_list) == dim
    if sizes_list[-1] < 0:
        n_miss = sizes_list[-2] - sizes_list[-1]
        sizes_list[-1] = sizes_list[-2]
        for j in range(n_miss):
            sizes_list[-j - 1] -= 1
        assert sum(sizes_list) == dim
        assert min(sizes_list) > 0
    return sizes_list


def _round_up(x, m):
    return ((x + m - 1) // m) * m


def _pick_batch_tile(B, batch_tile):
    if B > batch_tile:
        return batch_tile
    if B >= 128:
        # v7x has 2 TensorCores; give the "parallel" batch grid >= 2 steps.
        return _round_up(pl.cdiv(B, 2), 8)
    return B  # single block == full batch dim (always a legal block shape)


# ------------------------------------------------------------------ kernel
def block_kernel(x0_ref, x1_ref,
                 w0_ref, b0_ref, w1_ref, b1_ref,
                 mw0_ref, mb0_ref, mw1_ref, mb1_ref,
                 wout_ref, bout_ref,
                 out_ref,
                 *, chunks, rank, size, pos_norm, unimodal):
    f32, bf16 = jnp.float32, jnp.bfloat16
    eps2 = 1e-24   # (1e-12)^2 -> rsqrt(max(ss, eps^2)) == 1/max(||z||, eps)
    tiny = 1e-30   # signed sqrt: sign(z)*sqrt(|z|) == z * rsqrt(max(|z|, tiny))

    # linear0 / linear1 : bf16 MXU matmuls, f32 accumulation -> (BT, mm_dim)
    x0 = (jnp.dot(x0_ref[...].astype(bf16), w0_ref[...],
                  preferred_element_type=f32) + b0_ref[...])
    x1 = (jnp.dot(x1_ref[...].astype(bf16), w1_ref[...],
                  preferred_element_type=f32) + b1_ref[...])
    x0_b = x0.astype(bf16)
    x1_b = x1.astype(bf16)

    mb0 = mb0_ref[...]   # (chunks, rank*size) f32, tiny
    mb1 = mb1_ref[...]

    z_parts = []
    ss_parts = []
    for c in range(chunks):            # static python loop: chunks is small
        x0_c = x0_b[:, c * size:(c + 1) * size]
        x1_c = x1_b[:, c * size:(c + 1) * size]

        # rank-fused merge matmuls: one dot per chunk per modality,
        # (BT, size) x (size, rank*size) -> (BT, rank*size)
        m0 = (jnp.dot(x0_c, mw0_ref[c], preferred_element_type=f32)
              + mb0[c:c + 1, :])
        m1 = (jnp.dot(x1_c, mw1_ref[c], preferred_element_type=f32)
              + mb1[c:c + 1, :])
        p = m0 * m1

        # rank reduction with lane-aligned static slices (size % 128 == 0)
        z = p[:, 0:size]
        for r in range(1, rank):
            z = z + p[:, r * size:(r + 1) * size]

        # signed sqrt: sqrt(relu(z)) - sqrt(relu(-z)) == z * rsqrt(max(|z|,tiny))
        z = z * jax.lax.rsqrt(jnp.maximum(jnp.abs(z), tiny))

        if pos_norm == 'before_cat':
            ss = jnp.sum(z * z, axis=-1, keepdims=True)
            z = z * jax.lax.rsqrt(jnp.maximum(ss, eps2))
            z_parts.append(z.astype(bf16))
        else:  # 'after_cat': L2 norm over the (virtual) concat of all chunks
            ss_parts.append(jnp.sum(z * z, axis=-1, keepdims=True))
            z_parts.append(z)

    if pos_norm == 'after_cat':
        ss_total = ss_parts[0]
        for c in range(1, chunks):
            ss_total = ss_total + ss_parts[c]
        inv = jax.lax.rsqrt(jnp.maximum(ss_total, eps2))
        z_parts = [(z * inv).astype(bf16) for z in z_parts]

    # Single big output projection: K = in_chans, MXU-internal accumulation.
    if unimodal:
        z_full = jnp.concatenate([x0_b] + z_parts, axis=-1)   # (BT, 2*mm_dim)
    else:
        z_full = jnp.concatenate(z_parts, axis=-1)             # (BT, mm_dim)

    out = jnp.dot(z_full, wout_ref[...], preferred_element_type=f32) + bout_ref[...]
    out_ref[...] = out.astype(out_ref.dtype)


# ------------------------------------------------------------------ wrapper
def block_forward(kparams, x0_in, x1_in, *, chunks, rank, size, mm_dim,
                  output_dim, pos_norm='before_cat', unimodal=True,
                  batch_tile=512):
    B, in0 = x0_in.shape
    in1 = x1_in.shape[1]

    bt = _pick_batch_tile(B, batch_tile)
    grid = (pl.cdiv(B, bt),)

    def bmap(i):          # batch-tiled tensors
        return (i, 0)

    def cmap2(i):         # VMEM-resident 2-D weights / biases
        return (0, 0)

    def cmap3(i):         # VMEM-resident 3-D stacked merge weights
        return (0, 0, 0)

    in_specs = [
        pl.BlockSpec((bt, in0), bmap),
        pl.BlockSpec((bt, in1), bmap),
        pl.BlockSpec(kparams['w0'].shape, cmap2),
        pl.BlockSpec(kparams['b0'].shape, cmap2),
        pl.BlockSpec(kparams['w1'].shape, cmap2),
        pl.BlockSpec(kparams['b1'].shape, cmap2),
        pl.BlockSpec(kparams['mw0'].shape, cmap3),
        pl.BlockSpec(kparams['mb0'].shape, cmap2),
        pl.BlockSpec(kparams['mw1'].shape, cmap3),
        pl.BlockSpec(kparams['mb1'].shape, cmap2),
        pl.BlockSpec(kparams['wout'].shape, cmap2),
        pl.BlockSpec(kparams['bout'].shape, cmap2),
    ]
    out_specs = pl.BlockSpec((bt, output_dim), bmap)

    in_chans = (2 if unimodal else 1) * mm_dim
    flops = (2 * B * in0 * mm_dim + 2 * B * in1 * mm_dim
             + 4 * B * chunks * size * size * rank
             + 2 * B * in_chans * output_dim)
    transcendentals = B * mm_dim + 2 * B * chunks
    bytes_accessed = int(
        sum(int(v.size) * v.dtype.itemsize for v in kparams.values())
        + x0_in.size * x0_in.dtype.itemsize
        + x1_in.size * x1_in.dtype.itemsize
        + B * output_dim * 4)

    kernel = functools.partial(block_kernel, chunks=chunks, rank=rank, size=size,
                               pos_norm=pos_norm, unimodal=unimodal)

    return pl.pallas_call(
        kernel,
        out_shape=jax.ShapeDtypeStruct((B, output_dim), jnp.float32),
        grid_spec=pltpu.PrefetchScalarGridSpec(
            num_scalar_prefetch=0,
            grid=grid,
            in_specs=in_specs,
            out_specs=out_specs,
        ),
        compiler_params=pltpu.CompilerParams(
            dimension_semantics=("parallel",),
            vmem_limit_bytes=32 * 1024 * 1024,
        ),
        cost_estimate=pl.CostEstimate(flops=flops,
                                      transcendentals=transcendentals,
                                      bytes_accessed=bytes_accessed),
    )(x0_in, x1_in,
      kparams['w0'], kparams['b0'], kparams['w1'], kparams['b1'],
      kparams['mw0'], kparams['mb0'], kparams['mw1'], kparams['mb1'],
      kparams['wout'], kparams['bout'])


# ------------------------------------------------------------------ params
def make_block_params(key, input_dims, output_dim, mm_dim, chunks, rank,
                      unimodal=True):
    """Torch-layout f32 params (weights pre-transposed to (in, out))."""
    sizes_list = get_sizes_list(mm_dim, chunks)
    # TODO(synk): kernel assumes uniform chunk sizes (mm_dim % chunks == 0);
    # uneven chunks would need padding of the stacked merge weights.
    assert len(set(sizes_list)) == 1
    size = sizes_list[0]
    assert size % 128 == 0, "keep chunk size 128-aligned for clean lane slices"

    def linear(k, fan_in, fan_out):
        kw, kb = jax.random.split(k)
        bound = 1.0 / (fan_in ** 0.5)
        w = jax.random.uniform(kw, (fan_in, fan_out), jnp.float32, -bound, bound)
        b = jax.random.uniform(kb, (fan_out,), jnp.float32, -bound, bound)
        return w, b

    keys = jax.random.split(key, 3 + 2 * chunks)
    w0, b0 = linear(keys[0], input_dims[0], mm_dim)
    w1, b1 = linear(keys[1], input_dims[1], mm_dim)

    mw0, mb0, mw1, mb1 = [], [], [], []
    for c in range(chunks):
        w, b = linear(keys[3 + 2 * c], size, size * rank)
        mw0.append(w); mb0.append(b)
        w, b = linear(keys[3 + 2 * c + 1], size, size * rank)
        mw1.append(w); mb1.append(b)

    in_chans = 2 * mm_dim if unimodal else mm_dim
    wout, bout = linear(keys[2], in_chans, output_dim)

    params = {
        'w0': w0, 'b0': b0.reshape(1, mm_dim),
        'w1': w1, 'b1': b1.reshape(1, mm_dim),
        'mw0': jnp.stack(mw0), 'mb0': jnp.stack(mb0),   # (chunks, size, rank*size) / (chunks, rank*size)
        'mw1': jnp.stack(mw1), 'mb1': jnp.stack(mb1),
        'wout': wout, 'bout': bout.reshape(1, output_dim),
    }
    return params, size


def prepare_kernel_params(params):
    """Cast to kernel dtypes (done once, ahead of time). Layouts stay torch-native."""
    bf16, f32 = jnp.bfloat16, jnp.float32
    return {
        'w0': params['w0'].astype(bf16), 'b0': params['b0'].astype(f32),
        'w1': params['w1'].astype(bf16), 'b1': params['b1'].astype(f32),
        'mw0': params['mw0'].astype(bf16), 'mb0': params['mb0'].astype(f32),
        'mw1': params['mw1'].astype(bf16), 'mb1': params['mb1'].astype(f32),
        'wout': params['wout'].astype(bf16), 'bout': params['bout'].astype(f32),
    }


# ------------------------------------------------------------------ reference (pure JAX, same bf16 dtype flow, torch-faithful structure)
def block_reference(params, x0_in, x1_in, *, chunks, rank, size,
                    pos_norm='before_cat', unimodal=True):
    bf16, f32 = jnp.bfloat16, jnp.float32
    eps = 1e-12
    B = x0_in.shape[0]
    x0 = jnp.dot(x0_in.astype(bf16), params['w0'].astype(bf16),
                 preferred_element_type=f32) + params['b0']
    x1 = jnp.dot(x1_in.astype(bf16), params['w1'].astype(bf16),
                 preferred_element_type=f32) + params['b1']
    x0_b, x1_b = x0.astype(bf16), x1.astype(bf16)
    zs = []
    for c in range(chunks):
        m0 = jnp.dot(x0_b[:, c * size:(c + 1) * size], params['mw0'][c].astype(bf16),
                     preferred_element_type=f32) + params['mb0'][c]
        m1 = jnp.dot(x1_b[:, c * size:(c + 1) * size], params['mw1'][c].astype(bf16),
                     preferred_element_type=f32) + params['mb1'][c]
        m = m0 * m1
        z = jnp.sum(m.reshape(B, rank, size), axis=1)
        if pos_norm == 'before_cat':
            z = jnp.sqrt(jnp.maximum(z, 0.0)) - jnp.sqrt(jnp.maximum(-z, 0.0))
            z = z / jnp.maximum(jnp.linalg.norm(z, axis=-1, keepdims=True), eps)
        zs.append(z)
    z = jnp.concatenate(zs, axis=1)
    if pos_norm == 'after_cat':
        z = jnp.sqrt(jnp.maximum(z, 0.0)) - jnp.sqrt(jnp.maximum(-z, 0.0))
        z = z / jnp.maximum(jnp.linalg.norm(z, axis=-1, keepdims=True), eps)
    if unimodal:
        z = jnp.concatenate([x0, z], axis=1)
    return jnp.dot(z.astype(bf16), params['wout'].astype(bf16),
                   preferred_element_type=f32) + params['bout']


# ------------------------------------------------------------------ main
if __name__ == "__main__":
    # Small shapes consistent with the module (scaled-down defaults).
    B = 8
    input_dims = (64, 32)
    output_dim = 128
    mm_dim = 512
    chunks = 4
    rank = 4
    pos_norm = 'before_cat'
    unimodal = True

    key = jax.random.PRNGKey(0)
    kp, kx0, kx1 = jax.random.split(key, 3)
    params, size = make_block_params(kp, input_dims, output_dim, mm_dim, chunks,
                                     rank, unimodal=unimodal)
    kparams = prepare_kernel_params(params)

    x0_in = jax.random.normal(kx0, (B, input_dims[0]), jnp.float32)
    x1_in = jax.random.normal(kx1, (B, input_dims[1]), jnp.float32)

    out = block_forward(kparams, x0_in, x1_in, chunks=chunks, rank=rank,
                        size=size, mm_dim=mm_dim, output_dim=output_dim,
                        pos_norm=pos_norm, unimodal=unimodal)
    out = jax.block_until_ready(out)

    ref = block_reference(params, x0_in, x1_in, chunks=chunks, rank=rank,
                          size=size, pos_norm=pos_norm, unimodal=unimodal)
    ref = jax.block_until_ready(ref)

    assert out.shape == (B, output_dim)
    max_err = float(jnp.max(jnp.abs(out - ref)))
    assert jnp.allclose(out, ref, rtol=1e-2, atol=1e-2), max_err

    print("KERNEL_OK")
</pallas_src>

<mosaic_0001>
module attributes {stable_mosaic.version = 11 : i64} {
  func.func @block_kernel(%arg0: i32, %arg1: memref<8x64xf32, #tpu.memory_space<vmem>>, %arg2: memref<8x32xf32, #tpu.memory_space<vmem>>, %arg3: memref<64x512xbf16, #tpu.memory_space<vmem>>, %arg4: memref<1x512xf32, #tpu.memory_space<vmem>>, %arg5: memref<32x512xbf16, #tpu.memory_space<vmem>>, %arg6: memref<1x512xf32, #tpu.memory_space<vmem>>, %arg7: memref<4x128x512xbf16, #tpu.memory_space<vmem>>, %arg8: memref<4x512xf32, #tpu.memory_space<vmem>>, %arg9: memref<4x128x512xbf16, #tpu.memory_space<vmem>>, %arg10: memref<4x512xf32, #tpu.memory_space<vmem>>, %arg11: memref<1024x128xbf16, #tpu.memory_space<vmem>>, %arg12: memref<1x128xf32, #tpu.memory_space<vmem>>, %arg13: memref<8x128xf32, #tpu.memory_space<vmem>>) attributes {dimension_semantics = [#tpu.dimension_semantics<parallel>], iteration_bounds = array<i64: 1>, scalar_prefetch = 0 : i64, scratch_operands = 0 : i64, tpu.core_type = #tpu.core_type<tc>, window_params = [{transform_indices = @transform_0, window_bounds = array<i64: 8, 64>}, {transform_indices = @transform_1, window_bounds = array<i64: 8, 32>}, {pipeline_mode = #tpu.pipeline_mode<synchronous>, transform_indices = @transform_2, window_bounds = array<i64: 64, 512>}, {pipeline_mode = #tpu.pipeline_mode<synchronous>, transform_indices = @transform_3, window_bounds = array<i64: 1, 512>}, {pipeline_mode = #tpu.pipeline_mode<synchronous>, transform_indices = @transform_4, window_bounds = array<i64: 32, 512>}, {pipeline_mode = #tpu.pipeline_mode<synchronous>, transform_indices = @transform_5, window_bounds = array<i64: 1, 512>}, {pipeline_mode = #tpu.pipeline_mode<synchronous>, transform_indices = @transform_6, window_bounds = array<i64: 4, 128, 512>}, {pipeline_mode = #tpu.pipeline_mode<synchronous>, transform_indices = @transform_7, window_bounds = array<i64: 4, 512>}, {pipeline_mode = #tpu.pipeline_mode<synchronous>, transform_indices = @transform_8, window_bounds = array<i64: 4, 128, 512>}, {pipeline_mode = #tpu.pipeline_mode<synchronous>, transform_indices = @transform_9, window_bounds = array<i64: 4, 512>}, {pipeline_mode = #tpu.pipeline_mode<synchronous>, transform_indices = @transform_10, window_bounds = array<i64: 1024, 128>}, {pipeline_mode = #tpu.pipeline_mode<synchronous>, transform_indices = @transform_11, window_bounds = array<i64: 1, 128>}, {transform_indices = @transform_12, window_bounds = array<i64: 8, 128>}]} {
    %c0 = arith.constant 0 : index
    %c0_0 = arith.constant 0 : index
    %0 = vector.load %arg1[%c0, %c0_0] : memref<8x64xf32, #tpu.memory_space<vmem>>, vector<8x64xf32>
    %1 = arith.truncf %0 : vector<8x64xf32> to vector<8x64xbf16>
    %c0_1 = arith.constant 0 : index
    %c0_2 = arith.constant 0 : index
    %2 = vector.load %arg3[%c0_1, %c0_2] : memref<64x512xbf16, #tpu.memory_space<vmem>>, vector<64x512xbf16>
    %cst = arith.constant dense<0.000000e+00> : vector<8x512xf32>
    %3 = tpu.matmul %1, %2, %cst {dimension_numbers = #tpu.dot_dimension_numbers<[1], [0], [0], [1], [0, 0, 1, 1], [], []>} : vector<8x64xbf16>, vector<64x512xbf16>, vector<8x512xf32> -> vector<8x512xf32>
    %c0_3 = arith.constant 0 : index
    %c0_4 = arith.constant 0 : index
    %4 = vector.load %arg4[%c0_3, %c0_4] : memref<1x512xf32, #tpu.memory_space<vmem>>, vector<1x512xf32>
    %5 = vector.broadcast %4 : vector<1x512xf32> to vector<8x512xf32>
    %6 = arith.addf %3, %5 : vector<8x512xf32>
    %c0_5 = arith.constant 0 : index
    %c0_6 = arith.constant 0 : index
    %7 = vector.load %arg2[%c0_5, %c0_6] : memref<8x32xf32, #tpu.memory_space<vmem>>, vector<8x32xf32>
    %8 = arith.truncf %7 : vector<8x32xf32> to vector<8x32xbf16>
    %c0_7 = arith.constant 0 : index
    %c0_8 = arith.constant 0 : index
    %9 = vector.load %arg5[%c0_7, %c0_8] : memref<32x512xbf16, #tpu.memory_space<vmem>>, vector<32x512xbf16>
    %cst_9 = arith.constant dense<0.000000e+00> : vector<8x512xf32>
    %10 = tpu.matmul %8, %9, %cst_9 {dimension_numbers = #tpu.dot_dimension_numbers<[1], [0], [0], [1], [0, 0, 1, 1], [], []>} : vector<8x32xbf16>, vector<32x512xbf16>, vector<8x512xf32> -> vector<8x512xf32>
    %c0_10 = arith.constant 0 : index
    %c0_11 = arith.constant 0 : index
    %11 = vector.load %arg6[%c0_10, %c0_11] : memref<1x512xf32, #tpu.memory_space<vmem>>, vector<1x512xf32>
    %12 = vector.broadcast %11 : vector<1x512xf32> to vector<8x512xf32>
    %13 = arith.addf %10, %12 : vector<8x512xf32>
    %14 = arith.truncf %6 : vector<8x512xf32> to vector<8x512xbf16>
    %15 = arith.truncf %13 : vector<8x512xf32> to vector<8x512xbf16>
    %c0_12 = arith.constant 0 : index
    %c0_13 = arith.constant 0 : index
    %16 = vector.load %arg8[%c0_12, %c0_13] : memref<4x512xf32, #tpu.memory_space<vmem>>, vector<4x512xf32>
    %c0_14 = arith.constant 0 : index
    %c0_15 = arith.constant 0 : index
    %17 = vector.load %arg10[%c0_14, %c0_15] : memref<4x512xf32, #tpu.memory_space<vmem>>, vector<4x512xf32>
    %18 = vector.extract_strided_slice %14 {offsets = [0, 0], sizes = [8, 128], strides = [1, 1]} : vector<8x512xbf16> to vector<8x128xbf16>
    %19 = vector.extract_strided_slice %15 {offsets = [0, 0], sizes = [8, 128], strides = [1, 1]} : vector<8x512xbf16> to vector<8x128xbf16>
    %c0_16 = arith.constant 0 : index
    %c0_17 = arith.constant 0 : index
    %c0_18 = arith.constant 0 : index
    %20 = vector.load %arg7[%c0_16, %c0_17, %c0_18] : memref<4x128x512xbf16, #tpu.memory_space<vmem>>, vector<1x128x512xbf16>
    %21 = vector.shape_cast %20 : vector<1x128x512xbf16> to vector<128x512xbf16>
    %cst_19 = arith.constant dense<0.000000e+00> : vector<8x512xf32>
    %22 = tpu.matmul %18, %21, %cst_19 {dimension_numbers = #tpu.dot_dimension_numbers<[1], [0], [0], [1], [0, 0, 1, 1], [], []>} : vector<8x128xbf16>, vector<128x512xbf16>, vector<8x512xf32> -> vector<8x512xf32>
    %23 = vector.extract_strided_slice %16 {offsets = [0, 0], sizes = [1, 512], strides = [1, 1]} : vector<4x512xf32> to vector<1x512xf32>
    %24 = vector.broadcast %23 : vector<1x512xf32> to vector<8x512xf32>
    %25 = arith.addf %22, %24 : vector<8x512xf32>
    %c0_20 = arith.constant 0 : index
    %c0_21 = arith.constant 0 : index
    %c0_22 = arith.constant 0 : index
    %26 = vector.load %arg9[%c0_20, %c0_21, %c0_22] : memref<4x128x512xbf16, #tpu.memory_space<vmem>>, vector<1x128x512xbf16>
    %27 = vector.shape_cast %26 : vector<1x128x512xbf16> to vector<128x512xbf16>
    %cst_23 = arith.constant dense<0.000000e+00> : vector<8x512xf32>
    %28 = tpu.matmul %19, %27, %cst_23 {dimension_numbers = #tpu.dot_dimension_numbers<[1], [0], [0], [1], [0, 0, 1, 1], [], []>} : vector<8x128xbf16>, vector<128x512xbf16>, vector<8x512xf32> -> vector<8x512xf32>
    %29 = vector.extract_strided_slice %17 {offsets = [0, 0], sizes = [1, 512], strides = [1, 1]} : vector<4x512xf32> to vector<1x512xf32>
    %30 = vector.broadcast %29 : vector<1x512xf32> to vector<8x512xf32>
    %31 = arith.addf %28, %30 : vector<8x512xf32>
    %32 = arith.mulf %25, %31 : vector<8x512xf32>
    %33 = vector.extract_strided_slice %32 {offsets = [0, 0], sizes = [8, 128], strides = [1, 1]} : vector<8x512xf32> to vector<8x128xf32>
    %34 = vector.extract_strided_slice %32 {offsets = [0, 128], sizes = [8, 128], strides = [1, 1]} : vector<8x512xf32> to vector<8x128xf32>
    %35 = arith.addf %33, %34 : vector<8x128xf32>
    %36 = vector.extract_strided_slice %32 {offsets = [0, 256], sizes = [8, 128], strides = [1, 1]} : vector<8x512xf32> to vector<8x128xf32>
    %37 = arith.addf %35, %36 : vector<8x128xf32>
    %38 = vector.extract_strided_slice %32 {offsets = [0, 384], sizes = [8, 128], strides = [1, 1]} : vector<8x512xf32> to vector<8x128xf32>
    %39 = arith.addf %37, %38 : vector<8x128xf32>
    %40 = math.absf %39 : vector<8x128xf32>
    %cst_24 = arith.constant 1.000000e-30 : f32
    %41 = vector.broadcast %cst_24 : f32 to vector<8x128xf32>
    %42 = arith.maximumf %40, %41 : vector<8x128xf32>
    %43 = math.rsqrt %42 : vector<8x128xf32>
    %44 = arith.mulf %39, %43 : vector<8x128xf32>
    %45 = arith.mulf %44, %44 : vector<8x128xf32>
    %cst_25 = arith.constant dense<0.000000e+00> : vector<8xf32>
    %46 = vector.multi_reduction <add>, %45, %cst_25 [1] : vector<8x128xf32> to vector<8xf32>
    %47 = vector.shape_cast %46 : vector<8xf32> to vector<8x1xf32>
    %cst_26 = arith.constant 1.000000e-24 : f32
    %48 = vector.broadcast %cst_26 : f32 to vector<8x1xf32>
    %49 = arith.maximumf %47, %48 : vector<8x1xf32>
    %50 = math.rsqrt %49 : vector<8x1xf32>
    %51 = vector.broadcast %50 : vector<8x1xf32> to vector<8x128xf32>
    %52 = arith.mulf %44, %51 : vector<8x128xf32>
    %53 = arith.truncf %52 : vector<8x128xf32> to vector<8x128xbf16>
    %54 = vector.extract_strided_slice %14 {offsets = [0, 128], sizes = [8, 128], strides = [1, 1]} : vector<8x512xbf16> to vector<8x128xbf16>
    %55 = vector.extract_strided_slice %15 {offsets = [0, 128], sizes = [8, 128], strides = [1, 1]} : vector<8x512xbf16> to vector<8x128xbf16>
    %c1 = arith.constant 1 : index
    %c0_27 = arith.constant 0 : index
    %c0_28 = arith.constant 0 : index
    %56 = vector.load %arg7[%c1, %c0_27, %c0_28] : memref<4x128x512xbf16, #tpu.memory_space<vmem>>, vector<1x128x512xbf16>
    %57 = vector.shape_cast %56 : vector<1x128x512xbf16> to vector<128x512xbf16>
    %cst_29 = arith.constant dense<0.000000e+00> : vector<8x512xf32>
    %58 = tpu.matmul %54, %57, %cst_29 {dimension_numbers = #tpu.dot_dimension_numbers<[1], [0], [0], [1], [0, 0, 1, 1], [], []>} : vector<8x128xbf16>, vector<128x512xbf16>, vector<8x512xf32> -> vector<8x512xf32>
    %59 = vector.extract_strided_slice %16 {offsets = [1, 0], sizes = [1, 512], strides = [1, 1]} : vector<4x512xf32> to vector<1x512xf32>
    %60 = vector.broadcast %59 : vector<1x512xf32> to vector<8x512xf32>
    %61 = arith.addf %58, %60 : vector<8x512xf32>
    %c1_30 = arith.constant 1 : index
    %c0_31 = arith.constant 0 : index
    %c0_32 = arith.constant 0 : index
    %62 = vector.load %arg9[%c1_30, %c0_31, %c0_32] : memref<4x128x512xbf16, #tpu.memory_space<vmem>>, vector<1x128x512xbf16>
    %63 = vector.shape_cast %62 : vector<1x128x512xbf16> to vector<128x512xbf16>
    %cst_33 = arith.constant dense<0.000000e+00> : vector<8x512xf32>
    %64 = tpu.matmul %55, %63, %cst_33 {dimension_numbers = #tpu.dot_dimension_numbers<[1], [0], [0], [1], [0, 0, 1, 1], [], []>} : vector<8x128xbf16>, vector<128x512xbf16>, vector<8x512xf32> -> vector<8x512xf32>
    %65 = vector.extract_strided_slice %17 {offsets = [1, 0], sizes = [1, 512], strides = [1, 1]} : vector<4x512xf32> to vector<1x512xf32>
    %66 = vector.broadcast %65 : vector<1x512xf32> to vector<8x512xf32>
    %67 = arith.addf %64, %66 : vector<8x512xf32>
    %68 = arith.mulf %61, %67 : vector<8x512xf32>
    %69 = vector.extract_strided_slice %68 {offsets = [0, 0], sizes = [8, 128], strides = [1, 1]} : vector<8x512xf32> to vector<8x128xf32>
    %70 = vector.extract_strided_slice %68 {offsets = [0, 128], sizes = [8, 128], strides = [1, 1]} : vector<8x512xf32> to vector<8x128xf32>
    %71 = arith.addf %69, %70 : vector<8x128xf32>
    %72 = vector.extract_strided_slice %68 {offsets = [0, 256], sizes = [8, 128], strides = [1, 1]} : vector<8x512xf32> to vector<8x128xf32>
    %73 = arith.addf %71, %72 : vector<8x128xf32>
    %74 = vector.extract_strided_slice %68 {offsets = [0, 384], sizes = [8, 128], strides = [1, 1]} : vector<8x512xf32> to vector<8x128xf32>
    %75 = arith.addf %73, %74 : vector<8x128xf32>
    %76 = math.absf %75 : vector<8x128xf32>
    %cst_34 = arith.constant 1.000000e-30 : f32
    %77 = vector.broadcast %cst_34 : f32 to vector<8x128xf32>
    %78 = arith.maximumf %76, %77 : vector<8x128xf32>
    %79 = math.rsqrt %78 : vector<8x128xf32>
    %80 = arith.mulf %75, %79 : vector<8x128xf32>
    %81 = arith.mulf %80, %80 : vector<8x128xf32>
    %cst_35 = arith.constant dense<0.000000e+00> : vector<8xf32>
    %82 = vector.multi_reduction <add>, %81, %cst_35 [1] : vector<8x128xf32> to vector<8xf32>
    %83 = vector.shape_cast %82 : vector<8xf32> to vector<8x1xf32>
    %cst_36 = arith.constant 1.000000e-24 : f32
    %84 = vector.broadcast %cst_36 : f32 to vector<8x1xf32>
    %85 = arith.maximumf %83, %84 : vector<8x1xf32>
    %86 = math.rsqrt %85 : vector<8x1xf32>
    %87 = vector.broadcast %86 : vector<8x1xf32> to vector<8x128xf32>
    %88 = arith.mulf %80, %87 : vector<8x128xf32>
    %89 = arith.truncf %88 : vector<8x128xf32> to vector<8x128xbf16>
    %90 = vector.extract_strided_slice %14 {offsets = [0, 256], sizes = [8, 128], strides = [1, 1]} : vector<8x512xbf16> to vector<8x128xbf16>
    %91 = vector.extract_strided_slice %15 {offsets = [0, 256], sizes = [8, 128], strides = [1, 1]} : vector<8x512xbf16> to vector<8x128xbf16>
    %c2 = arith.constant 2 : index
    %c0_37 = arith.constant 0 : index
    %c0_38 = arith.constant 0 : index
    %92 = vector.load %arg7[%c2, %c0_37, %c0_38] : memref<4x128x512xbf16, #tpu.memory_space<vmem>>, vector<1x128x512xbf16>
    %93 = vector.shape_cast %92 : vector<1x128x512xbf16> to vector<128x512xbf16>
    %cst_39 = arith.constant dense<0.000000e+00> : vector<8x512xf32>
    %94 = tpu.matmul %90, %93, %cst_39 {dimension_numbers = #tpu.dot_dimension_numbers<[1], [0], [0], [1], [0, 0, 1, 1], [], []>} : vector<8x128xbf16>, vector<128x512xbf16>, vector<8x512xf32> -> vector<8x512xf32>
    %95 = vector.extract_strided_slice %16 {offsets = [2, 0], sizes = [1, 512], strides = [1, 1]} : vector<4x512xf32> to vector<1x512xf32>
    %96 = vector.broadcast %95 : vector<1x512xf32> to vector<8x512xf32>
    %97 = arith.addf %94, %96 : vector<8x512xf32>
    %c2_40 = arith.constant 2 : index
    %c0_41 = arith.constant 0 : index
    %c0_42 = arith.constant 0 : index
    %98 = vector.load %arg9[%c2_40, %c0_41, %c0_42] : memref<4x128x512xbf16, #tpu.memory_space<vmem>>, vector<1x128x512xbf16>
    %99 = vector.shape_cast %98 : vector<1x128x512xbf16> to vector<128x512xbf16>
    %cst_43 = arith.constant dense<0.000000e+00> : vector<8x512xf32>
    %100 = tpu.matmul %91, %99, %cst_43 {dimension_numbers = #tpu.dot_dimension_numbers<[1], [0], [0], [1], [0, 0, 1, 1], [], []>} : vector<8x128xbf16>, vector<128x512xbf16>, vector<8x512xf32> -> vector<8x512xf32>
    %101 = vector.extract_strided_slice %17 {offsets = [2, 0], sizes = [1, 512], strides = [1, 1]} : vector<4x512xf32> to vector<1x512xf32>
    %102 = vector.broadcast %101 : vector<1x512xf32> to vector<8x512xf32>
    %103 = arith.addf %100, %102 : vector<8x512xf32>
    %104 = arith.mulf %97, %103 : vector<8x512xf32>
    %105 = vector.extract_strided_slice %104 {offsets = [0, 0], sizes = [8, 128], strides = [1, 1]} : vector<8x512xf32> to vector<8x128xf32>
    %106 = vector.extract_strided_slice %104 {offsets = [0, 128], sizes = [8, 128], strides = [1, 1]} : vector<8x512xf32> to vector<8x128xf32>
    %107 = arith.addf %105, %106 : vector<8x128xf32>
    %108 = vector.extract_strided_slice %104 {offsets = [0, 256], sizes = [8, 128], strides = [1, 1]} : vector<8x512xf32> to vector<8x128xf32>
    %109 = arith.addf %107, %108 : vector<8x128xf32>
    %110 = vector.extract_strided_slice %104 {offsets = [0, 384], sizes = [8, 128], strides = [1, 1]} : vector<8x512xf32> to vector<8x128xf32>
    %111 = arith.addf %109, %110 : vector<8x128xf32>
    %112 = math.absf %111 : vector<8x128xf32>
    %cst_44 = arith.constant 1.000000e-30 : f32
    %113 = vector.broadcast %cst_44 : f32 to vector<8x128xf32>
    %114 = arith.maximumf %112, %113 : vector<8x128xf32>
    %115 = math.rsqrt %114 : vector<8x128xf32>
    %116 = arith.mulf %111, %115 : vector<8x128xf32>
    %117 = arith.mulf %116, %116 : vector<8x128xf32>
    %cst_45 = arith.constant dense<0.000000e+00> : vector<8xf32>
    %118 = vector.multi_reduction <add>, %117, %cst_45 [1] : vector<8x128xf32> to vector<8xf32>
    %119 = vector.shape_cast %118 : vector<8xf32> to vector<8x1xf32>
    %cst_46 = arith.constant 1.000000e-24 : f32
    %120 = vector.broadcast %cst_46 : f32 to vector<8x1xf32>
    %121 = arith.maximumf %119, %120 : vector<8x1xf32>
    %122 = math.rsqrt %121 : vector<8x1xf32>
    %123 = vector.broadcast %122 : vector<8x1xf32> to vector<8x128xf32>
    %124 = arith.mulf %116, %123 : vector<8x128xf32>
    %125 = arith.truncf %124 : vector<8x128xf32> to vector<8x128xbf16>
    %126 = vector.extract_strided_slice %14 {offsets = [0, 384], sizes = [8, 128], strides = [1, 1]} : vector<8x512xbf16> to vector<8x128xbf16>
    %127 = vector.extract_strided_slice %15 {offsets = [0, 384], sizes = [8, 128], strides = [1, 1]} : vector<8x512xbf16> to vector<8x128xbf16>
    %c3 = arith.constant 3 : index
    %c0_47 = arith.constant 0 : index
    %c0_48 = arith.constant 0 : index
    %128 = vector.load %arg7[%c3, %c0_47, %c0_48] : memref<4x128x512xbf16, #tpu.memory_space<vmem>>, vector<1x128x512xbf16>
    %129 = vector.shape_cast %128 : vector<1x128x512xbf16> to vector<128x512xbf16>
    %cst_49 = arith.constant dense<0.000000e+00> : vector<8x512xf32>
    %130 = tpu.matmul %126, %129, %cst_49 {dimension_numbers = #tpu.dot_dimension_numbers<[1], [0], [0], [1], [0, 0, 1, 1], [], []>} : vector<8x128xbf16>, vector<128x512xbf16>, vector<8x512xf32> -> vector<8x512xf32>
    %131 = vector.extract_strided_slice %16 {offsets = [3, 0], sizes = [1, 512], strides = [1, 1]} : vector<4x512xf32> to vector<1x512xf32>
    %132 = vector.broadcast %131 : vector<1x512xf32> to vector<8x512xf32>
    %133 = arith.addf %130, %132 : vector<8x512xf32>
    %c3_50 = arith.constant 3 : index
    %c0_51 = arith.constant 0 : index
    %c0_52 = arith.constant 0 : index
    %134 = vector.load %arg9[%c3_50, %c0_51, %c0_52] : memref<4x128x512xbf16, #tpu.memory_space<vmem>>, vector<1x128x512xbf16>
    %135 = vector.shape_cast %134 : vector<1x128x512xbf16> to vector<128x512xbf16>
    %cst_53 = arith.constant dense<0.000000e+00> : vector<8x512xf32>
    %136 = tpu.matmul %127, %135, %cst_53 {dimension_numbers = #tpu.dot_dimension_numbers<[1], [0], [0], [1], [0, 0, 1, 1], [], []>} : vector<8x128xbf16>, vector<128x512xbf16>, vector<8x512xf32> -> vector<8x512xf32>
    %137 = vector.extract_strided_slice %17 {offsets = [3, 0], sizes = [1, 512], strides = [1, 1]} : vector<4x512xf32> to vector<1x512xf32>
    %138 = vector.broadcast %137 : vector<1x512xf32> to vector<8x512xf32>
    %139 = arith.addf %136, %138 : vector<8x512xf32>
    %140 = arith.mulf %133, %139 : vector<8x512xf32>
    %141 = vector.extract_strided_slice %140 {offsets = [0, 0], sizes = [8, 128], strides = [1, 1]} : vector<8x512xf32> to vector<8x128xf32>
    %142 = vector.extract_strided_slice %140 {offsets = [0, 128], sizes = [8, 128], strides = [1, 1]} : vector<8x512xf32> to vector<8x128xf32>
    %143 = arith.addf %141, %142 : vector<8x128xf32>
    %144 = vector.extract_strided_slice %140 {offsets = [0, 256], sizes = [8, 128], strides = [1, 1]} : vector<8x512xf32> to vector<8x128xf32>
    %145 = arith.addf %143, %144 : vector<8x128xf32>
    %146 = vector.extract_strided_slice %140 {offsets = [0, 384], sizes = [8, 128], strides = [1, 1]} : vector<8x512xf32> to vector<8x128xf32>
    %147 = arith.addf %145, %146 : vector<8x128xf32>
    %148 = math.absf %147 : vector<8x128xf32>
    %cst_54 = arith.constant 1.000000e-30 : f32
    %149 = vector.broadcast %cst_54 : f32 to vector<8x128xf32>
    %150 = arith.maximumf %148, %149 : vector<8x128xf32>
    %151 = math.rsqrt %150 : vector<8x128xf32>
    %152 = arith.mulf %147, %151 : vector<8x128xf32>
    %153 = arith.mulf %152, %152 : vector<8x128xf32>
    %cst_55 = arith.constant dense<0.000000e+00> : vector<8xf32>
    %154 = vector.multi_reduction <add>, %153, %cst_55 [1] : vector<8x128xf32> to vector<8xf32>
    %155 = vector.shape_cast %154 : vector<8xf32> to vector<8x1xf32>
    %cst_56 = arith.constant 1.000000e-24 : f32
    %156 = vector.broadcast %cst_56 : f32 to vector<8x1xf32>
    %157 = arith.maximumf %155, %156 : vector<8x1xf32>
    %158 = math.rsqrt %157 : vector<8x1xf32>
    %159 = vector.broadcast %158 : vector<8x1xf32> to vector<8x128xf32>
    %160 = arith.mulf %152, %159 : vector<8x128xf32>
    %161 = arith.truncf %160 : vector<8x128xf32> to vector<8x128xbf16>
    %162 = tpu.concatenate %14, %53, %89, %125, %161 in 1 : vector<8x512xbf16>, vector<8x128xbf16>, vector<8x128xbf16>, vector<8x128xbf16>, vector<8x128xbf16> -> vector<8x1024xbf16>
    %c0_57 = arith.constant 0 : index
    %c0_58 = arith.constant 0 : index
    %163 = vector.load %arg11[%c0_57, %c0_58] : memref<1024x128xbf16, #tpu.memory_space<vmem>>, vector<1024x128xbf16>
    %cst_59 = arith.constant dense<0.000000e+00> : vector<8x128xf32>
    %164 = tpu.matmul %162, %163, %cst_59 {dimension_numbers = #tpu.dot_dimension_numbers<[1], [0], [0], [1], [0, 0, 1, 1], [], []>} : vector<8x1024xbf16>, vector<1024x128xbf16>, vector<8x128xf32> -> vector<8x128xf32>
    %c0_60 = arith.constant 0 : index
    %c0_61 = arith.constant 0 : index
    %165 = vector.load %arg12[%c0_60, %c0_61] : memref<1x128xf32, #tpu.memory_space<vmem>>, vector<1x128xf32>
    %166 = vector.broadcast %165 : vector<1x128xf32> to vector<8x128xf32>
    %167 = arith.addf %164, %166 : vector<8x128xf32>
    %c0_62 = arith.constant 0 : index
    %c0_63 = arith.constant 0 : index
    %168 = vector.load %arg13[%c0_62, %c0_63] : memref<8x128xf32, #tpu.memory_space<vmem>>, vector<8x128xf32>
    tpu.vector_store %arg13[%c0_62, %c0_63], %167 {strides = array<i32>} : memref<8x128xf32, #tpu.memory_space<vmem>>, vector<8x128xf32>,
    return
  }
  func.func @transform_0(%arg0: i32) -> (i32, i32) {
    %c0_i32 = arith.constant 0 : i32
    %c0_i32_0 = arith.constant 0 : i32
    return %arg0, %c0_i32 : i32, i32
  }
  func.func @transform_1(%arg0: i32) -> (i32, i32) {
    %c0_i32 = arith.constant 0 : i32
    %c0_i32_0 = arith.constant 0 : i32
    return %arg0, %c0_i32 : i32, i32
  }
  func.func @transform_2(%arg0: i32) -> (i32, i32) {
    %c0_i32 = arith.constant 0 : i32
    %c0_i32_0 = arith.constant 0 : i32
    %c0_i32_1 = arith.constant 0 : i32
    return %c0_i32, %c0_i32_0 : i32, i32
  }
  func.func @transform_3(%arg0: i32) -> (i32, i32) {
    %c0_i32 = arith.constant 0 : i32
    %c0_i32_0 = arith.constant 0 : i32
    %c0_i32_1 = arith.constant 0 : i32
    return %c0_i32, %c0_i32_0 : i32, i32
  }
  func.func @transform_4(%arg0: i32) -> (i32, i32) {
    %c0_i32 = arith.constant 0 : i32
    %c0_i32_0 = arith.constant 0 : i32
    %c0_i32_1 = arith.constant 0 : i32
    return %c0_i32, %c0_i32_0 : i32, i32
  }
  func.func @transform_5(%arg0: i32) -> (i32, i32) {
    %c0_i32 = arith.constant 0 : i32
    %c0_i32_0 = arith.constant 0 : i32
    %c0_i32_1 = arith.constant 0 : i32
    return %c0_i32, %c0_i32_0 : i32, i32
  }
  func.func @transform_6(%arg0: i32) -> (i32, i32, i32) {
    %c0_i32 = arith.constant 0 : i32
    %c0_i32_0 = arith.constant 0 : i32
    %c0_i32_1 = arith.constant 0 : i32
    %c0_i32_2 = arith.constant 0 : i32
    return %c0_i32, %c0_i32_0, %c0_i32_1 : i32, i32, i32
  }
  func.func @transform_7(%arg0: i32) -> (i32, i32) {
    %c0_i32 = arith.constant 0 : i32
    %c0_i32_0 = arith.constant 0 : i32
    %c0_i32_1 = arith.constant 0 : i32
    return %c0_i32, %c0_i32_0 : i32, i32
  }
  func.func @transform_8(%arg0: i32) -> (i32, i32, i32) {
    %c0_i32 = arith.constant 0 : i32
    %c0_i32_0 = arith.constant 0 : i32
    %c0_i32_1 = arith.constant 0 : i32
    %c0_i32_2 = arith.constant 0 : i32
    return %c0_i32, %c0_i32_0, %c0_i32_1 : i32, i32, i32
  }
  func.func @transform_9(%arg0: i32) -> (i32, i32) {
    %c0_i32 = arith.constant 0 : i32
    %c0_i32_0 = arith.constant 0 : i32
    %c0_i32_1 = arith.constant 0 : i32
    return %c0_i32, %c0_i32_0 : i32, i32
  }
  func.func @transform_10(%arg0: i32) -> (i32, i32) {
    %c0_i32 = arith.constant 0 : i32
    %c0_i32_0 = arith.constant 0 : i32
    %c0_i32_1 = arith.constant 0 : i32
    return %c0_i32, %c0_i32_0 : i32, i32
  }
  func.func @transform_11(%arg0: i32) -> (i32, i32) {
    %c0_i32 = arith.constant 0 : i32
    %c0_i32_0 = arith.constant 0 : i32
    %c0_i32_1 = arith.constant 0 : i32
    return %c0_i32, %c0_i32_0 : i32, i32
  }
  func.func @transform_12(%arg0: i32) -> (i32, i32) {
    %c0_i32 = arith.constant 0 : i32
    %c0_i32_0 = arith.constant 0 : i32
    return %arg0, %c0_i32 : i32, i32
  }
}

</mosaic_0001>

<llo_original>
// kernel: tpu_custom_call.1
$region0: #{tpu_custom_call.1}
  #allocation0 [shape = 'u32[]', space=smem, size = 0x4, offset = 0x4, fixed_abs, tag = 'smem constant byte address 0x4 - core index']
  #allocation1 [shape = 'u32[72,128]{1,0:T(1,128)}', space=vmem, size = 0x9000, scoped, tag = 'internal scratch']
  %s0 = inlined_call_operand.hbm [shape: f32[8,64], index: 0, kind: input, shape index: {}]
  %s1 = inlined_call_operand.hbm [shape: f32[8,32], index: 1, kind: input, shape index: {}]
  %s2 = inlined_call_operand.hbm [shape: bf16[64,512], index: 2, kind: input, shape index: {}]
  %s3 = inlined_call_operand.hbm [shape: f32[1,512], index: 3, kind: input, shape index: {}]
  %s4 = inlined_call_operand.hbm [shape: bf16[32,512], index: 4, kind: input, shape index: {}]
  %s5 = inlined_call_operand.vmem [shape: f32[1,512], index: 5, kind: input, shape index: {}]
  %s6 = inlined_call_operand.hbm [shape: bf16[4,128,512], index: 6, kind: input, shape index: {}]
  %s7 = inlined_call_operand.hbm [shape: f32[4,512], index: 7, kind: input, shape index: {}]
  %s8 = inlined_call_operand.hbm [shape: bf16[4,128,512], index: 8, kind: input, shape index: {}]
  %s9 = inlined_call_operand.hbm [shape: f32[4,512], index: 9, kind: input, shape index: {}]
  %s10 = inlined_call_operand.hbm [shape: bf16[1024,128], index: 10, kind: input, shape index: {}]
  %s11 = inlined_call_operand.vmem [shape: f32[1,128], index: 11, kind: input, shape index: {}]
  %s12 = inlined_call_operand.hbm [shape: f32[8,128], index: 12, kind: output, shape index: {}]
  %s13 = sld [smem:[#allocation0]]
  $region98: #{tpu_custom_call.1} parent=0
    _
  %s15 = ssub.s32 1, %s13
  %s16 = scalar_select 0, %s15, %s13
  $region1: #{tpu_custom_call.1} parent=0
    #allocation2 [shape = 'u8[4096]{0}', space=vmem, size = 0x1000, scoped, tag = 'input window, operand 0, single buffered']
    #allocation3 [shape = 's32[1]{0}', space=sflag, size = 0x4, scoped, tag = 'scoped memory for tpu_custom_call.1']
    #allocation4 [shape = 's32[1]{0}', space=sflag, size = 0x4, scoped, tag = 'scoped memory for tpu_custom_call.1']
    #allocation5 [shape = 'u8[4096]{0}', space=vmem, size = 0x1000, scoped, tag = 'input window, operand 1, single buffered']
    #allocation6 [shape = 's32[1]{0}', space=sflag, size = 0x4, scoped, tag = 'scoped memory for tpu_custom_call.1']
    #allocation7 [shape = 'u8[65536]{0}', space=vmem, size = 0x10000, scoped, tag = 'input window, operand 2, single buffered']
    #allocation8 [shape = 'u8[2048]{0}', space=vmem, size = 0x800, scoped, tag = 'input window, operand 3, single buffered']
    #allocation9 [shape = 's32[1]{0}', space=sflag, size = 0x4, scoped, tag = 'scoped memory for tpu_custom_call.1']
    #allocation10 [shape = 'u8[32768]{0}', space=vmem, size = 0x8000, scoped, tag = 'input window, operand 4, single buffered']
    #allocation11 [shape = 'u8[524288]{0}', space=vmem, size = 0x80000, scoped, tag = 'input window, operand 6, single buffered']
    #allocation12 [shape = 's32[1]{0}', space=sflag, size = 0x4, scoped, tag = 'scoped memory for tpu_custom_call.1']
    #allocation13 [shape = 'u8[8192]{0}', space=vmem, size = 0x2000, scoped, tag = 'input window, operand 7, single buffered']
    #allocation14 [shape = 'u8[524288]{0}', space=vmem, size = 0x80000, scoped, tag = 'input window, operand 8, single buffered']
    #allocation15 [shape = 's32[1]{0}', space=sflag, size = 0x4, scoped, tag = 'scoped memory for tpu_custom_call.1']
    #allocation16 [shape = 'u8[8192]{0}', space=vmem, size = 0x2000, scoped, tag = 'input window, operand 9, single buffered']
    #allocation17 [shape = 'u8[262144]{0}', space=vmem, size = 0x40000, scoped, tag = 'input window, operand 10, single buffered']
    #allocation18 [shape = 's32[1]{0}', space=sflag, size = 0x4, scoped, tag = 'scoped memory for tpu_custom_call.1']
    #allocation19 [shape = 'u8[4096]{0}', space=vmem, size = 0x1000, scoped, tag = 'output window, operand 0, single buffered']
    %17 = vsyncpa [#allocation3], 0
    %18 = vsyncpa [#allocation6], 0
    %19 = vsyncpa [#allocation9], 0
    %20 = vsyncpa [#allocation12], 0
    %21 = vsyncpa [#allocation15], 0
    %22 = vsyncpa [#allocation18], 0
    %23 = vsyncpa [#allocation4], 0
    // Predicated region
    $region2: #{tpu_custom_call.1} parent=1 // pred_check
      _
    $region3: #{tpu_custom_call.1} parent=1 // pred_check_branch
      %25 = sbr.rel (0) target = $region5
    $region4: #{tpu_custom_call.1} parent=1 // pred_region
      %27 = vsyncadd [#allocation3], 0
      %s29 = sshll.u32 %s0, 4
      %s30 = int_to_ptr.hbm [resolvable:$true] %s29
      %s31 = sshll.u32 [#allocation2], 4
      %s32 = int_to_ptr.vmem [resolvable:$true] %s31
      %34 = dma.hbm_to_vmem [thread:$0]  %s30, 128, %s32, [#allocation3]
    $region5: #{tpu_custom_call.1} parent=1 // pred_fallthru
      _
    // Predicated region
    $region6: #{tpu_custom_call.1} parent=1 // pred_check
      _
    $region7: #{tpu_custom_call.1} parent=1 // pred_check_branch
      %36 = sbr.rel (0) target = $region9
    $region8: #{tpu_custom_call.1} parent=1 // pred_region
      %38 = vsyncadd [#allocation6], 0
      %s40 = sshll.u32 %s1, 4
      %s41 = int_to_ptr.hbm [resolvable:$true] %s40
      %s42 = sshll.u32 [#allocation5], 4
      %s43 = int_to_ptr.vmem [resolvable:$true] %s42
      %45 = dma.hbm_to_vmem [thread:$0]  %s41, 128, %s43, [#allocation6]
    $region9: #{tpu_custom_call.1} parent=1 // pred_fallthru
      _
    // Predicated region
    $region10: #{tpu_custom_call.1} parent=1 // pred_check
      _
    $region11: #{tpu_custom_call.1} parent=1 // pred_check_branch
      %47 = sbr.rel (0) target = $region13
    $region12: #{tpu_custom_call.1} parent=1 // pred_region
      %49 = vsyncadd [#allocation6], 0
      %s50 = sshll.u32 %s2, 4
      %s51 = int_to_ptr.hbm [resolvable:$true] %s50
      %s52 = sshll.u32 [#allocation7], 4
      %s53 = int_to_ptr.vmem [resolvable:$true] %s52
      %58 = dma.hbm_to_vmem [thread:$0]  %s51, 2048, %s53, [#allocation6], 256, 256, 16
    $region13: #{tpu_custom_call.1} parent=1 // pred_fallthru
      _
    // Predicated region
    $region14: #{tpu_custom_call.1} parent=1 // pred_check
      _
    $region15: #{tpu_custom_call.1} parent=1 // pred_check_branch
      %60 = sbr.rel (0) target = $region17
    $region16: #{tpu_custom_call.1} parent=1 // pred_region
      %62 = vsyncadd [#allocation9], 0
      %s64 = sshll.u32 %s3, 4
      %s65 = int_to_ptr.hbm [resolvable:$true] %s64
      %s66 = sshll.u32 [#allocation8], 4
      %s67 = int_to_ptr.vmem [resolvable:$true] %s66
      %69 = dma.hbm_to_vmem [thread:$0]  %s65, 64, %s67, [#allocation9]
    $region17: #{tpu_custom_call.1} parent=1 // pred_fallthru
      _
    // Predicated region
    $region18: #{tpu_custom_call.1} parent=1 // pred_check
      _
    $region19: #{tpu_custom_call.1} parent=1 // pred_check_branch
      %71 = sbr.rel (0) target = $region21
    $region20: #{tpu_custom_call.1} parent=1 // pred_region
      %73 = vsyncadd [#allocation9], 0
      %s74 = sshll.u32 %s4, 4
      %s75 = int_to_ptr.hbm [resolvable:$true] %s74
      %s76 = sshll.u32 [#allocation10], 4
      %s77 = int_to_ptr.vmem [resolvable:$true] %s76
      %82 = dma.hbm_to_vmem [thread:$0]  %s75, 1024, %s77, [#allocation9], 256, 256, 16
    $region21: #{tpu_custom_call.1} parent=1 // pred_fallthru
      _
    // Predicated region
    $region22: #{tpu_custom_call.1} parent=1 // pred_check
      _
    $region23: #{tpu_custom_call.1} parent=1 // pred_check_branch
      %84 = sbr.rel (0) target = $region25
    $region24: #{tpu_custom_call.1} parent=1 // pred_region
      _
    $region25: #{tpu_custom_call.1} parent=1 // pred_fallthru
      _
    // Predicated region
    $region26: #{tpu_custom_call.1} parent=1 // pred_check
      _
    $region27: #{tpu_custom_call.1} parent=1 // pred_check_branch
      %86 = sbr.rel (0) target = $region29
    $region28: #{tpu_custom_call.1} parent=1 // pred_region
      %88 = vsyncadd [#allocation12], 0
      %s89 = sshll.u32 %s6, 4
      %s90 = int_to_ptr.hbm [resolvable:$true] %s89
      %s91 = sshll.u32 [#allocation11], 4
      %s92 = int_to_ptr.vmem [resolvable:$true] %s91
      %97 = dma.hbm_to_vmem [thread:$0]  %s90, 16384, %s92, [#allocation12], 256, 256, 16
    $region29: #{tpu_custom_call.1} parent=1 // pred_fallthru
      _
    // Predicated region
    $region30: #{tpu_custom_call.1} parent=1 // pred_check
      _
    $region31: #{tpu_custom_call.1} parent=1 // pred_check_branch
      %99 = sbr.rel (0) target = $region33
    $region32: #{tpu_custom_call.1} parent=1 // pred_region
      %101 = vsyncadd [#allocation12], 0
      %s103 = sshll.u32 %s7, 4
      %s104 = int_to_ptr.hbm [resolvable:$true] %s103
      %s105 = sshll.u32 [#allocation13], 4
      %s106 = int_to_ptr.vmem [resolvable:$true] %s105
      %108 = dma.hbm_to_vmem [thread:$0]  %s104, 256, %s106, [#allocation12]
    $region33: #{tpu_custom_call.1} parent=1 // pred_fallthru
      _
    // Predicated region
    $region34: #{tpu_custom_call.1} parent=1 // pred_check
      _
    $region35: #{tpu_custom_call.1} parent=1 // pred_check_branch
      %110 = sbr.rel (0) target = $region37
    $region36: #{tpu_custom_call.1} parent=1 // pred_region
      %112 = vsyncadd [#allocation15], 0
      %s113 = sshll.u32 %s8, 4
      %s114 = int_to_ptr.hbm [resolvable:$true] %s113
      %s115 = sshll.u32 [#allocation14], 4
      %s116 = int_to_ptr.vmem [resolvable:$true] %s115
      %121 = dma.hbm_to_vmem [thread:$0]  %s114, 16384, %s116, [#allocation15], 256, 256, 16
    $region37: #{tpu_custom_call.1} parent=1 // pred_fallthru
      _
    // Predicated region
    $region38: #{tpu_custom_call.1} parent=1 // pred_check
      _
    $region39: #{tpu_custom_call.1} parent=1 // pred_check_branch
      %123 = sbr.rel (0) target = $region41
    $region40: #{tpu_custom_call.1} parent=1 // pred_region
      %125 = vsyncadd [#allocation15], 0
      %s127 = sshll.u32 %s9, 4
      %s128 = int_to_ptr.hbm [resolvable:$true] %s127
      %s129 = sshll.u32 [#allocation16], 4
      %s130 = int_to_ptr.vmem [resolvable:$true] %s129
      %132 = dma.hbm_to_vmem [thread:$0]  %s128, 256, %s130, [#allocation15]
    $region41: #{tpu_custom_call.1} parent=1 // pred_fallthru
      _
    // Predicated region
    $region42: #{tpu_custom_call.1} parent=1 // pred_check
      _
    $region43: #{tpu_custom_call.1} parent=1 // pred_check_branch
      %134 = sbr.rel (0) target = $region45
    $region44: #{tpu_custom_call.1} parent=1 // pred_region
      %136 = vsyncadd [#allocation18], 0
      %s137 = sshll.u32 %s10, 4
      %s138 = int_to_ptr.hbm [resolvable:$true] %s137
      %s139 = sshll.u32 [#allocation17], 4
      %s140 = int_to_ptr.vmem [resolvable:$true] %s139
      %145 = dma.hbm_to_vmem [thread:$0]  %s138, 8192, %s140, [#allocation18], 64, 64, 4
    $region45: #{tpu_custom_call.1} parent=1 // pred_fallthru
      _
    // Predicated region
    $region46: #{tpu_custom_call.1} parent=1 // pred_check
      _
    $region47: #{tpu_custom_call.1} parent=1 // pred_check_branch
      %147 = sbr.rel (0) target = $region49
    $region48: #{tpu_custom_call.1} parent=1 // pred_region
      _
    $region49: #{tpu_custom_call.1} parent=1 // pred_fallthru
      _
    // Predicated region
    $region50: #{tpu_custom_call.1} parent=1 // pred_check
      _
    $region51: #{tpu_custom_call.1} parent=1 // pred_check_branch
      %149 = sbr.rel (0) target = $region53
    $region52: #{tpu_custom_call.1} parent=1 // pred_region
      %151 = dma.done [#allocation3], 128
    $region53: #{tpu_custom_call.1} parent=1 // pred_fallthru
      _
    // Predicated region
    $region54: #{tpu_custom_call.1} parent=1 // pred_check
      _
    $region55: #{tpu_custom_call.1} parent=1 // pred_check_branch
      %153 = sbr.rel (0) target = $region57
    $region56: #{tpu_custom_call.1} parent=1 // pred_region
      %155 = dma.done [#allocation6], 128
    $region57: #{tpu_custom_call.1} parent=1 // pred_fallthru
      _
    // Predicated region
    $region58: #{tpu_custom_call.1} parent=1 // pred_check
      _
    $region59: #{tpu_custom_call.1} parent=1 // pred_check_branch
      %157 = sbr.rel (0) target = $region61
    $region60: #{tpu_custom_call.1} parent=1 // pred_region
      %159 = dma.done [#allocation6], 2048
    $region61: #{tpu_custom_call.1} parent=1 // pred_fallthru
      _
    // Predicated region
    $region62: #{tpu_custom_call.1} parent=1 // pred_check
      _
    $region63: #{tpu_custom_call.1} parent=1 // pred_check_branch
      %161 = sbr.rel (0) target = $region65
    $region64: #{tpu_custom_call.1} parent=1 // pred_region
      %163 = dma.done [#allocation9], 64
    $region65: #{tpu_custom_call.1} parent=1 // pred_fallthru
      _
    // Predicated region
    $region66: #{tpu_custom_call.1} parent=1 // pred_check
      _
    $region67: #{tpu_custom_call.1} parent=1 // pred_check_branch
      %165 = sbr.rel (0) target = $region69
    $region68: #{tpu_custom_call.1} parent=1 // pred_region
      %167 = dma.done [#allocation9], 1024
    $region69: #{tpu_custom_call.1} parent=1 // pred_fallthru
      _
    // Predicated region
    $region70: #{tpu_custom_call.1} parent=1 // pred_check
      _
    $region71: #{tpu_custom_call.1} parent=1 // pred_check_branch
      %169 = sbr.rel (0) target = $region73
    $region72: #{tpu_custom_call.1} parent=1 // pred_region
      %171 = dma.done [#allocation12], 16384
    $region73: #{tpu_custom_call.1} parent=1 // pred_fallthru
      _
    // Predicated region
    $region74: #{tpu_custom_call.1} parent=1 // pred_check
      _
    $region75: #{tpu_custom_call.1} parent=1 // pred_check_branch
      %173 = sbr.rel (0) target = $region77
    $region76: #{tpu_custom_call.1} parent=1 // pred_region
      %175 = dma.done [#allocation12], 256
    $region77: #{tpu_custom_call.1} parent=1 // pred_fallthru
      _
    // Predicated region
    $region78: #{tpu_custom_call.1} parent=1 // pred_check
      _
    $region79: #{tpu_custom_call.1} parent=1 // pred_check_branch
      %177 = sbr.rel (0) target = $region81
    $region80: #{tpu_custom_call.1} parent=1 // pred_region
      %179 = dma.done [#allocation15], 16384
    $region81: #{tpu_custom_call.1} parent=1 // pred_fallthru
      _
    // Predicated region
    $region82: #{tpu_custom_call.1} parent=1 // pred_check
      _
    $region83: #{tpu_custom_call.1} parent=1 // pred_check_branch
      %181 = sbr.rel (0) target = $region85
    $region84: #{tpu_custom_call.1} parent=1 // pred_region
      %183 = dma.done [#allocation15], 256
    $region85: #{tpu_custom_call.1} parent=1 // pred_fallthru
      _
    // Predicated region
    $region86: #{tpu_custom_call.1} parent=1 // pred_check
      _
    $region87: #{tpu_custom_call.1} parent=1 // pred_check_branch
      %185 = sbr.rel (0) target = $region89
    $region88: #{tpu_custom_call.1} parent=1 // pred_region
      %187 = dma.done [#allocation18], 8192
    $region89: #{tpu_custom_call.1} parent=1 // pred_fallthru
      _
    %v189 = vld [vmem:[#allocation2] sm:$0xff]
    %v190 = vpack.c.bf16 %v189, %v189
    %v191 = vld [vmem:[#allocation7] sm:$0xff]
    %v192 = vld [vmem:[#allocation7 + $0x8] sm:$0xff]
    %v193 = vld [vmem:[#allocation7 + $0x10] sm:$0xff]
    %v194 = vld [vmem:[#allocation7 + $0x18] sm:$0xff]
    %v195 = vld [vmem:[#allocation7 + $0x20] sm:$0xff]
    %v196 = vld [vmem:[#allocation7 + $0x28] sm:$0xff]
    %v197 = vld [vmem:[#allocation7 + $0x30] sm:$0xff]
    %v198 = vld [vmem:[#allocation7 + $0x38] sm:$0xff]
    %v199 = vld [vmem:[#allocation7 + $0x40] sm:$0xff]
    %v200 = vld [vmem:[#allocation7 + $0x48] sm:$0xff]
    %v201 = vld [vmem:[#allocation7 + $0x50] sm:$0xff]
    %v202 = vld [vmem:[#allocation7 + $0x58] sm:$0xff]
    %v203 = vld [vmem:[#allocation7 + $0x60] sm:$0xff]
    %v204 = vld [vmem:[#allocation7 + $0x68] sm:$0xff]
    %v205 = vld [vmem:[#allocation7 + $0x70] sm:$0xff]
    %v206 = vld [vmem:[#allocation7 + $0x78] sm:$0xff]
    %v207 = vld [vmem:[#allocation8] sm:$0xf]
    %v209 = vperm.slane %v207, 0
    %v210 = vperm.slane %v207, 1
    %v211 = vperm.slane %v207, 2
    %v212 = vperm.slane %v207, 3
    %v233 = vunpack.c.l.b16 %v191
    %v234 = vunpack.c.h.b16 %v191
    %v235 = vunpack.c.l.b16 %v192
    %v236 = vunpack.c.h.b16 %v192
    %v237 = vunpack.c.l.b16 %v193
    %v238 = vunpack.c.h.b16 %v193
    %v239 = vunpack.c.l.b16 %v194
    %v240 = vunpack.c.h.b16 %v194
    %v241 = vunpack.c.l.b16 %v195
    %v242 = vunpack.c.h.b16 %v195
    %v243 = vunpack.c.l.b16 %v196
    %v244 = vunpack.c.h.b16 %v196
    %v245 = vunpack.c.l.b16 %v197
    %v246 = vunpack.c.h.b16 %v197
    %v247 = vunpack.c.l.b16 %v198
    %v248 = vunpack.c.h.b16 %v198
    %v249 = vunpack.c.l.b16 %v199
    %v250 = vunpack.c.h.b16 %v199
    %v251 = vunpack.c.l.b16 %v200
    %v252 = vunpack.c.h.b16 %v200
    %v253 = vunpack.c.l.b16 %v201
    %v254 = vunpack.c.h.b16 %v201
    %v255 = vunpack.c.l.b16 %v202
    %v256 = vunpack.c.h.b16 %v202
    %v257 = vunpack.c.l.b16 %v203
    %v258 = vunpack.c.h.b16 %v203
    %v259 = vunpack.c.l.b16 %v204
    %v260 = vunpack.c.h.b16 %v204
    %v261 = vunpack.c.l.b16 %v205
    %v262 = vunpack.c.h.b16 %v205
    %v263 = vunpack.c.l.b16 %v206
    %v264 = vunpack.c.h.b16 %v206
    %v265 = vpack.c.b16 %v237, %v233
    %v266 = vpack.c.b16 %v238, %v234
    %v267 = vpack.c.b16 %v239, %v235
    %v268 = vpack.c.b16 %v240, %v236
    %v269 = vpack.c.b16 %v245, %v241
    %v270 = vpack.c.b16 %v246, %v242
    %v271 = vpack.c.b16 %v247, %v243
    %v272 = vpack.c.b16 %v248, %v244
    %v273 = vpack.c.b16 %v253, %v249
    %v274 = vpack.c.b16 %v254, %v250
    %v275 = vpack.c.b16 %v255, %v251
    %v276 = vpack.c.b16 %v256, %v252
    %v277 = vpack.c.b16 %v261, %v257
    %v278 = vpack.c.b16 %v262, %v258
    %v279 = vpack.c.b16 %v263, %v259
    %v280 = vpack.c.b16 %v264, %v260
    %vm297 = vcmask 523264
    %v299 = vsel %vm297, %v190, 0
    %301 = vmatpush.bf16.msra.mxu0 0
    %302 = vmatpush.bf16.msra.mxu0 0
    %303 = vmatpush.bf16.msra.mxu0 0
    %304 = vmatpush.bf16.msra.mxu0 0
    %305 = vmatpush.bf16.msra.mxu0 %v277
    %306 = vmatpush.bf16.msra.mxu0 %v273
    %307 = vmatpush.bf16.msra.mxu0 %v269
    %308 = vmatpush.bf16.msra.mxu0 %v265
    %309 = vmatmul.bf16.gmra.mxu0 %v299
    %v310 = vpop.f32.mrf.mxu0
    %v311 = vadd.f32 %v209, %v310
    %v312 = vpop.f32.mrf.mxu0
    %313 = vdwg.mxu0
    %314 = vmatpush.bf16.msra.mxu0 0
    %315 = vmatpush.bf16.msra.mxu0 0
    %316 = vmatpush.bf16.msra.mxu0 0
    %317 = vmatpush.bf16.msra.mxu0 0
    %318 = vmatpush.bf16.msra.mxu0 %v278
    %319 = vmatpush.bf16.msra.mxu0 %v274
    %320 = vmatpush.bf16.msra.mxu0 %v270
    %321 = vmatpush.bf16.msra.mxu0 %v266
    %322 = vmatmul.bf16.gmra.mxu0 %v299
    %v323 = vpop.f32.mrf.mxu0
    %v324 = vadd.f32 %v210, %v323
    %v325 = vpop.f32.mrf.mxu0
    %326 = vdwg.mxu0
    %327 = vmatpush.bf16.msra.mxu0 0
    %328 = vmatpush.bf16.msra.mxu0 0
    %329 = vmatpush.bf16.msra.mxu0 0
    %330 = vmatpush.bf16.msra.mxu0 0
    %331 = vmatpush.bf16.msra.mxu0 %v279
    %332 = vmatpush.bf16.msra.mxu0 %v275
    %333 = vmatpush.bf16.msra.mxu0 %v271
    %334 = vmatpush.bf16.msra.mxu0 %v267
    %335 = vmatmul.bf16.gmra.mxu0 %v299
    %v336 = vpop.f32.mrf.mxu0
    %v337 = vadd.f32 %v211, %v336
    %v338 = vpop.f32.mrf.mxu0
    %339 = vdwg.mxu0
    %340 = vmatpush.bf16.msra.mxu0 0
    %341 = vmatpush.bf16.msra.mxu0 0
    %342 = vmatpush.bf16.msra.mxu0 0
    %343 = vmatpush.bf16.msra.mxu0 0
    %344 = vmatpush.bf16.msra.mxu0 %v280
    %345 = vmatpush.bf16.msra.mxu0 %v276
    %346 = vmatpush.bf16.msra.mxu0 %v272
    %347 = vmatpush.bf16.msra.mxu0 %v268
    %348 = vmatmul.bf16.gmra.mxu0 %v299
    %v349 = vpop.f32.mrf.mxu0
    %v350 = vadd.f32 %v212, %v349
    %v351 = vpop.f32.mrf.mxu0
    %352 = vdwg.mxu0
    %v353 = vld [vmem:[#allocation5] sm:$0xff]
    %v354 = vpack.c.bf16 %v353, %v353
    %v355 = vld [vmem:[#allocation10] sm:$0xff]
    %v356 = vld [vmem:[#allocation10 + $0x8] sm:$0xff]
    %v357 = vld [vmem:[#allocation10 + $0x10] sm:$0xff]
    %v358 = vld [vmem:[#allocation10 + $0x18] sm:$0xff]
    %v359 = vld [vmem:[#allocation10 + $0x20] sm:$0xff]
    %v360 = vld [vmem:[#allocation10 + $0x28] sm:$0xff]
    %v361 = vld [vmem:[#allocation10 + $0x30] sm:$0xff]
    %v362 = vld [vmem:[#allocation10 + $0x38] sm:$0xff]
    %v363 = vld [vmem:[%s5] sm:$0xf]
    %v365 = vperm.slane %v363, 0
    %v366 = vperm.slane %v363, 1
    %v367 = vperm.slane %v363, 2
    %v368 = vperm.slane %v363, 3
    %v381 = vunpack.c.l.b16 %v355
    %v382 = vunpack.c.h.b16 %v355
    %v383 = vunpack.c.l.b16 %v356
    %v384 = vunpack.c.h.b16 %v356
    %v385 = vunpack.c.l.b16 %v357
    %v386 = vunpack.c.h.b16 %v357
    %v387 = vunpack.c.l.b16 %v358
    %v388 = vunpack.c.h.b16 %v358
    %v389 = vunpack.c.l.b16 %v359
    %v390 = vunpack.c.h.b16 %v359
    %v391 = vunpack.c.l.b16 %v360
    %v392 = vunpack.c.h.b16 %v360
    %v393 = vunpack.c.l.b16 %v361
    %v394 = vunpack.c.h.b16 %v361
    %v395 = vunpack.c.l.b16 %v362
    %v396 = vunpack.c.h.b16 %v362
    %v397 = vpack.c.b16 %v385, %v381
    %v398 = vpack.c.b16 %v386, %v382
    %v399 = vpack.c.b16 %v387, %v383
    %v400 = vpack.c.b16 %v388, %v384
    %v401 = vpack.c.b16 %v393, %v389
    %v402 = vpack.c.b16 %v394, %v390
    %v403 = vpack.c.b16 %v395, %v391
    %v404 = vpack.c.b16 %v396, %v392
    %vm413 = vcmask 261120
    %v415 = vsel %vm413, %v354, 0
    %417 = vmatpush.bf16.msra.mxu0 0
    %418 = vmatpush.bf16.msra.mxu0 0
    %419 = vmatpush.bf16.msra.mxu0 0
    %420 = vmatpush.bf16.msra.mxu0 0
    %421 = vmatpush.bf16.msra.mxu0 0
    %422 = vmatpush.bf16.msra.mxu0 0
    %423 = vmatpush.bf16.msra.mxu0 %v401
    %424 = vmatpush.bf16.msra.mxu0 %v397
    %425 = vmatmul.bf16.gmra.mxu0 %v415
    %v426 = vpop.f32.mrf.mxu0
    %v427 = vadd.f32 %v365, %v426
    %v428 = vpop.f32.mrf.mxu0
    %429 = vdwg.mxu0
    %430 = vmatpush.bf16.msra.mxu0 0
    %431 = vmatpush.bf16.msra.mxu0 0
    %432 = vmatpush.bf16.msra.mxu0 0
    %433 = vmatpush.bf16.msra.mxu0 0
    %434 = vmatpush.bf16.msra.mxu0 0
    %435 = vmatpush.bf16.msra.mxu0 0
    %436 = vmatpush.bf16.msra.mxu0 %v402
    %437 = vmatpush.bf16.msra.mxu0 %v398
    %438 = vmatmul.bf16.gmra.mxu0 %v415
    %v439 = vpop.f32.mrf.mxu0
    %v440 = vadd.f32 %v366, %v439
    %v441 = vpop.f32.mrf.mxu0
    %442 = vdwg.mxu0
    %443 = vmatpush.bf16.msra.mxu0 0
    %444 = vmatpush.bf16.msra.mxu0 0
    %445 = vmatpush.bf16.msra.mxu0 0
    %446 = vmatpush.bf16.msra.mxu0 0
    %447 = vmatpush.bf16.msra.mxu0 0
    %448 = vmatpush.bf16.msra.mxu0 0
    %449 = vmatpush.bf16.msra.mxu0 %v403
    %450 = vmatpush.bf16.msra.mxu0 %v399
    %451 = vmatmul.bf16.gmra.mxu0 %v415
    %v452 = vpop.f32.mrf.mxu0
    %v453 = vadd.f32 %v367, %v452
    %v454 = vpop.f32.mrf.mxu0
    %455 = vdwg.mxu0
    %456 = vmatpush.bf16.msra.mxu0 0
    %457 = vmatpush.bf16.msra.mxu0 0
    %458 = vmatpush.bf16.msra.mxu0 0
    %459 = vmatpush.bf16.msra.mxu0 0
    %460 = vmatpush.bf16.msra.mxu0 0
    %461 = vmatpush.bf16.msra.mxu0 0
    %462 = vmatpush.bf16.msra.mxu0 %v404
    %463 = vmatpush.bf16.msra.mxu0 %v400
    %464 = vmatmul.bf16.gmra.mxu0 %v415
    %v465 = vpop.f32.mrf.mxu0
    %v466 = vadd.f32 %v368, %v465
    %v467 = vpop.f32.mrf.mxu0
    %468 = vdwg.mxu0
    %v469 = vpack.c.bf16 %v324, %v311
    %v470 = vpack.c.bf16 %v350, %v337
    %v471 = vpack.c.bf16 %v440, %v427
    %v472 = vpack.c.bf16 %v466, %v453
    %v473 = vld [vmem:[#allocation13] sm:$0xff]
    %v474 = vld [vmem:[#allocation13 + $0x8] sm:$0xff]
    %v475 = vld [vmem:[#allocation16] sm:$0xff]
    %v476 = vld [vmem:[#allocation16 + $0x8] sm:$0xff]
    %v477 = vld [vmem:[#allocation11] sm:$0xff]
    %v478 = vld [vmem:[#allocation11 + $0x8] sm:$0xff]
    %v479 = vld [vmem:[#allocation11 + $0x10] sm:$0xff]
    %v480 = vld [vmem:[#allocation11 + $0x18] sm:$0xff]
    %v481 = vld [vmem:[#allocation11 + $0x20] sm:$0xff]
    %v482 = vld [vmem:[#allocation11 + $0x28] sm:$0xff]
    %v483 = vld [vmem:[#allocation11 + $0x30] sm:$0xff]
    %v484 = vld [vmem:[#allocation11 + $0x38] sm:$0xff]
    %v485 = vld [vmem:[#allocation11 + $0x40] sm:$0xff]
    %v486 = vld [vmem:[#allocation11 + $0x48] sm:$0xff]
    %v487 = vld [vmem:[#allocation11 + $0x50] sm:$0xff]
    %v488 = vld [vmem:[#allocation11 + $0x58] sm:$0xff]
    %v489 = vld [vmem:[#allocation11 + $0x60] sm:$0xff]
    %v490 = vld [vmem:[#allocation11 + $0x68] sm:$0xff]
    %v491 = vld [vmem:[#allocation11 + $0x70] sm:$0xff]
    %v492 = vld [vmem:[#allocation11 + $0x78] sm:$0xff]
    %v493 = vld [vmem:[#allocation11 + $0x80] sm:$0xff]
    %v494 = vld [vmem:[#allocation11 + $0x88] sm:$0xff]
    %v495 = vld [vmem:[#allocation11 + $0x90] sm:$0xff]
    %v496 = vld [vmem:[#allocation11 + $0x98] sm:$0xff]
    %v497 = vld [vmem:[#allocation11 + $0xa0] sm:$0xff]
    %v498 = vld [vmem:[#allocation11 + $0xa8] sm:$0xff]
    %v499 = vld [vmem:[#allocation11 + $0xb0] sm:$0xff]
    %v500 = vld [vmem:[#allocation11 + $0xb8] sm:$0xff]
    %v501 = vld [vmem:[#allocation11 + $0xc0] sm:$0xff]
    %v502 = vld [vmem:[#allocation11 + $0xc8] sm:$0xff]
    %v503 = vld [vmem:[#allocation11 + $0xd0] sm:$0xff]
    %v504 = vld [vmem:[#allocation11 + $0xd8] sm:$0xff]
    %v505 = vld [vmem:[#allocation11 + $0xe0] sm:$0xff]
    %v506 = vld [vmem:[#allocation11 + $0xe8] sm:$0xff]
    %v507 = vld [vmem:[#allocation11 + $0xf0] sm:$0xff]
    %v508 = vld [vmem:[#allocation11 + $0xf8] sm:$0xff]
    %v511 = vperm.slane %v473, 0
    %v512 = vperm.slane %v473, 4
    %v513 = vperm.slane %v474, 0
    %v514 = vperm.slane %v474, 4
    %v519 = vperm.slane %v511, 0
    %v520 = vperm.slane %v512, 0
    %v521 = vperm.slane %v513, 0
    %v522 = vperm.slane %v514, 0
    %v555 = vunpack.c.l.b16 %v477
    %v556 = vunpack.c.h.b16 %v477
    %v557 = vunpack.c.l.b16 %v478
    %v558 = vunpack.c.h.b16 %v478
    %v559 = vunpack.c.l.b16 %v479
    %v560 = vunpack.c.h.b16 %v479
    %v561 = vunpack.c.l.b16 %v480
    %v562 = vunpack.c.h.b16 %v480
    %v563 = vunpack.c.l.b16 %v481
    %v564 = vunpack.c.h.b16 %v481
    %v565 = vunpack.c.l.b16 %v482
    %v566 = vunpack.c.h.b16 %v482
    %v567 = vunpack.c.l.b16 %v483
    %v568 = vunpack.c.h.b16 %v483
    %v569 = vunpack.c.l.b16 %v484
    %v570 = vunpack.c.h.b16 %v484
    %v571 = vunpack.c.l.b16 %v485
    %v572 = vunpack.c.h.b16 %v485
    %v573 = vunpack.c.l.b16 %v486
    %v574 = vunpack.c.h.b16 %v486
    %v575 = vunpack.c.l.b16 %v487
    %v576 = vunpack.c.h.b16 %v487
    %v577 = vunpack.c.l.b16 %v488
    %v578 = vunpack.c.h.b16 %v488
    %v579 = vunpack.c.l.b16 %v489
    %v580 = vunpack.c.h.b16 %v489
    %v581 = vunpack.c.l.b16 %v490
    %v582 = vunpack.c.h.b16 %v490
    %v583 = vunpack.c.l.b16 %v491
    %v584 = vunpack.c.h.b16 %v491
    %v585 = vunpack.c.l.b16 %v492
    %v586 = vunpack.c.h.b16 %v492
    %v587 = vunpack.c.l.b16 %v493
    %v588 = vunpack.c.h.b16 %v493
    %v589 = vunpack.c.l.b16 %v494
    %v590 = vunpack.c.h.b16 %v494
    %v591 = vunpack.c.l.b16 %v495
    %v592 = vunpack.c.h.b16 %v495
    %v593 = vunpack.c.l.b16 %v496
    %v594 = vunpack.c.h.b16 %v496
    %v595 = vunpack.c.l.b16 %v497
    %v596 = vunpack.c.h.b16 %v497
    %v597 = vunpack.c.l.b16 %v498
    %v598 = vunpack.c.h.b16 %v498
    %v599 = vunpack.c.l.b16 %v499
    %v600 = vunpack.c.h.b16 %v499
    %v601 = vunpack.c.l.b16 %v500
    %v602 = vunpack.c.h.b16 %v500
    %v603 = vunpack.c.l.b16 %v501
    %v604 = vunpack.c.h.b16 %v501
    %v605 = vunpack.c.l.b16 %v502
    %v606 = vunpack.c.h.b16 %v502
    %v607 = vunpack.c.l.b16 %v503
    %v608 = vunpack.c.h.b16 %v503
    %v609 = vunpack.c.l.b16 %v504
    %v610 = vunpack.c.h.b16 %v504
    %v611 = vunpack.c.l.b16 %v505
    %v612 = vunpack.c.h.b16 %v505
    %v613 = vunpack.c.l.b16 %v506
    %v614 = vunpack.c.h.b16 %v506
    %v615 = vunpack.c.l.b16 %v507
    %v616 = vunpack.c.h.b16 %v507
    %v617 = vunpack.c.l.b16 %v508
    %v618 = vunpack.c.h.b16 %v508
    %v619 = vpack.c.b16 %v559, %v555
    %v620 = vpack.c.b16 %v560, %v556
    %v621 = vpack.c.b16 %v561, %v557
    %v622 = vpack.c.b16 %v562, %v558
    %v623 = vpack.c.b16 %v567, %v563
    %v624 = vpack.c.b16 %v568, %v564
    %v625 = vpack.c.b16 %v569, %v565
    %v626 = vpack.c.b16 %v570, %v566
    %v627 = vpack.c.b16 %v575, %v571
    %v628 = vpack.c.b16 %v576, %v572
    %v629 = vpack.c.b16 %v577, %v573
    %v630 = vpack.c.b16 %v578, %v574
    %v631 = vpack.c.b16 %v583, %v579
    %v632 = vpack.c.b16 %v584, %v580
    %v633 = vpack.c.b16 %v585, %v581
    %v634 = vpack.c.b16 %v586, %v582
    %v635 = vpack.c.b16 %v591, %v587
    %v636 = vpack.c.b16 %v592, %v588
    %v637 = vpack.c.b16 %v593, %v589
    %v638 = vpack.c.b16 %v594, %v590
    %v639 = vpack.c.b16 %v599, %v595
    %v640 = vpack.c.b16 %v600, %v596
    %v641 = vpack.c.b16 %v601, %v597
    %v642 = vpack.c.b16 %v602, %v598
    %v643 = vpack.c.b16 %v607, %v603
    %v644 = vpack.c.b16 %v608, %v604
    %v645 = vpack.c.b16 %v609, %v605
    %v646 = vpack.c.b16 %v610, %v606
    %v647 = vpack.c.b16 %v615, %v611
    %v648 = vpack.c.b16 %v616, %v612
    %v649 = vpack.c.b16 %v617, %v613
    %v650 = vpack.c.b16 %v618, %v614
    %683 = vmatpush.bf16.msra.mxu0 %v647
    %684 = vmatpush.bf16.msra.mxu0 %v643
    %685 = vmatpush.bf16.msra.mxu0 %v639
    %686 = vmatpush.bf16.msra.mxu0 %v635
    %687 = vmatpush.bf16.msra.mxu0 %v631
    %688 = vmatpush.bf16.msra.mxu0 %v627
    %689 = vmatpush.bf16.msra.mxu0 %v623
    %690 = vmatpush.bf16.msra.mxu0 %v619
    %691 = vmatmul.bf16.gmra.mxu0 %v469
    %v692 = vpop.f32.mrf.mxu0
    %v693 = vadd.f32 %v519, %v692
    %v694 = vpop.f32.mrf.mxu0
    %695 = vdwg.mxu0
    %696 = vmatpush.bf16.msra.mxu0 %v648
    %697 = vmatpush.bf16.msra.mxu0 %v644
    %698 = vmatpush.bf16.msra.mxu0 %v640
    %699 = vmatpush.bf16.msra.mxu0 %v636
    %700 = vmatpush.bf16.msra.mxu0 %v632
    %701 = vmatpush.bf16.msra.mxu0 %v628
    %702 = vmatpush.bf16.msra.mxu0 %v624
    %703 = vmatpush.bf16.msra.mxu0 %v620
    %704 = vmatmul.bf16.gmra.mxu0 %v469
    %v705 = vpop.f32.mrf.mxu0
    %v706 = vadd.f32 %v520, %v705
    %v707 = vpop.f32.mrf.mxu0
    %708 = vdwg.mxu0
    %709 = vmatpush.bf16.msra.mxu0 %v649
    %710 = vmatpush.bf16.msra.mxu0 %v645
    %711 = vmatpush.bf16.msra.mxu0 %v641
    %712 = vmatpush.bf16.msra.mxu0 %v637
    %713 = vmatpush.bf16.msra.mxu0 %v633
    %714 = vmatpush.bf16.msra.mxu0 %v629
    %715 = vmatpush.bf16.msra.mxu0 %v625
    %716 = vmatpush.bf16.msra.mxu0 %v621
    %717 = vmatmul.bf16.gmra.mxu0 %v469
    %v718 = vpop.f32.mrf.mxu0
    %v719 = vadd.f32 %v521, %v718
    %v720 = vpop.f32.mrf.mxu0
    %721 = vdwg.mxu0
    %722 = vmatpush.bf16.msra.mxu0 %v650
    %723 = vmatpush.bf16.msra.mxu0 %v646
    %724 = vmatpush.bf16.msra.mxu0 %v642
    %725 = vmatpush.bf16.msra.mxu0 %v638
    %726 = vmatpush.bf16.msra.mxu0 %v634
    %727 = vmatpush.bf16.msra.mxu0 %v630
    %728 = vmatpush.bf16.msra.mxu0 %v626
    %729 = vmatpush.bf16.msra.mxu0 %v622
    %730 = vmatmul.bf16.gmra.mxu0 %v469
    %v731 = vpop.f32.mrf.mxu0
    %v732 = vadd.f32 %v522, %v731
    %v733 = vpop.f32.mrf.mxu0
    %734 = vdwg.mxu0
    %v735 = vld [vmem:[#allocation14] sm:$0xff]
    %v736 = vld [vmem:[#allocation14 + $0x8] sm:$0xff]
    %v737 = vld [vmem:[#allocation14 + $0x10] sm:$0xff]
    %v738 = vld [vmem:[#allocation14 + $0x18] sm:$0xff]
    %v739 = vld [vmem:[#allocation14 + $0x20] sm:$0xff]
    %v740 = vld [vmem:[#allocation14 + $0x28] sm:$0xff]
    %v741 = vld [vmem:[#allocation14 + $0x30] sm:$0xff]
    %v742 = vld [vmem:[#allocation14 + $0x38] sm:$0xff]
    %v743 = vld [vmem:[#allocation14 + $0x40] sm:$0xff]
    %v744 = vld [vmem:[#allocation14 + $0x48] sm:$0xff]
    %v745 = vld [vmem:[#allocation14 + $0x50] sm:$0xff]
    %v746 = vld [vmem:[#allocation14 + $0x58] sm:$0xff]
    %v747 = vld [vmem:[#allocation14 + $0x60] sm:$0xff]
    %v748 = vld [vmem:[#allocation14 + $0x68] sm:$0xff]
    %v749 = vld [vmem:[#allocation14 + $0x70] sm:$0xff]
    %v750 = vld [vmem:[#allocation14 + $0x78] sm:$0xff]
    %v751 = vld [vmem:[#allocation14 + $0x80] sm:$0xff]
    %v752 = vld [vmem:[#allocation14 + $0x88] sm:$0xff]
    %v753 = vld [vmem:[#allocation14 + $0x90] sm:$0xff]
    %v754 = vld [vmem:[#allocation14 + $0x98] sm:$0xff]
    %v755 = vld [vmem:[#allocation14 + $0xa0] sm:$0xff]
    %v756 = vld [vmem:[#allocation14 + $0xa8] sm:$0xff]
    %v757 = vld [vmem:[#allocation14 + $0xb0] sm:$0xff]
    %v758 = vld [vmem:[#allocation14 + $0xb8] sm:$0xff]
    %v759 = vld [vmem:[#allocation14 + $0xc0] sm:$0xff]
    %v760 = vld [vmem:[#allocation14 + $0xc8] sm:$0xff]
    %v761 = vld [vmem:[#allocation14 + $0xd0] sm:$0xff]
    %v762 = vld [vmem:[#allocation14 + $0xd8] sm:$0xff]
    %v763 = vld [vmem:[#allocation14 + $0xe0] sm:$0xff]
    %v764 = vld [vmem:[#allocation14 + $0xe8] sm:$0xff]
    %v765 = vld [vmem:[#allocation14 + $0xf0] sm:$0xff]
    %v766 = vld [vmem:[#allocation14 + $0xf8] sm:$0xff]
    %v769 = vperm.slane %v475, 0
    %v770 = vperm.slane %v475, 4
    %v771 = vperm.slane %v476, 0
    %v772 = vperm.slane %v476, 4
    %v777 = vperm.slane %v769, 0
    %v778 = vperm.slane %v770, 0
    %v779 = vperm.slane %v771, 0
    %v780 = vperm.slane %v772, 0
    %v813 = vunpack.c.l.b16 %v735
    %v814 = vunpack.c.h.b16 %v735
    %v815 = vunpack.c.l.b16 %v736
    %v816 = vunpack.c.h.b16 %v736
    %v817 = vunpack.c.l.b16 %v737
    %v818 = vunpack.c.h.b16 %v737
    %v819 = vunpack.c.l.b16 %v738
    %v820 = vunpack.c.h.b16 %v738
    %v821 = vunpack.c.l.b16 %v739
    %v822 = vunpack.c.h.b16 %v739
    %v823 = vunpack.c.l.b16 %v740
    %v824 = vunpack.c.h.b16 %v740
    %v825 = vunpack.c.l.b16 %v741
    %v826 = vunpack.c.h.b16 %v741
    %v827 = vunpack.c.l.b16 %v742
    %v828 = vunpack.c.h.b16 %v742
    %v829 = vunpack.c.l.b16 %v743
    %v830 = vunpack.c.h.b16 %v743
    %v831 = vunpack.c.l.b16 %v744
    %v832 = vunpack.c.h.b16 %v744
    %v833 = vunpack.c.l.b16 %v745
    %v834 = vunpack.c.h.b16 %v745
    %v835 = vunpack.c.l.b16 %v746
    %v836 = vunpack.c.h.b16 %v746
    %v837 = vunpack.c.l.b16 %v747
    %v838 = vunpack.c.h.b16 %v747
    %v839 = vunpack.c.l.b16 %v748
    %v840 = vunpack.c.h.b16 %v748
    %v841 = vunpack.c.l.b16 %v749
    %v842 = vunpack.c.h.b16 %v749
    %v843 = vunpack.c.l.b16 %v750
    %v844 = vunpack.c.h.b16 %v750
    %v845 = vunpack.c.l.b16 %v751
    %v846 = vunpack.c.h.b16 %v751
    %v847 = vunpack.c.l.b16 %v752
    %v848 = vunpack.c.h.b16 %v752
    %v849 = vunpack.c.l.b16 %v753
    %v850 = vunpack.c.h.b16 %v753
    %v851 = vunpack.c.l.b16 %v754
    %v852 = vunpack.c.h.b16 %v754
    %v853 = vunpack.c.l.b16 %v755
    %v854 = vunpack.c.h.b16 %v755
    %v855 = vunpack.c.l.b16 %v756
    %v856 = vunpack.c.h.b16 %v756
    %v857 = vunpack.c.l.b16 %v757
    %v858 = vunpack.c.h.b16 %v757
    %v859 = vunpack.c.l.b16 %v758
    %v860 = vunpack.c.h.b16 %v758
    %v861 = vunpack.c.l.b16 %v759
    %v862 = vunpack.c.h.b16 %v759
    %v863 = vunpack.c.l.b16 %v760
    %v864 = vunpack.c.h.b16 %v760
    %v865 = vunpack.c.l.b16 %v761
    %v866 = vunpack.c.h.b16 %v761
    %v867 = vunpack.c.l.b16 %v762
    %v868 = vunpack.c.h.b16 %v762
    %v869 = vunpack.c.l.b16 %v763
    %v870 = vunpack.c.h.b16 %v763
    %v871 = vunpack.c.l.b16 %v764
    %v872 = vunpack.c.h.b16 %v764
    %v873 = vunpack.c.l.b16 %v765
    %v874 = vunpack.c.h.b16 %v765
    %v875 = vunpack.c.l.b16 %v766
    %v876 = vunpack.c.h.b16 %v766
    %v877 = vpack.c.b16 %v817, %v813
    %v878 = vpack.c.b16 %v818, %v814
    %v879 = vpack.c.b16 %v819, %v815
    %v880 = vpack.c.b16 %v820, %v816
    %v881 = vpack.c.b16 %v825, %v821
    %v882 = vpack.c.b16 %v826, %v822
    %v883 = vpack.c.b16 %v827, %v823
    %v884 = vpack.c.b16 %v828, %v824
    %v885 = vpack.c.b16 %v833, %v829
    %v886 = vpack.c.b16 %v834, %v830
    %v887 = vpack.c.b16 %v835, %v831
    %v888 = vpack.c.b16 %v836, %v832
    %v889 = vpack.c.b16 %v841, %v837
    %v890 = vpack.c.b16 %v842, %v838
    %v891 = vpack.c.b16 %v843, %v839
    %v892 = vpack.c.b16 %v844, %v840
    %v893 = vpack.c.b16 %v849, %v845
    %v894 = vpack.c.b16 %v850, %v846
    %v895 = vpack.c.b16 %v851, %v847
    %v896 = vpack.c.b16 %v852, %v848
    %v897 = vpack.c.b16 %v857, %v853
    %v898 = vpack.c.b16 %v858, %v854
    %v899 = vpack.c.b16 %v859, %v855
    %v900 = vpack.c.b16 %v860, %v856
    %v901 = vpack.c.b16 %v865, %v861
    %v902 = vpack.c.b16 %v866, %v862
    %v903 = vpack.c.b16 %v867, %v863
    %v904 = vpack.c.b16 %v868, %v864
    %v905 = vpack.c.b16 %v873, %v869
    %v906 = vpack.c.b16 %v874, %v870
    %v907 = vpack.c.b16 %v875, %v871
    %v908 = vpack.c.b16 %v876, %v872
    %941 = vmatpush.bf16.msra.mxu0 %v905
    %942 = vmatpush.bf16.msra.mxu0 %v901
    %943 = vmatpush.bf16.msra.mxu0 %v897
    %944 = vmatpush.bf16.msra.mxu0 %v893
    %945 = vmatpush.bf16.msra.mxu0 %v889
    %946 = vmatpush.bf16.msra.mxu0 %v885
    %947 = vmatpush.bf16.msra.mxu0 %v881
    %948 = vmatpush.bf16.msra.mxu0 %v877
    %949 = vmatmul.bf16.gmra.mxu0 %v471
    %v950 = vpop.f32.mrf.mxu0
    %v951 = vadd.f32 %v777, %v950
    %v952 = vpop.f32.mrf.mxu0
    %953 = vdwg.mxu0
    %954 = vmatpush.bf16.msra.mxu0 %v906
    %955 = vmatpush.bf16.msra.mxu0 %v902
    %956 = vmatpush.bf16.msra.mxu0 %v898
    %957 = vmatpush.bf16.msra.mxu0 %v894
    %958 = vmatpush.bf16.msra.mxu0 %v890
    %959 = vmatpush.bf16.msra.mxu0 %v886
    %960 = vmatpush.bf16.msra.mxu0 %v882
    %961 = vmatpush.bf16.msra.mxu0 %v878
    %962 = vmatmul.bf16.gmra.mxu0 %v471
    %v963 = vpop.f32.mrf.mxu0
    %v964 = vadd.f32 %v778, %v963
    %v965 = vpop.f32.mrf.mxu0
    %966 = vdwg.mxu0
    %967 = vmatpush.bf16.msra.mxu0 %v907
    %968 = vmatpush.bf16.msra.mxu0 %v903
    %969 = vmatpush.bf16.msra.mxu0 %v899
    %970 = vmatpush.bf16.msra.mxu0 %v895
    %971 = vmatpush.bf16.msra.mxu0 %v891
    %972 = vmatpush.bf16.msra.mxu0 %v887
    %973 = vmatpush.bf16.msra.mxu0 %v883
    %974 = vmatpush.bf16.msra.mxu0 %v879
    %975 = vmatmul.bf16.gmra.mxu0 %v471
    %v976 = vpop.f32.mrf.mxu0
    %v977 = vadd.f32 %v779, %v976
    %v978 = vpop.f32.mrf.mxu0
    %979 = vdwg.mxu0
    %980 = vmatpush.bf16.msra.mxu0 %v908
    %981 = vmatpush.bf16.msra.mxu0 %v904
    %982 = vmatpush.bf16.msra.mxu0 %v900
    %983 = vmatpush.bf16.msra.mxu0 %v896
    %984 = vmatpush.bf16.msra.mxu0 %v892
    %985 = vmatpush.bf16.msra.mxu0 %v888
    %986 = vmatpush.bf16.msra.mxu0 %v884
    %987 = vmatpush.bf16.msra.mxu0 %v880
    %988 = vmatmul.bf16.gmra.mxu0 %v471
    %v989 = vpop.f32.mrf.mxu0
    %v990 = vadd.f32 %v780, %v989
    %v991 = vpop.f32.mrf.mxu0
    %992 = vdwg.mxu0
    %v993 = vmul.f32 %v693, %v951
    %v994 = vmul.f32 %v706, %v964
    %v995 = vmul.f32 %v719, %v977
    %v996 = vmul.f32 %v732, %v990
    %v997 = vadd.f32 %v993, %v994
    %v998 = vadd.f32 %v997, %v995
    %v999 = vadd.f32 %v998, %v996
    %v1000 = vand.u32 2147483647, %v999
    %v1001 = vmax.f32 %v1000, 1e-30
    %v1002 = vrsqrt.pop %v1001
    %v1003 = vmul.f32 %v1002, %v1001
    %v1004 = vmul.f32 %v1003, %v1002
    %v1005 = vmul.f32 0.5, %v1004
    %v1006 = vsub.f32 1.5, %v1005
    %v1007 = vmul.f32 %v1002, %v1006
    %vm1008 = vweird.f32 %v1001
    %vm1009 = vweird.f32 %v1002
    %vm1010 = vmor %vm1008, %vm1009
    %v1011 = vsel %vm1010, %v1002, %v1007
    %v1012 = vmul.f32 %v999, %v1011
    %v1013 = vmul.f32 %v1012, %v1012
    %1014 = vadd.xlane.f32.xlu0 %v1013
    %v1015 = vpop.xlane.xlu0 %1014
    %v1016 = vmax.f32 %v1015, 1e-24
    %v1017 = vrsqrt.pop %v1016
    %v1018 = vmul.f32 %v1017, %v1016
    %v1019 = vmul.f32 %v1018, %v1017
    %v1020 = vmul.f32 0.5, %v1019
    %v1021 = vsub.f32 1.5, %v1020
    %v1022 = vmul.f32 %v1017, %v1021
    %vm1023 = vweird.f32 %v1016
    %vm1024 = vweird.f32 %v1017
    %vm1025 = vmor %vm1023, %vm1024
    %v1026 = vsel %vm1025, %v1017, %v1022
    %v1027 = vmul.f32 %v1012, %v1026
    %v1028 = vpack.c.bf16 %v1027, %v1027
    %s1029 = scalar_lea.vmem [#allocation11], 256
    %v1030 = vld [vmem:[%s1029] sm:$0xff]
    %v1031 = vld [vmem:[%s1029 + $0x8] sm:$0xff]
    %v1032 = vld [vmem:[%s1029 + $0x10] sm:$0xff]
    %v1033 = vld [vmem:[%s1029 + $0x18] sm:$0xff]
    %v1034 = vld [vmem:[%s1029 + $0x20] sm:$0xff]
    %v1035 = vld [vmem:[%s1029 + $0x28] sm:$0xff]
    %v1036 = vld [vmem:[%s1029 + $0x30] sm:$0xff]
    %v1037 = vld [vmem:[%s1029 + $0x38] sm:$0xff]
    %v1038 = vld [vmem:[%s1029 + $0x40] sm:$0xff]
    %v1039 = vld [vmem:[%s1029 + $0x48] sm:$0xff]
    %v1040 = vld [vmem:[%s1029 + $0x50] sm:$0xff]
    %v1041 = vld [vmem:[%s1029 + $0x58] sm:$0xff]
    %v1042 = vld [vmem:[%s1029 + $0x60] sm:$0xff]
    %v1043 = vld [vmem:[%s1029 + $0x68] sm:$0xff]
    %v1044 = vld [vmem:[%s1029 + $0x70] sm:$0xff]
    %v1045 = vld [vmem:[%s1029 + $0x78] sm:$0xff]
    %v1046 = vld [vmem:[%s1029 + $0x80] sm:$0xff]
    %v1047 = vld [vmem:[%s1029 + $0x88] sm:$0xff]
    %v1048 = vld [vmem:[%s1029 + $0x90] sm:$0xff]
    %v1049 = vld [vmem:[%s1029 + $0x98] sm:$0xff]
    %v1050 = vld [vmem:[%s1029 + $0xa0] sm:$0xff]
    %v1051 = vld [vmem:[%s1029 + $0xa8] sm:$0xff]
    %v1052 = vld [vmem:[%s1029 + $0xb0] sm:$0xff]
    %v1053 = vld [vmem:[%s1029 + $0xb8] sm:$0xff]
    %v1054 = vld [vmem:[%s1029 + $0xc0] sm:$0xff]
    %v1055 = vld [vmem:[%s1029 + $0xc8] sm:$0xff]
    %v1056 = vld [vmem:[%s1029 + $0xd0] sm:$0xff]
    %v1057 = vld [vmem:[%s1029 + $0xd8] sm:$0xff]
    %v1058 = vld [vmem:[%s1029 + $0xe0] sm:$0xff]
    %v1059 = vld [vmem:[%s1029 + $0xe8] sm:$0xff]
    %v1060 = vld [vmem:[%s1029 + $0xf0] sm:$0xff]
    %v1061 = vld [vmem:[%s1029 + $0xf8] sm:$0xff]
    %v1062 = vperm.slane %v473, 1
    %v1063 = vperm.slane %v473, 5
    %v1064 = vperm.slane %v474, 1
    %v1065 = vperm.slane %v474, 5
    %v1070 = vperm.slane %v1062, 1
    %v1071 = vperm.slane %v1063, 1
    %v1072 = vperm.slane %v1064, 1
    %v1073 = vperm.slane %v1065, 1
    %v1075 = vunpack.c.h.b16 %v469
    %v1076 = vpack.c.b16 %v1075, %v1075
    %v1110 = vunpack.c.l.b16 %v1030
    %v1111 = vunpack.c.h.b16 %v1030
    %v1112 = vunpack.c.l.b16 %v1031
    %v1113 = vunpack.c.h.b16 %v1031
    %v1114 = vunpack.c.l.b16 %v1032
    %v1115 = vunpack.c.h.b16 %v1032
    %v1116 = vunpack.c.l.b16 %v1033
    %v1117 = vunpack.c.h.b16 %v1033
    %v1118 = vunpack.c.l.b16 %v1034
    %v1119 = vunpack.c.h.b16 %v1034
    %v1120 = vunpack.c.l.b16 %v1035
    %v1121 = vunpack.c.h.b16 %v1035
    %v1122 = vunpack.c.l.b16 %v1036
    %v1123 = vunpack.c.h.b16 %v1036
    %v1124 = vunpack.c.l.b16 %v1037
    %v1125 = vunpack.c.h.b16 %v1037
    %v1126 = vunpack.c.l.b16 %v1038
    %v1127 = vunpack.c.h.b16 %v1038
    %v1128 = vunpack.c.l.b16 %v1039
    %v1129 = vunpack.c.h.b16 %v1039
    %v1130 = vunpack.c.l.b16 %v1040
    %v1131 = vunpack.c.h.b16 %v1040
    %v1132 = vunpack.c.l.b16 %v1041
    %v1133 = vunpack.c.h.b16 %v1041
    %v1134 = vunpack.c.l.b16 %v1042
    %v1135 = vunpack.c.h.b16 %v1042
    %v1136 = vunpack.c.l.b16 %v1043
    %v1137 = vunpack.c.h.b16 %v1043
    %v1138 = vunpack.c.l.b16 %v1044
    %v1139 = vunpack.c.h.b16 %v1044
    %v1140 = vunpack.c.l.b16 %v1045
    %v1141 = vunpack.c.h.b16 %v1045
    %v1142 = vunpack.c.l.b16 %v1046
    %v1143 = vunpack.c.h.b16 %v1046
    %v1144 = vunpack.c.l.b16 %v1047
    %v1145 = vunpack.c.h.b16 %v1047
    %v1146 = vunpack.c.l.b16 %v1048
    %v1147 = vunpack.c.h.b16 %v1048
    %v1148 = vunpack.c.l.b16 %v1049
    %v1149 = vunpack.c.h.b16 %v1049
    %v1150 = vunpack.c.l.b16 %v1050
    %v1151 = vunpack.c.h.b16 %v1050
    %v1152 = vunpack.c.l.b16 %v1051
    %v1153 = vunpack.c.h.b16 %v1051
    %v1154 = vunpack.c.l.b16 %v1052
    %v1155 = vunpack.c.h.b16 %v1052
    %v1156 = vunpack.c.l.b16 %v1053
    %v1157 = vunpack.c.h.b16 %v1053
    %v1158 = vunpack.c.l.b16 %v1054
    %v1159 = vunpack.c.h.b16 %v1054
    %v1160 = vunpack.c.l.b16 %v1055
    %v1161 = vunpack.c.h.b16 %v1055
    %v1162 = vunpack.c.l.b16 %v1056
    %v1163 = vunpack.c.h.b16 %v1056
    %v1164 = vunpack.c.l.b16 %v1057
    %v1165 = vunpack.c.h.b16 %v1057
    %v1166 = vunpack.c.l.b16 %v1058
    %v1167 = vunpack.c.h.b16 %v1058
    %v1168 = vunpack.c.l.b16 %v1059
    %v1169 = vunpack.c.h.b16 %v1059
    %v1170 = vunpack.c.l.b16 %v1060
    %v1171 = vunpack.c.h.b16 %v1060
    %v1172 = vunpack.c.l.b16 %v1061
    %v1173 = vunpack.c.h.b16 %v1061
    %v1174 = vpack.c.b16 %v1114, %v1110
    %v1175 = vpack.c.b16 %v1115, %v1111
    %v1176 = vpack.c.b16 %v1116, %v1112
    %v1177 = vpack.c.b16 %v1117, %v1113
    %v1178 = vpack.c.b16 %v1122, %v1118
    %v1179 = vpack.c.b16 %v1123, %v1119
    %v1180 = vpack.c.b16 %v1124, %v1120
    %v1181 = vpack.c.b16 %v1125, %v1121
    %v1182 = vpack.c.b16 %v1130, %v1126
    %v1183 = vpack.c.b16 %v1131, %v1127
    %v1184 = vpack.c.b16 %v1132, %v1128
    %v1185 = vpack.c.b16 %v1133, %v1129
    %v1186 = vpack.c.b16 %v1138, %v1134
    %v1187 = vpack.c.b16 %v1139, %v1135
    %v1188 = vpack.c.b16 %v1140, %v1136
    %v1189 = vpack.c.b16 %v1141, %v1137
    %v1190 = vpack.c.b16 %v1146, %v1142
    %v1191 = vpack.c.b16 %v1147, %v1143
    %v1192 = vpack.c.b16 %v1148, %v1144
    %v1193 = vpack.c.b16 %v1149, %v1145
    %v1194 = vpack.c.b16 %v1154, %v1150
    %v1195 = vpack.c.b16 %v1155, %v1151
    %v1196 = vpack.c.b16 %v1156, %v1152
    %v1197 = vpack.c.b16 %v1157, %v1153
    %v1198 = vpack.c.b16 %v1162, %v1158
    %v1199 = vpack.c.b16 %v1163, %v1159
    %v1200 = vpack.c.b16 %v1164, %v1160
    %v1201 = vpack.c.b16 %v1165, %v1161
    %v1202 = vpack.c.b16 %v1170, %v1166
    %v1203 = vpack.c.b16 %v1171, %v1167
    %v1204 = vpack.c.b16 %v1172, %v1168
    %v1205 = vpack.c.b16 %v1173, %v1169
    %1238 = vmatpush.bf16.msra.mxu0 %v1202
    %1239 = vmatpush.bf16.msra.mxu0 %v1198
    %1240 = vmatpush.bf16.msra.mxu0 %v1194
    %1241 = vmatpush.bf16.msra.mxu0 %v1190
    %1242 = vmatpush.bf16.msra.mxu0 %v1186
    %1243 = vmatpush.bf16.msra.mxu0 %v1182
    %1244 = vmatpush.bf16.msra.mxu0 %v1178
    %1245 = vmatpush.bf16.msra.mxu0 %v1174
    %1246 = vmatmul.bf16.gmra.mxu0 %v1076
    %v1247 = vpop.f32.mrf.mxu0
    %v1248 = vadd.f32 %v1070, %v1247
    %v1249 = vpop.f32.mrf.mxu0
    %1250 = vdwg.mxu0
    %1251 = vmatpush.bf16.msra.mxu0 %v1203
    %1252 = vmatpush.bf16.msra.mxu0 %v1199
    %1253 = vmatpush.bf16.msra.mxu0 %v1195
    %1254 = vmatpush.bf16.msra.mxu0 %v1191
    %1255 = vmatpush.bf16.msra.mxu0 %v1187
    %1256 = vmatpush.bf16.msra.mxu0 %v1183
    %1257 = vmatpush.bf16.msra.mxu0 %v1179
    %1258 = vmatpush.bf16.msra.mxu0 %v1175
    %1259 = vmatmul.bf16.gmra.mxu0 %v1076
    %v1260 = vpop.f32.mrf.mxu0
    %v1261 = vadd.f32 %v1071, %v1260
    %v1262 = vpop.f32.mrf.mxu0
    %1263 = vdwg.mxu0
    %1264 = vmatpush.bf16.msra.mxu0 %v1204
    %1265 = vmatpush.bf16.msra.mxu0 %v1200
    %1266 = vmatpush.bf16.msra.mxu0 %v1196
    %1267 = vmatpush.bf16.msra.mxu0 %v1192
    %1268 = vmatpush.bf16.msra.mxu0 %v1188
    %1269 = vmatpush.bf16.msra.mxu0 %v1184
    %1270 = vmatpush.bf16.msra.mxu0 %v1180
    %1271 = vmatpush.bf16.msra.mxu0 %v1176
    %1272 = vmatmul.bf16.gmra.mxu0 %v1076
    %v1273 = vpop.f32.mrf.mxu0
    %v1274 = vadd.f32 %v1072, %v1273
    %v1275 = vpop.f32.mrf.mxu0
    %1276 = vdwg.mxu0
    %1277 = vmatpush.bf16.msra.mxu0 %v1205
    %1278 = vmatpush.bf16.msra.mxu0 %v1201
    %1279 = vmatpush.bf16.msra.mxu0 %v1197
    %1280 = vmatpush.bf16.msra.mxu0 %v1193
    %1281 = vmatpush.bf16.msra.mxu0 %v1189
    %1282 = vmatpush.bf16.msra.mxu0 %v1185
    %1283 = vmatpush.bf16.msra.mxu0 %v1181
    %1284 = vmatpush.bf16.msra.mxu0 %v1177
    %1285 = vmatmul.bf16.gmra.mxu0 %v1076
    %v1286 = vpop.f32.mrf.mxu0
    %v1287 = vadd.f32 %v1073, %v1286
    %v1288 = vpop.f32.mrf.mxu0
    %1289 = vdwg.mxu0
    %s1290 = scalar_lea.vmem [#allocation14], 256
    %v1291 = vld [vmem:[%s1290] sm:$0xff]
    %v1292 = vld [vmem:[%s1290 + $0x8] sm:$0xff]
    %v1293 = vld [vmem:[%s1290 + $0x10] sm:$0xff]
    %v1294 = vld [vmem:[%s1290 + $0x18] sm:$0xff]
    %v1295 = vld [vmem:[%s1290 + $0x20] sm:$0xff]
    %v1296 = vld [vmem:[%s1290 + $0x28] sm:$0xff]
    %v1297 = vld [vmem:[%s1290 + $0x30] sm:$0xff]
    %v1298 = vld [vmem:[%s1290 + $0x38] sm:$0xff]
    %v1299 = vld [vmem:[%s1290 + $0x40] sm:$0xff]
    %v1300 = vld [vmem:[%s1290 + $0x48] sm:$0xff]
    %v1301 = vld [vmem:[%s1290 + $0x50] sm:$0xff]
    %v1302 = vld [vmem:[%s1290 + $0x58] sm:$0xff]
    %v1303 = vld [vmem:[%s1290 + $0x60] sm:$0xff]
    %v1304 = vld [vmem:[%s1290 + $0x68] sm:$0xff]
    %v1305 = vld [vmem:[%s1290 + $0x70] sm:$0xff]
    %v1306 = vld [vmem:[%s1290 + $0x78] sm:$0xff]
    %v1307 = vld [vmem:[%s1290 + $0x80] sm:$0xff]
    %v1308 = vld [vmem:[%s1290 + $0x88] sm:$0xff]
    %v1309 = vld [vmem:[%s1290 + $0x90] sm:$0xff]
    %v1310 = vld [vmem:[%s1290 + $0x98] sm:$0xff]
    %v1311 = vld [vmem:[%s1290 + $0xa0] sm:$0xff]
    %v1312 = vld [vmem:[%s1290 + $0xa8] sm:$0xff]
    %v1313 = vld [vmem:[%s1290 + $0xb0] sm:$0xff]
    %v1314 = vld [vmem:[%s1290 + $0xb8] sm:$0xff]
    %v1315 = vld [vmem:[%s1290 + $0xc0] sm:$0xff]
    %v1316 = vld [vmem:[%s1290 + $0xc8] sm:$0xff]
    %v1317 = vld [vmem:[%s1290 + $0xd0] sm:$0xff]
    %v1318 = vld [vmem:[%s1290 + $0xd8] sm:$0xff]
    %v1319 = vld [vmem:[%s1290 + $0xe0] sm:$0xff]
    %v1320 = vld [vmem:[%s1290 + $0xe8] sm:$0xff]
    %v1321 = vld [vmem:[%s1290 + $0xf0] sm:$0xff]
    %v1322 = vld [vmem:[%s1290 + $0xf8] sm:$0xff]
    %v1323 = vperm.slane %v475, 1
    %v1324 = vperm.slane %v475, 5
    %v1325 = vperm.slane %v476, 1
    %v1326 = vperm.slane %v476, 5
    %v1331 = vperm.slane %v1323, 1
    %v1332 = vperm.slane %v1324, 1
    %v1333 = vperm.slane %v1325, 1
    %v1334 = vperm.slane %v1326, 1
    %v1336 = vunpack.c.h.b16 %v471
    %v1337 = vpack.c.b16 %v1336, %v1336
    %v1371 = vunpack.c.l.b16 %v1291
    %v1372 = vunpack.c.h.b16 %v1291
    %v1373 = vunpack.c.l.b16 %v1292
    %v1374 = vunpack.c.h.b16 %v1292
    %v1375 = vunpack.c.l.b16 %v1293
    %v1376 = vunpack.c.h.b16 %v1293
    %v1377 = vunpack.c.l.b16 %v1294
    %v1378 = vunpack.c.h.b16 %v1294
    %v1379 = vunpack.c.l.b16 %v1295
    %v1380 = vunpack.c.h.b16 %v1295
    %v1381 = vunpack.c.l.b16 %v1296
    %v1382 = vunpack.c.h.b16 %v1296
    %v1383 = vunpack.c.l.b16 %v1297
    %v1384 = vunpack.c.h.b16 %v1297
    %v1385 = vunpack.c.l.b16 %v1298
    %v1386 = vunpack.c.h.b16 %v1298
    %v1387 = vunpack.c.l.b16 %v1299
    %v1388 = vunpack.c.h.b16 %v1299
    %v1389 = vunpack.c.l.b16 %v1300
    %v1390 = vunpack.c.h.b16 %v1300
    %v1391 = vunpack.c.l.b16 %v1301
    %v1392 = vunpack.c.h.b16 %v1301
    %v1393 = vunpack.c.l.b16 %v1302
    %v1394 = vunpack.c.h.b16 %v1302
    %v1395 = vunpack.c.l.b16 %v1303
    %v1396 = vunpack.c.h.b16 %v1303
    %v1397 = vunpack.c.l.b16 %v1304
    %v1398 = vunpack.c.h.b16 %v1304
    %v1399 = vunpack.c.l.b16 %v1305
    %v1400 = vunpack.c.h.b16 %v1305
    %v1401 = vunpack.c.l.b16 %v1306
    %v1402 = vunpack.c.h.b16 %v1306
    %v1403 = vunpack.c.l.b16 %v1307
    %v1404 = vunpack.c.h.b16 %v1307
    %v1405 = vunpack.c.l.b16 %v1308
    %v1406 = vunpack.c.h.b16 %v1308
    %v1407 = vunpack.c.l.b16 %v1309
    %v1408 = vunpack.c.h.b16 %v1309
    %v1409 = vunpack.c.l.b16 %v1310
    %v1410 = vunpack.c.h.b16 %v1310
    %v1411 = vunpack.c.l.b16 %v1311
    %v1412 = vunpack.c.h.b16 %v1311
    %v1413 = vunpack.c.l.b16 %v1312
    %v1414 = vunpack.c.h.b16 %v1312
    %v1415 = vunpack.c.l.b16 %v1313
    %v1416 = vunpack.c.h.b16 %v1313
    %v1417 = vunpack.c.l.b16 %v1314
    %v1418 = vunpack.c.h.b16 %v1314
    %v1419 = vunpack.c.l.b16 %v1315
    %v1420 = vunpack.c.h.b16 %v1315
    %v1421 = vunpack.c.l.b16 %v1316
    %v1422 = vunpack.c.h.b16 %v1316
    %v1423 = vunpack.c.l.b16 %v1317
    %v1424 = vunpack.c.h.b16 %v1317
    %v1425 = vunpack.c.l.b16 %v1318
    %v1426 = vunpack.c.h.b16 %v1318
    %v1427 = vunpack.c.l.b16 %v1319
    %v1428 = vunpack.c.h.b16 %v1319
    %v1429 = vunpack.c.l.b16 %v1320
    %v1430 = vunpack.c.h.b16 %v1320
    %v1431 = vunpack.c.l.b16 %v1321
    %v1432 = vunpack.c.h.b16 %v1321
    %v1433 = vunpack.c.l.b16 %v1322
    %v1434 = vunpack.c.h.b16 %v1322
    %v1435 = vpack.c.b16 %v1375, %v1371
    %v1436 = vpack.c.b16 %v1376, %v1372
    %v1437 = vpack.c.b16 %v1377, %v1373
    %v1438 = vpack.c.b16 %v1378, %v1374
    %v1439 = vpack.c.b16 %v1383, %v1379
    %v1440 = vpack.c.b16 %v1384, %v1380
    %v1441 = vpack.c.b16 %v1385, %v1381
    %v1442 = vpack.c.b16 %v1386, %v1382
    %v1443 = vpack.c.b16 %v1391, %v1387
    %v1444 = vpack.c.b16 %v1392, %v1388
    %v1445 = vpack.c.b16 %v1393, %v1389
    %v1446 = vpack.c.b16 %v1394, %v1390
    %v1447 = vpack.c.b16 %v1399, %v1395
    %v1448 = vpack.c.b16 %v1400, %v1396
    %v1449 = vpack.c.b16 %v1401, %v1397
    %v1450 = vpack.c.b16 %v1402, %v1398
    %v1451 = vpack.c.b16 %v1407, %v1403
    %v1452 = vpack.c.b16 %v1408, %v1404
    %v1453 = vpack.c.b16 %v1409, %v1405
    %v1454 = vpack.c.b16 %v1410, %v1406
    %v1455 = vpack.c.b16 %v1415, %v1411
    %v1456 = vpack.c.b16 %v1416, %v1412
    %v1457 = vpack.c.b16 %v1417, %v1413
    %v1458 = vpack.c.b16 %v1418, %v1414
    %v1459 = vpack.c.b16 %v1423, %v1419
    %v1460 = vpack.c.b16 %v1424, %v1420
    %v1461 = vpack.c.b16 %v1425, %v1421
    %v1462 = vpack.c.b16 %v1426, %v1422
    %v1463 = vpack.c.b16 %v1431, %v1427
    %v1464 = vpack.c.b16 %v1432, %v1428
    %v1465 = vpack.c.b16 %v1433, %v1429
    %v1466 = vpack.c.b16 %v1434, %v1430
    %1499 = vmatpush.bf16.msra.mxu0 %v1463
    %1500 = vmatpush.bf16.msra.mxu0 %v1459
    %1501 = vmatpush.bf16.msra.mxu0 %v1455
    %1502 = vmatpush.bf16.msra.mxu0 %v1451
    %1503 = vmatpush.bf16.msra.mxu0 %v1447
    %1504 = vmatpush.bf16.msra.mxu0 %v1443
    %1505 = vmatpush.bf16.msra.mxu0 %v1439
    %1506 = vmatpush.bf16.msra.mxu0 %v1435
    %1507 = vmatmul.bf16.gmra.mxu0 %v1337
    %v1508 = vpop.f32.mrf.mxu0
    %v1509 = vadd.f32 %v1331, %v1508
    %v1510 = vpop.f32.mrf.mxu0
    %1511 = vdwg.mxu0
    %1512 = vmatpush.bf16.msra.mxu0 %v1464
    %1513 = vmatpush.bf16.msra.mxu0 %v1460
    %1514 = vmatpush.bf16.msra.mxu0 %v1456
    %1515 = vmatpush.bf16.msra.mxu0 %v1452
    %1516 = vmatpush.bf16.msra.mxu0 %v1448
    %1517 = vmatpush.bf16.msra.mxu0 %v1444
    %1518 = vmatpush.bf16.msra.mxu0 %v1440
    %1519 = vmatpush.bf16.msra.mxu0 %v1436
    %1520 = vmatmul.bf16.gmra.mxu0 %v1337
    %v1521 = vpop.f32.mrf.mxu0
    %v1522 = vadd.f32 %v1332, %v1521
    %v1523 = vpop.f32.mrf.mxu0
    %1524 = vdwg.mxu0
    %1525 = vmatpush.bf16.msra.mxu0 %v1465
    %1526 = vmatpush.bf16.msra.mxu0 %v1461
    %1527 = vmatpush.bf16.msra.mxu0 %v1457
    %1528 = vmatpush.bf16.msra.mxu0 %v1453
    %1529 = vmatpush.bf16.msra.mxu0 %v1449
    %1530 = vmatpush.bf16.msra.mxu0 %v1445
    %1531 = vmatpush.bf16.msra.mxu0 %v1441
    %1532 = vmatpush.bf16.msra.mxu0 %v1437
    %1533 = vmatmul.bf16.gmra.mxu0 %v1337
    %v1534 = vpop.f32.mrf.mxu0
    %v1535 = vadd.f32 %v1333, %v1534
    %v1536 = vpop.f32.mrf.mxu0
    %1537 = vdwg.mxu0
    %1538 = vmatpush.bf16.msra.mxu0 %v1466
    %1539 = vmatpush.bf16.msra.mxu0 %v1462
    %1540 = vmatpush.bf16.msra.mxu0 %v1458
    %1541 = vmatpush.bf16.msra.mxu0 %v1454
    %1542 = vmatpush.bf16.msra.mxu0 %v1450
    %1543 = vmatpush.bf16.msra.mxu0 %v1446
    %1544 = vmatpush.bf16.msra.mxu0 %v1442
    %1545 = vmatpush.bf16.msra.mxu0 %v1438
    %1546 = vmatmul.bf16.gmra.mxu0 %v1337
    %v1547 = vpop.f32.mrf.mxu0
    %v1548 = vadd.f32 %v1334, %v1547
    %v1549 = vpop.f32.mrf.mxu0
    %1550 = vdwg.mxu0
    %v1551 = vmul.f32 %v1248, %v1509
    %v1552 = vmul.f32 %v1261, %v1522
    %v1553 = vmul.f32 %v1274, %v1535
    %v1554 = vmul.f32 %v1287, %v1548
    %v1555 = vadd.f32 %v1551, %v1552
    %v1556 = vadd.f32 %v1555, %v1553
    %v1557 = vadd.f32 %v1556, %v1554
    %v1558 = vand.u32 2147483647, %v1557
    %v1559 = vmax.f32 %v1558, 1e-30
    %v1560 = vrsqrt.pop %v1559
    %v1561 = vmul.f32 %v1560, %v1559
    %v1562 = vmul.f32 %v1561, %v1560
    %v1563 = vmul.f32 0.5, %v1562
    %v1564 = vsub.f32 1.5, %v1563
    %v1565 = vmul.f32 %v1560, %v1564
    %vm1566 = vweird.f32 %v1559
    %vm1567 = vweird.f32 %v1560
    %vm1568 = vmor %vm1566, %vm1567
    %v1569 = vsel %vm1568, %v1560, %v1565
    %v1570 = vmul.f32 %v1557, %v1569
    %v1571 = vmul.f32 %v1570, %v1570
    %1572 = vadd.xlane.f32.xlu0 %v1571
    %v1573 = vpop.xlane.xlu0 %1572
    %v1574 = vmax.f32 %v1573, 1e-24
    %v1575 = vrsqrt.pop %v1574
    %v1576 = vmul.f32 %v1575, %v1574
    %v1577 = vmul.f32 %v1576, %v1575
    %v1578 = vmul.f32 0.5, %v1577
    %v1579 = vsub.f32 1.5, %v1578
    %v1580 = vmul.f32 %v1575, %v1579
    %vm1581 = vweird.f32 %v1574
    %vm1582 = vweird.f32 %v1575
    %vm1583 = vmor %vm1581, %vm1582
    %v1584 = vsel %vm1583, %v1575, %v1580
    %v1585 = vmul.f32 %v1570, %v1584
    %v1586 = vpack.c.bf16 %v1585, %v1585
    %s1587 = scalar_lea.vmem [#allocation11], 512
    %v1588 = vld [vmem:[%s1587] sm:$0xff]
    %v1589 = vld [vmem:[%s1587 + $0x8] sm:$0xff]
    %v1590 = vld [vmem:[%s1587 + $0x10] sm:$0xff]
    %v1591 = vld [vmem:[%s1587 + $0x18] sm:$0xff]
    %v1592 = vld [vmem:[%s1587 + $0x20] sm:$0xff]
    %v1593 = vld [vmem:[%s1587 + $0x28] sm:$0xff]
    %v1594 = vld [vmem:[%s1587 + $0x30] sm:$0xff]
    %v1595 = vld [vmem:[%s1587 + $0x38] sm:$0xff]
    %v1596 = vld [vmem:[%s1587 + $0x40] sm:$0xff]
    %v1597 = vld [vmem:[%s1587 + $0x48] sm:$0xff]
    %v1598 = vld [vmem:[%s1587 + $0x50] sm:$0xff]
    %v1599 = vld [vmem:[%s1587 + $0x58] sm:$0xff]
    %v1600 = vld [vmem:[%s1587 + $0x60] sm:$0xff]
    %v1601 = vld [vmem:[%s1587 + $0x68] sm:$0xff]
    %v1602 = vld [vmem:[%s1587 + $0x70] sm:$0xff]
    %v1603 = vld [vmem:[%s1587 + $0x78] sm:$0xff]
    %v1604 = vld [vmem:[%s1587 + $0x80] sm:$0xff]
    %v1605 = vld [vmem:[%s1587 + $0x88] sm:$0xff]
    %v1606 = vld [vmem:[%s1587 + $0x90] sm:$0xff]
    %v1607 = vld [vmem:[%s1587 + $0x98] sm:$0xff]
    %v1608 = vld [vmem:[%s1587 + $0xa0] sm:$0xff]
    %v1609 = vld [vmem:[%s1587 + $0xa8] sm:$0xff]
    %v1610 = vld [vmem:[%s1587 + $0xb0] sm:$0xff]
    %v1611 = vld [vmem:[%s1587 + $0xb8] sm:$0xff]
    %v1612 = vld [vmem:[%s1587 + $0xc0] sm:$0xff]
    %v1613 = vld [vmem:[%s1587 + $0xc8] sm:$0xff]
    %v1614 = vld [vmem:[%s1587 + $0xd0] sm:$0xff]
    %v1615 = vld [vmem:[%s1587 + $0xd8] sm:$0xff]
    %v1616 = vld [vmem:[%s1587 + $0xe0] sm:$0xff]
    %v1617 = vld [vmem:[%s1587 + $0xe8] sm:$0xff]
    %v1618 = vld [vmem:[%s1587 + $0xf0] sm:$0xff]
    %v1619 = vld [vmem:[%s1587 + $0xf8] sm:$0xff]
    %v1620 = vperm.slane %v473, 2
    %v1621 = vperm.slane %v473, 6
    %v1622 = vperm.slane %v474, 2
    %v1623 = vperm.slane %v474, 6
    %v1628 = vperm.slane %v1620, 2
    %v1629 = vperm.slane %v1621, 2
    %v1630 = vperm.slane %v1622, 2
    %v1631 = vperm.slane %v1623, 2
    %v1664 = vunpack.c.l.b16 %v1588
    %v1665 = vunpack.c.h.b16 %v1588
    %v1666 = vunpack.c.l.b16 %v1589
    %v1667 = vunpack.c.h.b16 %v1589
    %v1668 = vunpack.c.l.b16 %v1590
    %v1669 = vunpack.c.h.b16 %v1590
    %v1670 = vunpack.c.l.b16 %v1591
    %v1671 = vunpack.c.h.b16 %v1591
    %v1672 = vunpack.c.l.b16 %v1592
    %v1673 = vunpack.c.h.b16 %v1592
    %v1674 = vunpack.c.l.b16 %v1593
    %v1675 = vunpack.c.h.b16 %v1593
    %v1676 = vunpack.c.l.b16 %v1594
    %v1677 = vunpack.c.h.b16 %v1594
    %v1678 = vunpack.c.l.b16 %v1595
    %v1679 = vunpack.c.h.b16 %v1595
    %v1680 = vunpack.c.l.b16 %v1596
    %v1681 = vunpack.c.h.b16 %v1596
    %v1682 = vunpack.c.l.b16 %v1597
    %v1683 = vunpack.c.h.b16 %v1597
    %v1684 = vunpack.c.l.b16 %v1598
    %v1685 = vunpack.c.h.b16 %v1598
    %v1686 = vunpack.c.l.b16 %v1599
    %v1687 = vunpack.c.h.b16 %v1599
    %v1688 = vunpack.c.l.b16 %v1600
    %v1689 = vunpack.c.h.b16 %v1600
    %v1690 = vunpack.c.l.b16 %v1601
    %v1691 = vunpack.c.h.b16 %v1601
    %v1692 = vunpack.c.l.b16 %v1602
    %v1693 = vunpack.c.h.b16 %v1602
    %v1694 = vunpack.c.l.b16 %v1603
    %v1695 = vunpack.c.h.b16 %v1603
    %v1696 = vunpack.c.l.b16 %v1604
    %v1697 = vunpack.c.h.b16 %v1604
    %v1698 = vunpack.c.l.b16 %v1605
    %v1699 = vunpack.c.h.b16 %v1605
    %v1700 = vunpack.c.l.b16 %v1606
    %v1701 = vunpack.c.h.b16 %v1606
    %v1702 = vunpack.c.l.b16 %v1607
    %v1703 = vunpack.c.h.b16 %v1607
    %v1704 = vunpack.c.l.b16 %v1608
    %v1705 = vunpack.c.h.b16 %v1608
    %v1706 = vunpack.c.l.b16 %v1609
    %v1707 = vunpack.c.h.b16 %v1609
    %v1708 = vunpack.c.l.b16 %v1610
    %v1709 = vunpack.c.h.b16 %v1610
    %v1710 = vunpack.c.l.b16 %v1611
    %v1711 = vunpack.c.h.b16 %v1611
    %v1712 = vunpack.c.l.b16 %v1612
    %v1713 = vunpack.c.h.b16 %v1612
    %v1714 = vunpack.c.l.b16 %v1613
    %v1715 = vunpack.c.h.b16 %v1613
    %v1716 = vunpack.c.l.b16 %v1614
    %v1717 = vunpack.c.h.b16 %v1614
    %v1718 = vunpack.c.l.b16 %v1615
    %v1719 = vunpack.c.h.b16 %v1615
    %v1720 = vunpack.c.l.b16 %v1616
    %v1721 = vunpack.c.h.b16 %v1616
    %v1722 = vunpack.c.l.b16 %v1617
    %v1723 = vunpack.c.h.b16 %v1617
    %v1724 = vunpack.c.l.b16 %v1618
    %v1725 = vunpack.c.h.b16 %v1618
    %v1726 = vunpack.c.l.b16 %v1619
    %v1727 = vunpack.c.h.b16 %v1619
    %v1728 = vpack.c.b16 %v1668, %v1664
    %v1729 = vpack.c.b16 %v1669, %v1665
    %v1730 = vpack.c.b16 %v1670, %v1666
    %v1731 = vpack.c.b16 %v1671, %v1667
    %v1732 = vpack.c.b16 %v1676, %v1672
    %v1733 = vpack.c.b16 %v1677, %v1673
    %v1734 = vpack.c.b16 %v1678, %v1674
    %v1735 = vpack.c.b16 %v1679, %v1675
    %v1736 = vpack.c.b16 %v1684, %v1680
    %v1737 = vpack.c.b16 %v1685, %v1681
    %v1738 = vpack.c.b16 %v1686, %v1682
    %v1739 = vpack.c.b16 %v1687, %v1683
    %v1740 = vpack.c.b16 %v1692, %v1688
    %v1741 = vpack.c.b16 %v1693, %v1689
    %v1742 = vpack.c.b16 %v1694, %v1690
    %v1743 = vpack.c.b16 %v1695, %v1691
    %v1744 = vpack.c.b16 %v1700, %v1696
    %v1745 = vpack.c.b16 %v1701, %v1697
    %v1746 = vpack.c.b16 %v1702, %v1698
    %v1747 = vpack.c.b16 %v1703, %v1699
    %v1748 = vpack.c.b16 %v1708, %v1704
    %v1749 = vpack.c.b16 %v1709, %v1705
    %v1750 = vpack.c.b16 %v1710, %v1706
    %v1751 = vpack.c.b16 %v1711, %v1707
    %v1752 = vpack.c.b16 %v1716, %v1712
    %v1753 = vpack.c.b16 %v1717, %v1713
    %v1754 = vpack.c.b16 %v1718, %v1714
    %v1755 = vpack.c.b16 %v1719, %v1715
    %v1756 = vpack.c.b16 %v1724, %v1720
    %v1757 = vpack.c.b16 %v1725, %v1721
    %v1758 = vpack.c.b16 %v1726, %v1722
    %v1759 = vpack.c.b16 %v1727, %v1723
    %1792 = vmatpush.bf16.msra.mxu0 %v1756
    %1793 = vmatpush.bf16.msra.mxu0 %v1752
    %1794 = vmatpush.bf16.msra.mxu0 %v1748
    %1795 = vmatpush.bf16.msra.mxu0 %v1744
    %1796 = vmatpush.bf16.msra.mxu0 %v1740
    %1797 = vmatpush.bf16.msra.mxu0 %v1736
    %1798 = vmatpush.bf16.msra.mxu0 %v1732
    %1799 = vmatpush.bf16.msra.mxu0 %v1728
    %1800 = vmatmul.bf16.gmra.mxu0 %v470
    %v1801 = vpop.f32.mrf.mxu0
    %v1802 = vadd.f32 %v1628, %v1801
    %v1803 = vpop.f32.mrf.mxu0
    %1804 = vdwg.mxu0
    %1805 = vmatpush.bf16.msra.mxu0 %v1757
    %1806 = vmatpush.bf16.msra.mxu0 %v1753
    %1807 = vmatpush.bf16.msra.mxu0 %v1749
    %1808 = vmatpush.bf16.msra.mxu0 %v1745
    %1809 = vmatpush.bf16.msra.mxu0 %v1741
    %1810 = vmatpush.bf16.msra.mxu0 %v1737
    %1811 = vmatpush.bf16.msra.mxu0 %v1733
    %1812 = vmatpush.bf16.msra.mxu0 %v1729
    %1813 = vmatmul.bf16.gmra.mxu0 %v470
    %v1814 = vpop.f32.mrf.mxu0
    %v1815 = vadd.f32 %v1629, %v1814
    %v1816 = vpop.f32.mrf.mxu0
    %1817 = vdwg.mxu0
    %1818 = vmatpush.bf16.msra.mxu0 %v1758
    %1819 = vmatpush.bf16.msra.mxu0 %v1754
    %1820 = vmatpush.bf16.msra.mxu0 %v1750
    %1821 = vmatpush.bf16.msra.mxu0 %v1746
    %1822 = vmatpush.bf16.msra.mxu0 %v1742
    %1823 = vmatpush.bf16.msra.mxu0 %v1738
    %1824 = vmatpush.bf16.msra.mxu0 %v1734
    %1825 = vmatpush.bf16.msra.mxu0 %v1730
    %1826 = vmatmul.bf16.gmra.mxu0 %v470
    %v1827 = vpop.f32.mrf.mxu0
    %v1828 = vadd.f32 %v1630, %v1827
    %v1829 = vpop.f32.mrf.mxu0
    %1830 = vdwg.mxu0
    %1831 = vmatpush.bf16.msra.mxu0 %v1759
    %1832 = vmatpush.bf16.msra.mxu0 %v1755
    %1833 = vmatpush.bf16.msra.mxu0 %v1751
    %1834 = vmatpush.bf16.msra.mxu0 %v1747
    %1835 = vmatpush.bf16.msra.mxu0 %v1743
    %1836 = vmatpush.bf16.msra.mxu0 %v1739
    %1837 = vmatpush.bf16.msra.mxu0 %v1735
    %1838 = vmatpush.bf16.msra.mxu0 %v1731
    %1839 = vmatmul.bf16.gmra.mxu0 %v470
    %v1840 = vpop.f32.mrf.mxu0
    %v1841 = vadd.f32 %v1631, %v1840
    %v1842 = vpop.f32.mrf.mxu0
    %1843 = vdwg.mxu0
    %s1844 = scalar_lea.vmem [#allocation14], 512
    %v1845 = vld [vmem:[%s1844] sm:$0xff]
    %v1846 = vld [vmem:[%s1844 + $0x8] sm:$0xff]
    %v1847 = vld [vmem:[%s1844 + $0x10] sm:$0xff]
    %v1848 = vld [vmem:[%s1844 + $0x18] sm:$0xff]
    %v1849 = vld [vmem:[%s1844 + $0x20] sm:$0xff]
    %v1850 = vld [vmem:[%s1844 + $0x28] sm:$0xff]
    %v1851 = vld [vmem:[%s1844 + $0x30] sm:$0xff]
    %v1852 = vld [vmem:[%s1844 + $0x38] sm:$0xff]
    %v1853 = vld [vmem:[%s1844 + $0x40] sm:$0xff]
    %v1854 = vld [vmem:[%s1844 + $0x48] sm:$0xff]
    %v1855 = vld [vmem:[%s1844 + $0x50] sm:$0xff]
    %v1856 = vld [vmem:[%s1844 + $0x58] sm:$0xff]
    %v1857 = vld [vmem:[%s1844 + $0x60] sm:$0xff]
    %v1858 = vld [vmem:[%s1844 + $0x68] sm:$0xff]
    %v1859 = vld [vmem:[%s1844 + $0x70] sm:$0xff]
    %v1860 = vld [vmem:[%s1844 + $0x78] sm:$0xff]
    %v1861 = vld [vmem:[%s1844 + $0x80] sm:$0xff]
    %v1862 = vld [vmem:[%s1844 + $0x88] sm:$0xff]
    %v1863 = vld [vmem:[%s1844 + $0x90] sm:$0xff]
    %v1864 = vld [vmem:[%s1844 + $0x98] sm:$0xff]
    %v1865 = vld [vmem:[%s1844 + $0xa0] sm:$0xff]
    %v1866 = vld [vmem:[%s1844 + $0xa8] sm:$0xff]
    %v1867 = vld [vmem:[%s1844 + $0xb0] sm:$0xff]
    %v1868 = vld [vmem:[%s1844 + $0xb8] sm:$0xff]
    %v1869 = vld [vmem:[%s1844 + $0xc0] sm:$0xff]
    %v1870 = vld [vmem:[%s1844 + $0xc8] sm:$0xff]
    %v1871 = vld [vmem:[%s1844 + $0xd0] sm:$0xff]
    %v1872 = vld [vmem:[%s1844 + $0xd8] sm:$0xff]
    %v1873 = vld [vmem:[%s1844 + $0xe0] sm:$0xff]
    %v1874 = vld [vmem:[%s1844 + $0xe8] sm:$0xff]
    %v1875 = vld [vmem:[%s1844 + $0xf0] sm:$0xff]
    %v1876 = vld [vmem:[%s1844 + $0xf8] sm:$0xff]
    %v1877 = vperm.slane %v475, 2
    %v1878 = vperm.slane %v475, 6
    %v1879 = vperm.slane %v476, 2
    %v1880 = vperm.slane %v476, 6
    %v1885 = vperm.slane %v1877, 2
    %v1886 = vperm.slane %v1878, 2
    %v1887 = vperm.slane %v1879, 2
    %v1888 = vperm.slane %v1880, 2
    %v1921 = vunpack.c.l.b16 %v1845
    %v1922 = vunpack.c.h.b16 %v1845
    %v1923 = vunpack.c.l.b16 %v1846
    %v1924 = vunpack.c.h.b16 %v1846
    %v1925 = vunpack.c.l.b16 %v1847
    %v1926 = vunpack.c.h.b16 %v1847
    %v1927 = vunpack.c.l.b16 %v1848
    %v1928 = vunpack.c.h.b16 %v1848
    %v1929 = vunpack.c.l.b16 %v1849
    %v1930 = vunpack.c.h.b16 %v1849
    %v1931 = vunpack.c.l.b16 %v1850
    %v1932 = vunpack.c.h.b16 %v1850
    %v1933 = vunpack.c.l.b16 %v1851
    %v1934 = vunpack.c.h.b16 %v1851
    %v1935 = vunpack.c.l.b16 %v1852
    %v1936 = vunpack.c.h.b16 %v1852
    %v1937 = vunpack.c.l.b16 %v1853
    %v1938 = vunpack.c.h.b16 %v1853
    %v1939 = vunpack.c.l.b16 %v1854
    %v1940 = vunpack.c.h.b16 %v1854
    %v1941 = vunpack.c.l.b16 %v1855
    %v1942 = vunpack.c.h.b16 %v1855
    %v1943 = vunpack.c.l.b16 %v1856
    %v1944 = vunpack.c.h.b16 %v1856
    %v1945 = vunpack.c.l.b16 %v1857
    %v1946 = vunpack.c.h.b16 %v1857
    %v1947 = vunpack.c.l.b16 %v1858
    %v1948 = vunpack.c.h.b16 %v1858
    %v1949 = vunpack.c.l.b16 %v1859
    %v1950 = vunpack.c.h.b16 %v1859
    %v1951 = vunpack.c.l.b16 %v1860
    %v1952 = vunpack.c.h.b16 %v1860
    %v1953 = vunpack.c.l.b16 %v1861
    %v1954 = vunpack.c.h.b16 %v1861
    %v1955 = vunpack.c.l.b16 %v1862
    %v1956 = vunpack.c.h.b16 %v1862
    %v1957 = vunpack.c.l.b16 %v1863
    %v1958 = vunpack.c.h.b16 %v1863
    %v1959 = vunpack.c.l.b16 %v1864
    %v1960 = vunpack.c.h.b16 %v1864
    %v1961 = vunpack.c.l.b16 %v1865
    %v1962 = vunpack.c.h.b16 %v1865
    %v1963 = vunpack.c.l.b16 %v1866
    %v1964 = vunpack.c.h.b16 %v1866
    %v1965 = vunpack.c.l.b16 %v1867
    %v1966 = vunpack.c.h.b16 %v1867
    %v1967 = vunpack.c.l.b16 %v1868
    %v1968 = vunpack.c.h.b16 %v1868
    %v1969 = vunpack.c.l.b16 %v1869
    %v1970 = vunpack.c.h.b16 %v1869
    %v1971 = vunpack.c.l.b16 %v1870
    %v1972 = vunpack.c.h.b16 %v1870
    %v1973 = vunpack.c.l.b16 %v1871
    %v1974 = vunpack.c.h.b16 %v1871
    %v1975 = vunpack.c.l.b16 %v1872
    %v1976 = vunpack.c.h.b16 %v1872
    %v1977 = vunpack.c.l.b16 %v1873
    %v1978 = vunpack.c.h.b16 %v1873
    %v1979 = vunpack.c.l.b16 %v1874
    %v1980 = vunpack.c.h.b16 %v1874
    %v1981 = vunpack.c.l.b16 %v1875
    %v1982 = vunpack.c.h.b16 %v1875
    %v1983 = vunpack.c.l.b16 %v1876
    %v1984 = vunpack.c.h.b16 %v1876
    %v1985 = vpack.c.b16 %v1925, %v1921
    %v1986 = vpack.c.b16 %v1926, %v1922
    %v1987 = vpack.c.b16 %v1927, %v1923
    %v1988 = vpack.c.b16 %v1928, %v1924
    %v1989 = vpack.c.b16 %v1933, %v1929
    %v1990 = vpack.c.b16 %v1934, %v1930
    %v1991 = vpack.c.b16 %v1935, %v1931
    %v1992 = vpack.c.b16 %v1936, %v1932
    %v1993 = vpack.c.b16 %v1941, %v1937
    %v1994 = vpack.c.b16 %v1942, %v1938
    %v1995 = vpack.c.b16 %v1943, %v1939
    %v1996 = vpack.c.b16 %v1944, %v1940
    %v1997 = vpack.c.b16 %v1949, %v1945
    %v1998 = vpack.c.b16 %v1950, %v1946
    %v1999 = vpack.c.b16 %v1951, %v1947
    %v2000 = vpack.c.b16 %v1952, %v1948
    %v2001 = vpack.c.b16 %v1957, %v1953
    %v2002 = vpack.c.b16 %v1958, %v1954
    %v2003 = vpack.c.b16 %v1959, %v1955
    %v2004 = vpack.c.b16 %v1960, %v1956
    %v2005 = vpack.c.b16 %v1965, %v1961
    %v2006 = vpack.c.b16 %v1966, %v1962
    %v2007 = vpack.c.b16 %v1967, %v1963
    %v2008 = vpack.c.b16 %v1968, %v1964
    %v2009 = vpack.c.b16 %v1973, %v1969
    %v2010 = vpack.c.b16 %v1974, %v1970
    %v2011 = vpack.c.b16 %v1975, %v1971
    %v2012 = vpack.c.b16 %v1976, %v1972
    %v2013 = vpack.c.b16 %v1981, %v1977
    %v2014 = vpack.c.b16 %v1982, %v1978
    %v2015 = vpack.c.b16 %v1983, %v1979
    %v2016 = vpack.c.b16 %v1984, %v1980
    %2049 = vmatpush.bf16.msra.mxu0 %v2013
    %2050 = vmatpush.bf16.msra.mxu0 %v2009
    %2051 = vmatpush.bf16.msra.mxu0 %v2005
    %2052 = vmatpush.bf16.msra.mxu0 %v2001
    %2053 = vmatpush.bf16.msra.mxu0 %v1997
    %2054 = vmatpush.bf16.msra.mxu0 %v1993
    %2055 = vmatpush.bf16.msra.mxu0 %v1989
    %2056 = vmatpush.bf16.msra.mxu0 %v1985
    %2057 = vmatmul.bf16.gmra.mxu0 %v472
    %v2058 = vpop.f32.mrf.mxu0
    %v2059 = vadd.f32 %v1885, %v2058
    %v2060 = vpop.f32.mrf.mxu0
    %2061 = vdwg.mxu0
    %2062 = vmatpush.bf16.msra.mxu0 %v2014
    %2063 = vmatpush.bf16.msra.mxu0 %v2010
    %2064 = vmatpush.bf16.msra.mxu0 %v2006
    %2065 = vmatpush.bf16.msra.mxu0 %v2002
    %2066 = vmatpush.bf16.msra.mxu0 %v1998
    %2067 = vmatpush.bf16.msra.mxu0 %v1994
    %2068 = vmatpush.bf16.msra.mxu0 %v1990
    %2069 = vmatpush.bf16.msra.mxu0 %v1986
    %2070 = vmatmul.bf16.gmra.mxu0 %v472
    %v2071 = vpop.f32.mrf.mxu0
    %v2072 = vadd.f32 %v1886, %v2071
    %v2073 = vpop.f32.mrf.mxu0
    %2074 = vdwg.mxu0
    %2075 = vmatpush.bf16.msra.mxu0 %v2015
    %2076 = vmatpush.bf16.msra.mxu0 %v2011
    %2077 = vmatpush.bf16.msra.mxu0 %v2007
    %2078 = vmatpush.bf16.msra.mxu0 %v2003
    %2079 = vmatpush.bf16.msra.mxu0 %v1999
    %2080 = vmatpush.bf16.msra.mxu0 %v1995
    %2081 = vmatpush.bf16.msra.mxu0 %v1991
    %2082 = vmatpush.bf16.msra.mxu0 %v1987
    %2083 = vmatmul.bf16.gmra.mxu0 %v472
    %v2084 = vpop.f32.mrf.mxu0
    %v2085 = vadd.f32 %v1887, %v2084
    %v2086 = vpop.f32.mrf.mxu0
    %2087 = vdwg.mxu0
    %2088 = vmatpush.bf16.msra.mxu0 %v2016
    %2089 = vmatpush.bf16.msra.mxu0 %v2012
    %2090 = vmatpush.bf16.msra.mxu0 %v2008
    %2091 = vmatpush.bf16.msra.mxu0 %v2004
    %2092 = vmatpush.bf16.msra.mxu0 %v2000
    %2093 = vmatpush.bf16.msra.mxu0 %v1996
    %2094 = vmatpush.bf16.msra.mxu0 %v1992
    %2095 = vmatpush.bf16.msra.mxu0 %v1988
    %2096 = vmatmul.bf16.gmra.mxu0 %v472
    %v2097 = vpop.f32.mrf.mxu0
    %v2098 = vadd.f32 %v1888, %v2097
    %v2099 = vpop.f32.mrf.mxu0
    %2100 = vdwg.mxu0
    %v2101 = vmul.f32 %v1802, %v2059
    %v2102 = vmul.f32 %v1815, %v2072
    %v2103 = vmul.f32 %v1828, %v2085
    %v2104 = vmul.f32 %v1841, %v2098
    %v2105 = vadd.f32 %v2101, %v2102
    %v2106 = vadd.f32 %v2105, %v2103
    %v2107 = vadd.f32 %v2106, %v2104
    %v2108 = vand.u32 2147483647, %v2107
    %v2109 = vmax.f32 %v2108, 1e-30
    %v2110 = vrsqrt.pop %v2109
    %v2111 = vmul.f32 %v2110, %v2109
    %v2112 = vmul.f32 %v2111, %v2110
    %v2113 = vmul.f32 0.5, %v2112
    %v2114 = vsub.f32 1.5, %v2113
    %v2115 = vmul.f32 %v2110, %v2114
    %vm2116 = vweird.f32 %v2109
    %vm2117 = vweird.f32 %v2110
    %vm2118 = vmor %vm2116, %vm2117
    %v2119 = vsel %vm2118, %v2110, %v2115
    %v2120 = vmul.f32 %v2107, %v2119
    %v2121 = vmul.f32 %v2120, %v2120
    %2122 = vadd.xlane.f32.xlu0 %v2121
    %v2123 = vpop.xlane.xlu0 %2122
    %v2124 = vmax.f32 %v2123, 1e-24
    %v2125 = vrsqrt.pop %v2124
    %v2126 = vmul.f32 %v2125, %v2124
    %v2127 = vmul.f32 %v2126, %v2125
    %v2128 = vmul.f32 0.5, %v2127
    %v2129 = vsub.f32 1.5, %v2128
    %v2130 = vmul.f32 %v2125, %v2129
    %vm2131 = vweird.f32 %v2124
    %vm2132 = vweird.f32 %v2125
    %vm2133 = vmor %vm2131, %vm2132
    %v2134 = vsel %vm2133, %v2125, %v2130
    %v2135 = vmul.f32 %v2120, %v2134
    %v2136 = vpack.c.bf16 %v2135, %v2135
    %s2137 = scalar_lea.vmem [#allocation11], 768
    %v2138 = vld [vmem:[%s2137] sm:$0xff]
    %v2139 = vld [vmem:[%s2137 + $0x8] sm:$0xff]
    %v2140 = vld [vmem:[%s2137 + $0x10] sm:$0xff]
    %v2141 = vld [vmem:[%s2137 + $0x18] sm:$0xff]
    %v2142 = vld [vmem:[%s2137 + $0x20] sm:$0xff]
    %v2143 = vld [vmem:[%s2137 + $0x28] sm:$0xff]
    %v2144 = vld [vmem:[%s2137 + $0x30] sm:$0xff]
    %v2145 = vld [vmem:[%s2137 + $0x38] sm:$0xff]
    %v2146 = vld [vmem:[%s2137 + $0x40] sm:$0xff]
    %v2147 = vld [vmem:[%s2137 + $0x48] sm:$0xff]
    %v2148 = vld [vmem:[%s2137 + $0x50] sm:$0xff]
    %v2149 = vld [vmem:[%s2137 + $0x58] sm:$0xff]
    %v2150 = vld [vmem:[%s2137 + $0x60] sm:$0xff]
    %v2151 = vld [vmem:[%s2137 + $0x68] sm:$0xff]
    %v2152 = vld [vmem:[%s2137 + $0x70] sm:$0xff]
    %v2153 = vld [vmem:[%s2137 + $0x78] sm:$0xff]
    %v2154 = vld [vmem:[%s2137 + $0x80] sm:$0xff]
    %v2155 = vld [vmem:[%s2137 + $0x88] sm:$0xff]
    %v2156 = vld [vmem:[%s2137 + $0x90] sm:$0xff]
    %v2157 = vld [vmem:[%s2137 + $0x98] sm:$0xff]
    %v2158 = vld [vmem:[%s2137 + $0xa0] sm:$0xff]
    %v2159 = vld [vmem:[%s2137 + $0xa8] sm:$0xff]
    %v2160 = vld [vmem:[%s2137 + $0xb0] sm:$0xff]
    %v2161 = vld [vmem:[%s2137 + $0xb8] sm:$0xff]
    %v2162 = vld [vmem:[%s2137 + $0xc0] sm:$0xff]
    %v2163 = vld [vmem:[%s2137 + $0xc8] sm:$0xff]
    %v2164 = vld [vmem:[%s2137 + $0xd0] sm:$0xff]
    %v2165 = vld [vmem:[%s2137 + $0xd8] sm:$0xff]
    %v2166 = vld [vmem:[%s2137 + $0xe0] sm:$0xff]
    %v2167 = vld [vmem:[%s2137 + $0xe8] sm:$0xff]
    %v2168 = vld [vmem:[%s2137 + $0xf0] sm:$0xff]
    %v2169 = vld [vmem:[%s2137 + $0xf8] sm:$0xff]
    %v2170 = vperm.slane %v473, 3
    %v2171 = vperm.slane %v473, 7
    %v2172 = vperm.slane %v474, 3
    %v2173 = vperm.slane %v474, 7
    %v2178 = vperm.slane %v2170, 3
    %v2179 = vperm.slane %v2171, 3
    %v2180 = vperm.slane %v2172, 3
    %v2181 = vperm.slane %v2173, 3
    %v2183 = vunpack.c.h.b16 %v470
    %v2184 = vpack.c.b16 %v2183, %v2183
    %v2218 = vunpack.c.l.b16 %v2138
    %v2219 = vunpack.c.h.b16 %v2138
    %v2220 = vunpack.c.l.b16 %v2139
    %v2221 = vunpack.c.h.b16 %v2139
    %v2222 = vunpack.c.l.b16 %v2140
    %v2223 = vunpack.c.h.b16 %v2140
    %v2224 = vunpack.c.l.b16 %v2141
    %v2225 = vunpack.c.h.b16 %v2141
    %v2226 = vunpack.c.l.b16 %v2142
    %v2227 = vunpack.c.h.b16 %v2142
    %v2228 = vunpack.c.l.b16 %v2143
    %v2229 = vunpack.c.h.b16 %v2143
    %v2230 = vunpack.c.l.b16 %v2144
    %v2231 = vunpack.c.h.b16 %v2144
    %v2232 = vunpack.c.l.b16 %v2145
    %v2233 = vunpack.c.h.b16 %v2145
    %v2234 = vunpack.c.l.b16 %v2146
    %v2235 = vunpack.c.h.b16 %v2146
    %v2236 = vunpack.c.l.b16 %v2147
    %v2237 = vunpack.c.h.b16 %v2147
    %v2238 = vunpack.c.l.b16 %v2148
    %v2239 = vunpack.c.h.b16 %v2148
    %v2240 = vunpack.c.l.b16 %v2149
    %v2241 = vunpack.c.h.b16 %v2149
    %v2242 = vunpack.c.l.b16 %v2150
    %v2243 = vunpack.c.h.b16 %v2150
    %v2244 = vunpack.c.l.b16 %v2151
    %v2245 = vunpack.c.h.b16 %v2151
    %v2246 = vunpack.c.l.b16 %v2152
    %v2247 = vunpack.c.h.b16 %v2152
    %v2248 = vunpack.c.l.b16 %v2153
    %v2249 = vunpack.c.h.b16 %v2153
    %v2250 = vunpack.c.l.b16 %v2154
    %v2251 = vunpack.c.h.b16 %v2154
    %v2252 = vunpack.c.l.b16 %v2155
    %v2253 = vunpack.c.h.b16 %v2155
    %v2254 = vunpack.c.l.b16 %v2156
    %v2255 = vunpack.c.h.b16 %v2156
    %v2256 = vunpack.c.l.b16 %v2157
    %v2257 = vunpack.c.h.b16 %v2157
    %v2258 = vunpack.c.l.b16 %v2158
    %v2259 = vunpack.c.h.b16 %v2158
    %v2260 = vunpack.c.l.b16 %v2159
    %v2261 = vunpack.c.h.b16 %v2159
    %v2262 = vunpack.c.l.b16 %v2160
    %v2263 = vunpack.c.h.b16 %v2160
    %v2264 = vunpack.c.l.b16 %v2161
    %v2265 = vunpack.c.h.b16 %v2161
    %v2266 = vunpack.c.l.b16 %v2162
    %v2267 = vunpack.c.h.b16 %v2162
    %v2268 = vunpack.c.l.b16 %v2163
    %v2269 = vunpack.c.h.b16 %v2163
    %v2270 = vunpack.c.l.b16 %v2164
    %v2271 = vunpack.c.h.b16 %v2164
    %v2272 = vunpack.c.l.b16 %v2165
    %v2273 = vunpack.c.h.b16 %v2165
    %v2274 = vunpack.c.l.b16 %v2166
    %v2275 = vunpack.c.h.b16 %v2166
    %v2276 = vunpack.c.l.b16 %v2167
    %v2277 = vunpack.c.h.b16 %v2167
    %v2278 = vunpack.c.l.b16 %v2168
    %v2279 = vunpack.c.h.b16 %v2168
    %v2280 = vunpack.c.l.b16 %v2169
    %v2281 = vunpack.c.h.b16 %v2169
    %v2282 = vpack.c.b16 %v2222, %v2218
    %v2283 = vpack.c.b16 %v2223, %v2219
    %v2284 = vpack.c.b16 %v2224, %v2220
    %v2285 = vpack.c.b16 %v2225, %v2221
    %v2286 = vpack.c.b16 %v2230, %v2226
    %v2287 = vpack.c.b16 %v2231, %v2227
    %v2288 = vpack.c.b16 %v2232, %v2228
    %v2289 = vpack.c.b16 %v2233, %v2229
    %v2290 = vpack.c.b16 %v2238, %v2234
    %v2291 = vpack.c.b16 %v2239, %v2235
    %v2292 = vpack.c.b16 %v2240, %v2236
    %v2293 = vpack.c.b16 %v2241, %v2237
    %v2294 = vpack.c.b16 %v2246, %v2242
    %v2295 = vpack.c.b16 %v2247, %v2243
    %v2296 = vpack.c.b16 %v2248, %v2244
    %v2297 = vpack.c.b16 %v2249, %v2245
    %v2298 = vpack.c.b16 %v2254, %v2250
    %v2299 = vpack.c.b16 %v2255, %v2251
    %v2300 = vpack.c.b16 %v2256, %v2252
    %v2301 = vpack.c.b16 %v2257, %v2253
    %v2302 = vpack.c.b16 %v2262, %v2258
    %v2303 = vpack.c.b16 %v2263, %v2259
    %v2304 = vpack.c.b16 %v2264, %v2260
    %v2305 = vpack.c.b16 %v2265, %v2261
    %v2306 = vpack.c.b16 %v2270, %v2266
    %v2307 = vpack.c.b16 %v2271, %v2267
    %v2308 = vpack.c.b16 %v2272, %v2268
    %v2309 = vpack.c.b16 %v2273, %v2269
    %v2310 = vpack.c.b16 %v2278, %v2274
    %v2311 = vpack.c.b16 %v2279, %v2275
    %v2312 = vpack.c.b16 %v2280, %v2276
    %v2313 = vpack.c.b16 %v2281, %v2277
    %2346 = vmatpush.bf16.msra.mxu0 %v2310
    %2347 = vmatpush.bf16.msra.mxu0 %v2306
    %2348 = vmatpush.bf16.msra.mxu0 %v2302
    %2349 = vmatpush.bf16.msra.mxu0 %v2298
    %2350 = vmatpush.bf16.msra.mxu0 %v2294
    %2351 = vmatpush.bf16.msra.mxu0 %v2290
    %2352 = vmatpush.bf16.msra.mxu0 %v2286
    %2353 = vmatpush.bf16.msra.mxu0 %v2282
    %2354 = vmatmul.bf16.gmra.mxu0 %v2184
    %v2355 = vpop.f32.mrf.mxu0
    %v2356 = vadd.f32 %v2178, %v2355
    %v2357 = vpop.f32.mrf.mxu0
    %2358 = vdwg.mxu0
    %2359 = vmatpush.bf16.msra.mxu0 %v2311
    %2360 = vmatpush.bf16.msra.mxu0 %v2307
    %2361 = vmatpush.bf16.msra.mxu0 %v2303
    %2362 = vmatpush.bf16.msra.mxu0 %v2299
    %2363 = vmatpush.bf16.msra.mxu0 %v2295
    %2364 = vmatpush.bf16.msra.mxu0 %v2291
    %2365 = vmatpush.bf16.msra.mxu0 %v2287
    %2366 = vmatpush.bf16.msra.mxu0 %v2283
    %2367 = vmatmul.bf16.gmra.mxu0 %v2184
    %v2368 = vpop.f32.mrf.mxu0
    %v2369 = vadd.f32 %v2179, %v2368
    %v2370 = vpop.f32.mrf.mxu0
    %2371 = vdwg.mxu0
    %2372 = vmatpush.bf16.msra.mxu0 %v2312
    %2373 = vmatpush.bf16.msra.mxu0 %v2308
    %2374 = vmatpush.bf16.msra.mxu0 %v2304
    %2375 = vmatpush.bf16.msra.mxu0 %v2300
    %2376 = vmatpush.bf16.msra.mxu0 %v2296
    %2377 = vmatpush.bf16.msra.mxu0 %v2292
    %2378 = vmatpush.bf16.msra.mxu0 %v2288
    %2379 = vmatpush.bf16.msra.mxu0 %v2284
    %2380 = vmatmul.bf16.gmra.mxu0 %v2184
    %v2381 = vpop.f32.mrf.mxu0
    %v2382 = vadd.f32 %v2180, %v2381
    %v2383 = vpop.f32.mrf.mxu0
    %2384 = vdwg.mxu0
    %2385 = vmatpush.bf16.msra.mxu0 %v2313
    %2386 = vmatpush.bf16.msra.mxu0 %v2309
    %2387 = vmatpush.bf16.msra.mxu0 %v2305
    %2388 = vmatpush.bf16.msra.mxu0 %v2301
    %2389 = vmatpush.bf16.msra.mxu0 %v2297
    %2390 = vmatpush.bf16.msra.mxu0 %v2293
    %2391 = vmatpush.bf16.msra.mxu0 %v2289
    %2392 = vmatpush.bf16.msra.mxu0 %v2285
    %2393 = vmatmul.bf16.gmra.mxu0 %v2184
    %v2394 = vpop.f32.mrf.mxu0
    %v2395 = vadd.f32 %v2181, %v2394
    %v2396 = vpop.f32.mrf.mxu0
    %2397 = vdwg.mxu0
    %s2398 = scalar_lea.vmem [#allocation14], 768
    %v2399 = vld [vmem:[%s2398] sm:$0xff]
    %v2400 = vld [vmem:[%s2398 + $0x8] sm:$0xff]
    %v2401 = vld [vmem:[%s2398 + $0x10] sm:$0xff]
    %v2402 = vld [vmem:[%s2398 + $0x18] sm:$0xff]
    %v2403 = vld [vmem:[%s2398 + $0x20] sm:$0xff]
    %v2404 = vld [vmem:[%s2398 + $0x28] sm:$0xff]
    %v2405 = vld [vmem:[%s2398 + $0x30] sm:$0xff]
    %v2406 = vld [vmem:[%s2398 + $0x38] sm:$0xff]
    %v2407 = vld [vmem:[%s2398 + $0x40] sm:$0xff]
    %v2408 = vld [vmem:[%s2398 + $0x48] sm:$0xff]
    %v2409 = vld [vmem:[%s2398 + $0x50] sm:$0xff]
    %v2410 = vld [vmem:[%s2398 + $0x58] sm:$0xff]
    %v2411 = vld [vmem:[%s2398 + $0x60] sm:$0xff]
    %v2412 = vld [vmem:[%s2398 + $0x68] sm:$0xff]
    %v2413 = vld [vmem:[%s2398 + $0x70] sm:$0xff]
    %v2414 = vld [vmem:[%s2398 + $0x78] sm:$0xff]
    %v2415 = vld [vmem:[%s2398 + $0x80] sm:$0xff]
    %v2416 = vld [vmem:[%s2398 + $0x88] sm:$0xff]
    %v2417 = vld [vmem:[%s2398 + $0x90] sm:$0xff]
    %v2418 = vld [vmem:[%s2398 + $0x98] sm:$0xff]
    %v2419 = vld [vmem:[%s2398 + $0xa0] sm:$0xff]
    %v2420 = vld [vmem:[%s2398 + $0xa8] sm:$0xff]
    %v2421 = vld [vmem:[%s2398 + $0xb0] sm:$0xff]
    %v2422 = vld [vmem:[%s2398 + $0xb8] sm:$0xff]
    %v2423 = vld [vmem:[%s2398 + $0xc0] sm:$0xff]
    %v2424 = vld [vmem:[%s2398 + $0xc8] sm:$0xff]
    %v2425 = vld [vmem:[%s2398 + $0xd0] sm:$0xff]
    %v2426 = vld [vmem:[%s2398 + $0xd8] sm:$0xff]
    %v2427 = vld [vmem:[%s2398 + $0xe0] sm:$0xff]
    %v2428 = vld [vmem:[%s2398 + $0xe8] sm:$0xff]
    %v2429 = vld [vmem:[%s2398 + $0xf0] sm:$0xff]
    %v2430 = vld [vmem:[%s2398 + $0xf8] sm:$0xff]
    %v2431 = vperm.slane %v475, 3
    %v2432 = vperm.slane %v475, 7
    %v2433 = vperm.slane %v476, 3
    %v2434 = vperm.slane %v476, 7
    %v2439 = vperm.slane %v2431, 3
    %v2440 = vperm.slane %v2432, 3
    %v2441 = vperm.slane %v2433, 3
    %v2442 = vperm.slane %v2434, 3
    %v2444 = vunpack.c.h.b16 %v472
    %v2445 = vpack.c.b16 %v2444, %v2444
    %v2479 = vunpack.c.l.b16 %v2399
    %v2480 = vunpack.c.h.b16 %v2399
    %v2481 = vunpack.c.l.b16 %v2400
    %v2482 = vunpack.c.h.b16 %v2400
    %v2483 = vunpack.c.l.b16 %v2401
    %v2484 = vunpack.c.h.b16 %v2401
    %v2485 = vunpack.c.l.b16 %v2402
    %v2486 = vunpack.c.h.b16 %v2402
    %v2487 = vunpack.c.l.b16 %v2403
    %v2488 = vunpack.c.h.b16 %v2403
    %v2489 = vunpack.c.l.b16 %v2404
    %v2490 = vunpack.c.h.b16 %v2404
    %v2491 = vunpack.c.l.b16 %v2405
    %v2492 = vunpack.c.h.b16 %v2405
    %v2493 = vunpack.c.l.b16 %v2406
    %v2494 = vunpack.c.h.b16 %v2406
    %v2495 = vunpack.c.l.b16 %v2407
    %v2496 = vunpack.c.h.b16 %v2407
    %v2497 = vunpack.c.l.b16 %v2408
    %v2498 = vunpack.c.h.b16 %v2408
    %v2499 = vunpack.c.l.b16 %v2409
    %v2500 = vunpack.c.h.b16 %v2409
    %v2501 = vunpack.c.l.b16 %v2410
    %v2502 = vunpack.c.h.b16 %v2410
    %v2503 = vunpack.c.l.b16 %v2411
    %v2504 = vunpack.c.h.b16 %v2411
    %v2505 = vunpack.c.l.b16 %v2412
    %v2506 = vunpack.c.h.b16 %v2412
    %v2507 = vunpack.c.l.b16 %v2413
    %v2508 = vunpack.c.h.b16 %v2413
    %v2509 = vunpack.c.l.b16 %v2414
    %v2510 = vunpack.c.h.b16 %v2414
    %v2511 = vunpack.c.l.b16 %v2415
    %v2512 = vunpack.c.h.b16 %v2415
    %v2513 = vunpack.c.l.b16 %v2416
    %v2514 = vunpack.c.h.b16 %v2416
    %v2515 = vunpack.c.l.b16 %v2417
    %v2516 = vunpack.c.h.b16 %v2417
    %v2517 = vunpack.c.l.b16 %v2418
    %v2518 = vunpack.c.h.b16 %v2418
    %v2519 = vunpack.c.l.b16 %v2419
    %v2520 = vunpack.c.h.b16 %v2419
    %v2521 = vunpack.c.l.b16 %v2420
    %v2522 = vunpack.c.h.b16 %v2420
    %v2523 = vunpack.c.l.b16 %v2421
    %v2524 = vunpack.c.h.b16 %v2421
    %v2525 = vunpack.c.l.b16 %v2422
    %v2526 = vunpack.c.h.b16 %v2422
    %v2527 = vunpack.c.l.b16 %v2423
    %v2528 = vunpack.c.h.b16 %v2423
    %v2529 = vunpack.c.l.b16 %v2424
    %v2530 = vunpack.c.h.b16 %v2424
    %v2531 = vunpack.c.l.b16 %v2425
    %v2532 = vunpack.c.h.b16 %v2425
    %v2533 = vunpack.c.l.b16 %v2426
    %v2534 = vunpack.c.h.b16 %v2426
    %v2535 = vunpack.c.l.b16 %v2427
    %v2536 = vunpack.c.h.b16 %v2427
    %v2537 = vunpack.c.l.b16 %v2428
    %v2538 = vunpack.c.h.b16 %v2428
    %v2539 = vunpack.c.l.b16 %v2429
    %v2540 = vunpack.c.h.b16 %v2429
    %v2541 = vunpack.c.l.b16 %v2430
    %v2542 = vunpack.c.h.b16 %v2430
    %v2543 = vpack.c.b16 %v2483, %v2479
    %v2544 = vpack.c.b16 %v2484, %v2480
    %v2545 = vpack.c.b16 %v2485, %v2481
    %v2546 = vpack.c.b16 %v2486, %v2482
    %v2547 = vpack.c.b16 %v2491, %v2487
    %v2548 = vpack.c.b16 %v2492, %v2488
    %v2549 = vpack.c.b16 %v2493, %v2489
    %v2550 = vpack.c.b16 %v2494, %v2490
    %v2551 = vpack.c.b16 %v2499, %v2495
    %v2552 = vpack.c.b16 %v2500, %v2496
    %v2553 = vpack.c.b16 %v2501, %v2497
    %v2554 = vpack.c.b16 %v2502, %v2498
    %v2555 = vpack.c.b16 %v2507, %v2503
    %v2556 = vpack.c.b16 %v2508, %v2504
    %v2557 = vpack.c.b16 %v2509, %v2505
    %v2558 = vpack.c.b16 %v2510, %v2506
    %v2559 = vpack.c.b16 %v2515, %v2511
    %v2560 = vpack.c.b16 %v2516, %v2512
    %v2561 = vpack.c.b16 %v2517, %v2513
    %v2562 = vpack.c.b16 %v2518, %v2514
    %v2563 = vpack.c.b16 %v2523, %v2519
    %v2564 = vpack.c.b16 %v2524, %v2520
    %v2565 = vpack.c.b16 %v2525, %v2521
    %v2566 = vpack.c.b16 %v2526, %v2522
    %v2567 = vpack.c.b16 %v2531, %v2527
    %v2568 = vpack.c.b16 %v2532, %v2528
    %v2569 = vpack.c.b16 %v2533, %v2529
    %v2570 = vpack.c.b16 %v2534, %v2530
    %v2571 = vpack.c.b16 %v2539, %v2535
    %v2572 = vpack.c.b16 %v2540, %v2536
    %v2573 = vpack.c.b16 %v2541, %v2537
    %v2574 = vpack.c.b16 %v2542, %v2538
    %2607 = vmatpush.bf16.msra.mxu0 %v2571
    %2608 = vmatpush.bf16.msra.mxu0 %v2567
    %2609 = vmatpush.bf16.msra.mxu0 %v2563
    %2610 = vmatpush.bf16.msra.mxu0 %v2559
    %2611 = vmatpush.bf16.msra.mxu0 %v2555
    %2612 = vmatpush.bf16.msra.mxu0 %v2551
    %2613 = vmatpush.bf16.msra.mxu0 %v2547
    %2614 = vmatpush.bf16.msra.mxu0 %v2543
    %2615 = vmatmul.bf16.gmra.mxu0 %v2445
    %v2616 = vpop.f32.mrf.mxu0
    %v2617 = vadd.f32 %v2439, %v2616
    %v2618 = vpop.f32.mrf.mxu0
    %2619 = vdwg.mxu0
    %2620 = vmatpush.bf16.msra.mxu0 %v2572
    %2621 = vmatpush.bf16.msra.mxu0 %v2568
    %2622 = vmatpush.bf16.msra.mxu0 %v2564
    %2623 = vmatpush.bf16.msra.mxu0 %v2560
    %2624 = vmatpush.bf16.msra.mxu0 %v2556
    %2625 = vmatpush.bf16.msra.mxu0 %v2552
    %2626 = vmatpush.bf16.msra.mxu0 %v2548
    %2627 = vmatpush.bf16.msra.mxu0 %v2544
    %2628 = vmatmul.bf16.gmra.mxu0 %v2445
    %v2629 = vpop.f32.mrf.mxu0
    %v2630 = vadd.f32 %v2440, %v2629
    %v2631 = vpop.f32.mrf.mxu0
    %2632 = vdwg.mxu0
    %2633 = vmatpush.bf16.msra.mxu0 %v2573
    %2634 = vmatpush.bf16.msra.mxu0 %v2569
    %2635 = vmatpush.bf16.msra.mxu0 %v2565
    %2636 = vmatpush.bf16.msra.mxu0 %v2561
    %2637 = vmatpush.bf16.msra.mxu0 %v2557
    %2638 = vmatpush.bf16.msra.mxu0 %v2553
    %2639 = vmatpush.bf16.msra.mxu0 %v2549
    %2640 = vmatpush.bf16.msra.mxu0 %v2545
    %2641 = vmatmul.bf16.gmra.mxu0 %v2445
    %v2642 = vpop.f32.mrf.mxu0
    %v2643 = vadd.f32 %v2441, %v2642
    %v2644 = vpop.f32.mrf.mxu0
    %2645 = vdwg.mxu0
    %2646 = vmatpush.bf16.msra.mxu0 %v2574
    %2647 = vmatpush.bf16.msra.mxu0 %v2570
    %2648 = vmatpush.bf16.msra.mxu0 %v2566
    %2649 = vmatpush.bf16.msra.mxu0 %v2562
    %2650 = vmatpush.bf16.msra.mxu0 %v2558
    %2651 = vmatpush.bf16.msra.mxu0 %v2554
    %2652 = vmatpush.bf16.msra.mxu0 %v2550
    %2653 = vmatpush.bf16.msra.mxu0 %v2546
    %2654 = vmatmul.bf16.gmra.mxu0 %v2445
    %v2655 = vpop.f32.mrf.mxu0
    %v2656 = vadd.f32 %v2442, %v2655
    %v2657 = vpop.f32.mrf.mxu0
    %2658 = vdwg.mxu0
    %v2659 = vmul.f32 %v2356, %v2617
    %v2660 = vmul.f32 %v2369, %v2630
    %v2661 = vmul.f32 %v2382, %v2643
    %v2662 = vmul.f32 %v2395, %v2656
    %v2663 = vadd.f32 %v2659, %v2660
    %v2664 = vadd.f32 %v2663, %v2661
    %v2665 = vadd.f32 %v2664, %v2662
    %v2666 = vand.u32 2147483647, %v2665
    %v2667 = vmax.f32 %v2666, 1e-30
    %v2668 = vrsqrt.pop %v2667
    %v2669 = vmul.f32 %v2668, %v2667
    %v2670 = vmul.f32 %v2669, %v2668
    %v2671 = vmul.f32 0.5, %v2670
    %v2672 = vsub.f32 1.5, %v2671
    %v2673 = vmul.f32 %v2668, %v2672
    %vm2674 = vweird.f32 %v2667
    %vm2675 = vweird.f32 %v2668
    %vm2676 = vmor %vm2674, %vm2675
    %v2677 = vsel %vm2676, %v2668, %v2673
    %v2678 = vmul.f32 %v2665, %v2677
    %v2679 = vmul.f32 %v2678, %v2678
    %2680 = vadd.xlane.f32.xlu0 %v2679
    %v2681 = vpop.xlane.xlu0 %2680
    %v2682 = vmax.f32 %v2681, 1e-24
    %v2683 = vrsqrt.pop %v2682
    %v2684 = vmul.f32 %v2683, %v2682
    %v2685 = vmul.f32 %v2684, %v2683
    %v2686 = vmul.f32 0.5, %v2685
    %v2687 = vsub.f32 1.5, %v2686
    %v2688 = vmul.f32 %v2683, %v2687
    %vm2689 = vweird.f32 %v2682
    %vm2690 = vweird.f32 %v2683
    %vm2691 = vmor %vm2689, %vm2690
    %v2692 = vsel %vm2691, %v2683, %v2688
    %v2693 = vmul.f32 %v2678, %v2692
    %v2694 = vpack.c.bf16 %v2693, %v2693
    %v2695 = vunpack.c.l.b16 %v469
    %v2696 = vunpack.c.l.b16 %v470
    %v2697 = vpack.c.b16 %v2695, %v2695
    %v2698 = vpack.c.b16 %v2696, %v2696
    %v2701 = vld [vmem:[#allocation17] sm:$0xf]
    %v2702 = vld [vmem:[#allocation17 + $0x4] sm:$0xf]
    %v2703 = vld [vmem:[#allocation17 + $0x8] sm:$0xf]
    %v2704 = vld [vmem:[#allocation17 + $0xc] sm:$0xf]
    %v2705 = vld [vmem:[#allocation17 + $0x10] sm:$0xf]
    %v2706 = vld [vmem:[#allocation17 + $0x14] sm:$0xf]
    %v2707 = vld [vmem:[#allocation17 + $0x18] sm:$0xf]
    %v2708 = vld [vmem:[#allocation17 + $0x1c] sm:$0xf]
    %v2709 = vld [vmem:[#allocation17 + $0x20] sm:$0xf]
    %v2710 = vld [vmem:[#allocation17 + $0x24] sm:$0xf]
    %v2711 = vld [vmem:[#allocation17 + $0x28] sm:$0xf]
    %v2712 = vld [vmem:[#allocation17 + $0x2c] sm:$0xf]
    %v2713 = vld [vmem:[#allocation17 + $0x30] sm:$0xf]
    %v2714 = vld [vmem:[#allocation17 + $0x34] sm:$0xf]
    %v2715 = vld [vmem:[#allocation17 + $0x38] sm:$0xf]
    %v2716 = vld [vmem:[#allocation17 + $0x3c] sm:$0xf]
    %v2717 = vld [vmem:[#allocation17 + $0x40] sm:$0xf]
    %v2718 = vld [vmem:[#allocation17 + $0x44] sm:$0xf]
    %v2719 = vld [vmem:[#allocation17 + $0x48] sm:$0xf]
    %v2720 = vld [vmem:[#allocation17 + $0x4c] sm:$0xf]
    %v2721 = vld [vmem:[#allocation17 + $0x50] sm:$0xf]
    %v2722 = vld [vmem:[#allocation17 + $0x54] sm:$0xf]
    %v2723 = vld [vmem:[#allocation17 + $0x58] sm:$0xf]
    %v2724 = vld [vmem:[#allocation17 + $0x5c] sm:$0xf]
    %v2725 = vld [vmem:[#allocation17 + $0x60] sm:$0xf]
    %v2726 = vld [vmem:[#allocation17 + $0x64] sm:$0xf]
    %v2727 = vld [vmem:[#allocation17 + $0x68] sm:$0xf]
    %v2728 = vld [vmem:[#allocation17 + $0x6c] sm:$0xf]
    %v2729 = vld [vmem:[#allocation17 + $0x70] sm:$0xf]
    %v2730 = vld [vmem:[#allocation17 + $0x74] sm:$0xf]
    %v2731 = vld [vmem:[#allocation17 + $0x78] sm:$0xf]
    %v2732 = vld [vmem:[#allocation17 + $0x7c] sm:$0xf]
    %v2733 = vld [vmem:[#allocation17 + $0x80] sm:$0xf]
    %v2734 = vld [vmem:[#allocation17 + $0x84] sm:$0xf]
    %v2735 = vld [vmem:[#allocation17 + $0x88] sm:$0xf]
    %v2736 = vld [vmem:[#allocation17 + $0x8c] sm:$0xf]
    %v2737 = vld [vmem:[#allocation17 + $0x90] sm:$0xf]
    %v2738 = vld [vmem:[#allocation17 + $0x94] sm:$0xf]
    %v2739 = vld [vmem:[#allocation17 + $0x98] sm:$0xf]
    %v2740 = vld [vmem:[#allocation17 + $0x9c] sm:$0xf]
    %v2741 = vld [vmem:[#allocation17 + $0xa0] sm:$0xf]
    %v2742 = vld [vmem:[#allocation17 + $0xa4] sm:$0xf]
    %v2743 = vld [vmem:[#allocation17 + $0xa8] sm:$0xf]
    %v2744 = vld [vmem:[#allocation17 + $0xac] sm:$0xf]
    %v2745 = vld [vmem:[#allocation17 + $0xb0] sm:$0xf]
    %v2746 = vld [vmem:[#allocation17 + $0xb4] sm:$0xf]
    %v2747 = vld [vmem:[#allocation17 + $0xb8] sm:$0xf]
    %v2748 = vld [vmem:[#allocation17 + $0xbc] sm:$0xf]
    %v2749 = vld [vmem:[#allocation17 + $0xc0] sm:$0xf]
    %v2750 = vld [vmem:[#allocation17 + $0xc4] sm:$0xf]
    %v2751 = vld [vmem:[#allocation17 + $0xc8] sm:$0xf]
    %v2752 = vld [vmem:[#allocation17 + $0xcc] sm:$0xf]
    %v2753 = vld [vmem:[#allocation17 + $0xd0] sm:$0xf]
    %v2754 = vld [vmem:[#allocation17 + $0xd4] sm:$0xf]
    %v2755 = vld [vmem:[#allocation17 + $0xd8] sm:$0xf]
    %v2756 = vld [vmem:[#allocation17 + $0xdc] sm:$0xf]
    %v2757 = vld [vmem:[#allocation17 + $0xe0] sm:$0xf]
    %v2758 = vld [vmem:[#allocation17 + $0xe4] sm:$0xf]
    %v2759 = vld [vmem:[#allocation17 + $0xe8] sm:$0xf]
    %v2760 = vld [vmem:[#allocation17 + $0xec] sm:$0xf]
    %v2761 = vld [vmem:[#allocation17 + $0xf0] sm:$0xf]
    %v2762 = vld [vmem:[#allocation17 + $0xf4] sm:$0xf]
    %v2763 = vld [vmem:[#allocation17 + $0xf8] sm:$0xf]
    %v2764 = vld [vmem:[#allocation17 + $0xfc] sm:$0xf]
    %v2765 = vld [vmem:[#allocation17 + $0x100] sm:$0xf]
    %v2766 = vld [vmem:[#allocation17 + $0x104] sm:$0xf]
    %v2767 = vld [vmem:[#allocation17 + $0x108] sm:$0xf]
    %v2768 = vld [vmem:[#allocation17 + $0x10c] sm:$0xf]
    %v2769 = vld [vmem:[#allocation17 + $0x110] sm:$0xf]
    %v2770 = vld [vmem:[#allocation17 + $0x114] sm:$0xf]
    %v2771 = vld [vmem:[#allocation17 + $0x118] sm:$0xf]
    %v2772 = vld [vmem:[#allocation17 + $0x11c] sm:$0xf]
    %v2773 = vld [vmem:[#allocation17 + $0x120] sm:$0xf]
    %v2774 = vld [vmem:[#allocation17 + $0x124] sm:$0xf]
    %v2775 = vld [vmem:[#allocation17 + $0x128] sm:$0xf]
    %v2776 = vld [vmem:[#allocation17 + $0x12c] sm:$0xf]
    %v2777 = vld [vmem:[#allocation17 + $0x130] sm:$0xf]
    %v2778 = vld [vmem:[#allocation17 + $0x134] sm:$0xf]
    %v2779 = vld [vmem:[#allocation17 + $0x138] sm:$0xf]
    %v2780 = vld [vmem:[#allocation17 + $0x13c] sm:$0xf]
    %v2781 = vld [vmem:[#allocation17 + $0x140] sm:$0xf]
    %v2782 = vld [vmem:[#allocation17 + $0x144] sm:$0xf]
    %v2783 = vld [vmem:[#allocation17 + $0x148] sm:$0xf]
    %v2784 = vld [vmem:[#allocation17 + $0x14c] sm:$0xf]
    %v2785 = vld [vmem:[#allocation17 + $0x150] sm:$0xf]
    %v2786 = vld [vmem:[#allocation17 + $0x154] sm:$0xf]
    %v2787 = vld [vmem:[#allocation17 + $0x158] sm:$0xf]
    %v2788 = vld [vmem:[#allocation17 + $0x15c] sm:$0xf]
    %v2789 = vld [vmem:[#allocation17 + $0x160] sm:$0xf]
    %v2790 = vld [vmem:[#allocation17 + $0x164] sm:$0xf]
    %v2791 = vld [vmem:[#allocation17 + $0x168] sm:$0xf]
    %v2792 = vld [vmem:[#allocation17 + $0x16c] sm:$0xf]
    %v2793 = vld [vmem:[#allocation17 + $0x170] sm:$0xf]
    %v2794 = vld [vmem:[#allocation17 + $0x174] sm:$0xf]
    %v2795 = vld [vmem:[#allocation17 + $0x178] sm:$0xf]
    %v2796 = vld [vmem:[#allocation17 + $0x17c] sm:$0xf]
    %v2797 = vld [vmem:[#allocation17 + $0x180] sm:$0xf]
    %v2798 = vld [vmem:[#allocation17 + $0x184] sm:$0xf]
    %v2799 = vld [vmem:[#allocation17 + $0x188] sm:$0xf]
    %v2800 = vld [vmem:[#allocation17 + $0x18c] sm:$0xf]
    %v2801 = vld [vmem:[#allocation17 + $0x190] sm:$0xf]
    %v2802 = vld [vmem:[#allocation17 + $0x194] sm:$0xf]
    %v2803 = vld [vmem:[#allocation17 + $0x198] sm:$0xf]
    %v2804 = vld [vmem:[#allocation17 + $0x19c] sm:$0xf]
    %v2805 = vld [vmem:[#allocation17 + $0x1a0] sm:$0xf]
    %v2806 = vld [vmem:[#allocation17 + $0x1a4] sm:$0xf]
    %v2807 = vld [vmem:[#allocation17 + $0x1a8] sm:$0xf]
    %v2808 = vld [vmem:[#allocation17 + $0x1ac] sm:$0xf]
    %v2809 = vld [vmem:[#allocation17 + $0x1b0] sm:$0xf]
    %v2810 = vld [vmem:[#allocation17 + $0x1b4] sm:$0xf]
    %v2811 = vld [vmem:[#allocation17 + $0x1b8] sm:$0xf]
    %v2812 = vld [vmem:[#allocation17 + $0x1bc] sm:$0xf]
    %v2813 = vld [vmem:[#allocation17 + $0x1c0] sm:$0xf]
    %v2814 = vld [vmem:[#allocation17 + $0x1c4] sm:$0xf]
    %v2815 = vld [vmem:[#allocation17 + $0x1c8] sm:$0xf]
    %v2816 = vld [vmem:[#allocation17 + $0x1cc] sm:$0xf]
    %v2817 = vld [vmem:[#allocation17 + $0x1d0] sm:$0xf]
    %v2818 = vld [vmem:[#allocation17 + $0x1d4] sm:$0xf]
    %v2819 = vld [vmem:[#allocation17 + $0x1d8] sm:$0xf]
    %v2820 = vld [vmem:[#allocation17 + $0x1dc] sm:$0xf]
    %v2821 = vld [vmem:[#allocation17 + $0x1e0] sm:$0xf]
    %v2822 = vld [vmem:[#allocation17 + $0x1e4] sm:$0xf]
    %v2823 = vld [vmem:[#allocation17 + $0x1e8] sm:$0xf]
    %v2824 = vld [vmem:[#allocation17 + $0x1ec] sm:$0xf]
    %v2825 = vld [vmem:[#allocation17 + $0x1f0] sm:$0xf]
    %v2826 = vld [vmem:[#allocation17 + $0x1f4] sm:$0xf]
    %v2827 = vld [vmem:[#allocation17 + $0x1f8] sm:$0xf]
    %v2828 = vld [vmem:[#allocation17 + $0x1fc] sm:$0xf]
    %v2829 = vld [vmem:[%s11] sm:$0x1]
    %v2831 = vperm.slane %v2829, 0
    %v2961 = vunpack.c.l.b16 %v2701
    %v2962 = vunpack.c.l.b16 %v2702
    %v2963 = vunpack.c.l.b16 %v2703
    %v2964 = vunpack.c.l.b16 %v2704
    %v2965 = vunpack.c.l.b16 %v2705
    %v2966 = vunpack.c.l.b16 %v2706
    %v2967 = vunpack.c.l.b16 %v2707
    %v2968 = vunpack.c.l.b16 %v2708
    %v2969 = vunpack.c.l.b16 %v2709
    %v2970 = vunpack.c.l.b16 %v2710
    %v2971 = vunpack.c.l.b16 %v2711
    %v2972 = vunpack.c.l.b16 %v2712
    %v2973 = vunpack.c.l.b16 %v2713
    %v2974 = vunpack.c.l.b16 %v2714
    %v2975 = vunpack.c.l.b16 %v2715
    %v2976 = vunpack.c.l.b16 %v2716
    %v2977 = vunpack.c.l.b16 %v2717
    %v2978 = vunpack.c.l.b16 %v2718
    %v2979 = vunpack.c.l.b16 %v2719
    %v2980 = vunpack.c.l.b16 %v2720
    %v2981 = vunpack.c.l.b16 %v2721
    %v2982 = vunpack.c.l.b16 %v2722
    %v2983 = vunpack.c.l.b16 %v2723
    %v2984 = vunpack.c.l.b16 %v2724
    %v2985 = vunpack.c.l.b16 %v2725
    %v2986 = vunpack.c.l.b16 %v2726
    %v2987 = vunpack.c.l.b16 %v2727
    %v2988 = vunpack.c.l.b16 %v2728
    %v2989 = vunpack.c.l.b16 %v2729
    %v2990 = vunpack.c.l.b16 %v2730
    %v2991 = vunpack.c.l.b16 %v2731
    %v2992 = vunpack.c.l.b16 %v2732
    %v2993 = vunpack.c.l.b16 %v2733
    %v2994 = vunpack.c.l.b16 %v2734
    %v2995 = vunpack.c.l.b16 %v2735
    %v2996 = vunpack.c.l.b16 %v2736
    %v2997 = vunpack.c.l.b16 %v2737
    %v2998 = vunpack.c.l.b16 %v2738
    %v2999 = vunpack.c.l.b16 %v2739
    %v3000 = vunpack.c.l.b16 %v2740
    %v3001 = vunpack.c.l.b16 %v2741
    %v3002 = vunpack.c.l.b16 %v2742
    %v3003 = vunpack.c.l.b16 %v2743
    %v3004 = vunpack.c.l.b16 %v2744
    %v3005 = vunpack.c.l.b16 %v2745
    %v3006 = vunpack.c.l.b16 %v2746
    %v3007 = vunpack.c.l.b16 %v2747
    %v3008 = vunpack.c.l.b16 %v2748
    %v3009 = vunpack.c.l.b16 %v2749
    %v3010 = vunpack.c.l.b16 %v2750
    %v3011 = vunpack.c.l.b16 %v2751
    %v3012 = vunpack.c.l.b16 %v2752
    %v3013 = vunpack.c.l.b16 %v2753
    %v3014 = vunpack.c.l.b16 %v2754
    %v3015 = vunpack.c.l.b16 %v2755
    %v3016 = vunpack.c.l.b16 %v2756
    %v3017 = vunpack.c.l.b16 %v2757
    %v3018 = vunpack.c.l.b16 %v2758
    %v3019 = vunpack.c.l.b16 %v2759
    %v3020 = vunpack.c.l.b16 %v2760
    %v3021 = vunpack.c.l.b16 %v2761
    %v3022 = vunpack.c.l.b16 %v2762
    %v3023 = vunpack.c.l.b16 %v2763
    %v3024 = vunpack.c.l.b16 %v2764
    %v3025 = vunpack.c.l.b16 %v2765
    %v3026 = vunpack.c.l.b16 %v2766
    %v3027 = vunpack.c.l.b16 %v2767
    %v3028 = vunpack.c.l.b16 %v2768
    %v3029 = vunpack.c.l.b16 %v2769
    %v3030 = vunpack.c.l.b16 %v2770
    %v3031 = vunpack.c.l.b16 %v2771
    %v3032 = vunpack.c.l.b16 %v2772
    %v3033 = vunpack.c.l.b16 %v2773
    %v3034 = vunpack.c.l.b16 %v2774
    %v3035 = vunpack.c.l.b16 %v2775
    %v3036 = vunpack.c.l.b16 %v2776
    %v3037 = vunpack.c.l.b16 %v2777
    %v3038 = vunpack.c.l.b16 %v2778
    %v3039 = vunpack.c.l.b16 %v2779
    %v3040 = vunpack.c.l.b16 %v2780
    %v3041 = vunpack.c.l.b16 %v2781
    %v3042 = vunpack.c.l.b16 %v2782
    %v3043 = vunpack.c.l.b16 %v2783
    %v3044 = vunpack.c.l.b16 %v2784
    %v3045 = vunpack.c.l.b16 %v2785
    %v3046 = vunpack.c.l.b16 %v2786
    %v3047 = vunpack.c.l.b16 %v2787
    %v3048 = vunpack.c.l.b16 %v2788
    %v3049 = vunpack.c.l.b16 %v2789
    %v3050 = vunpack.c.l.b16 %v2790
    %v3051 = vunpack.c.l.b16 %v2791
    %v3052 = vunpack.c.l.b16 %v2792
    %v3053 = vunpack.c.l.b16 %v2793
    %v3054 = vunpack.c.l.b16 %v2794
    %v3055 = vunpack.c.l.b16 %v2795
    %v3056 = vunpack.c.l.b16 %v2796
    %v3057 = vunpack.c.l.b16 %v2797
    %v3058 = vunpack.c.l.b16 %v2798
    %v3059 = vunpack.c.l.b16 %v2799
    %v3060 = vunpack.c.l.b16 %v2800
    %v3061 = vunpack.c.l.b16 %v2801
    %v3062 = vunpack.c.l.b16 %v2802
    %v3063 = vunpack.c.l.b16 %v2803
    %v3064 = vunpack.c.l.b16 %v2804
    %v3065 = vunpack.c.l.b16 %v2805
    %v3066 = vunpack.c.l.b16 %v2806
    %v3067 = vunpack.c.l.b16 %v2807
    %v3068 = vunpack.c.l.b16 %v2808
    %v3069 = vunpack.c.l.b16 %v2809
    %v3070 = vunpack.c.l.b16 %v2810
    %v3071 = vunpack.c.l.b16 %v2811
    %v3072 = vunpack.c.l.b16 %v2812
    %v3073 = vunpack.c.l.b16 %v2813
    %v3074 = vunpack.c.l.b16 %v2814
    %v3075 = vunpack.c.l.b16 %v2815
    %v3076 = vunpack.c.l.b16 %v2816
    %v3077 = vunpack.c.l.b16 %v2817
    %v3078 = vunpack.c.l.b16 %v2818
    %v3079 = vunpack.c.l.b16 %v2819
    %v3080 = vunpack.c.l.b16 %v2820
    %v3081 = vunpack.c.l.b16 %v2821
    %v3082 = vunpack.c.l.b16 %v2822
    %v3083 = vunpack.c.l.b16 %v2823
    %v3084 = vunpack.c.l.b16 %v2824
    %v3085 = vunpack.c.l.b16 %v2825
    %v3086 = vunpack.c.l.b16 %v2826
    %v3087 = vunpack.c.l.b16 %v2827
    %v3088 = vunpack.c.l.b16 %v2828
    %v3089 = vpack.c.b16 %v2962, %v2961
    %v3090 = vpack.c.b16 %v2964, %v2963
    %v3091 = vpack.c.b16 %v2966, %v2965
    %v3092 = vpack.c.b16 %v2968, %v2967
    %v3093 = vpack.c.b16 %v2970, %v2969
    %v3094 = vpack.c.b16 %v2972, %v2971
    %v3095 = vpack.c.b16 %v2974, %v2973
    %v3096 = vpack.c.b16 %v2976, %v2975
    %v3097 = vpack.c.b16 %v2978, %v2977
    %v3098 = vpack.c.b16 %v2980, %v2979
    %v3099 = vpack.c.b16 %v2982, %v2981
    %v3100 = vpack.c.b16 %v2984, %v2983
    %v3101 = vpack.c.b16 %v2986, %v2985
    %v3102 = vpack.c.b16 %v2988, %v2987
    %v3103 = vpack.c.b16 %v2990, %v2989
    %v3104 = vpack.c.b16 %v2992, %v2991
    %v3105 = vpack.c.b16 %v2994, %v2993
    %v3106 = vpack.c.b16 %v2996, %v2995
    %v3107 = vpack.c.b16 %v2998, %v2997
    %v3108 = vpack.c.b16 %v3000, %v2999
    %v3109 = vpack.c.b16 %v3002, %v3001
    %v3110 = vpack.c.b16 %v3004, %v3003
    %v3111 = vpack.c.b16 %v3006, %v3005
    %v3112 = vpack.c.b16 %v3008, %v3007
    %v3113 = vpack.c.b16 %v3010, %v3009
    %v3114 = vpack.c.b16 %v3012, %v3011
    %v3115 = vpack.c.b16 %v3014, %v3013
    %v3116 = vpack.c.b16 %v3016, %v3015
    %v3117 = vpack.c.b16 %v3018, %v3017
    %v3118 = vpack.c.b16 %v3020, %v3019
    %v3119 = vpack.c.b16 %v3022, %v3021
    %v3120 = vpack.c.b16 %v3024, %v3023
    %v3121 = vpack.c.b16 %v3026, %v3025
    %v3122 = vpack.c.b16 %v3028, %v3027
    %v3123 = vpack.c.b16 %v3030, %v3029
    %v3124 = vpack.c.b16 %v3032, %v3031
    %v3125 = vpack.c.b16 %v3034, %v3033
    %v3126 = vpack.c.b16 %v3036, %v3035
    %v3127 = vpack.c.b16 %v3038, %v3037
    %v3128 = vpack.c.b16 %v3040, %v3039
    %v3129 = vpack.c.b16 %v3042, %v3041
    %v3130 = vpack.c.b16 %v3044, %v3043
    %v3131 = vpack.c.b16 %v3046, %v3045
    %v3132 = vpack.c.b16 %v3048, %v3047
    %v3133 = vpack.c.b16 %v3050, %v3049
    %v3134 = vpack.c.b16 %v3052, %v3051
    %v3135 = vpack.c.b16 %v3054, %v3053
    %v3136 = vpack.c.b16 %v3056, %v3055
    %v3137 = vpack.c.b16 %v3058, %v3057
    %v3138 = vpack.c.b16 %v3060, %v3059
    %v3139 = vpack.c.b16 %v3062, %v3061
    %v3140 = vpack.c.b16 %v3064, %v3063
    %v3141 = vpack.c.b16 %v3066, %v3065
    %v3142 = vpack.c.b16 %v3068, %v3067
    %v3143 = vpack.c.b16 %v3070, %v3069
    %v3144 = vpack.c.b16 %v3072, %v3071
    %v3145 = vpack.c.b16 %v3074, %v3073
    %v3146 = vpack.c.b16 %v3076, %v3075
    %v3147 = vpack.c.b16 %v3078, %v3077
    %v3148 = vpack.c.b16 %v3080, %v3079
    %v3149 = vpack.c.b16 %v3082, %v3081
    %v3150 = vpack.c.b16 %v3084, %v3083
    %v3151 = vpack.c.b16 %v3086, %v3085
    %v3152 = vpack.c.b16 %v3088, %v3087
    %3217 = vmatpush.bf16.msra.mxu0 %v3096
    %3218 = vmatpush.bf16.msra.mxu0 %v3095
    %3219 = vmatpush.bf16.msra.mxu0 %v3094
    %3220 = vmatpush.bf16.msra.mxu0 %v3093
    %3221 = vmatpush.bf16.msra.mxu0 %v3092
    %3222 = vmatpush.bf16.msra.mxu0 %v3091
    %3223 = vmatpush.bf16.msra.mxu0 %v3090
    %3224 = vmatpush.bf16.msra.mxu0 %v3089
    %3225 = vmatmul.bf16.gmra.mxu0 %v2697
    %v3226 = vpop.f32.mrf.mxu0
    %v3227 = vadd.f32 %v2831, %v3226
    %v3228 = vpop.f32.mrf.mxu0
    %3229 = vdwg.mxu0
    %3230 = vmatpush.bf16.msra.mxu0 %v3104
    %3231 = vmatpush.bf16.msra.mxu0 %v3103
    %3232 = vmatpush.bf16.msra.mxu0 %v3102
    %3233 = vmatpush.bf16.msra.mxu0 %v3101
    %3234 = vmatpush.bf16.msra.mxu0 %v3100
    %3235 = vmatpush.bf16.msra.mxu0 %v3099
    %3236 = vmatpush.bf16.msra.mxu0 %v3098
    %3237 = vmatpush.bf16.msra.mxu0 %v3097
    %3238 = vmatmul.bf16.gmra.mxu0 %v1076
    %v3239 = vpop.f32.mrf.mxu0
    %v3240 = vadd.f32 %v3227, %v3239
    %v3241 = vpop.f32.mrf.mxu0
    %3242 = vdwg.mxu0
    %3243 = vmatpush.bf16.msra.mxu0 %v3112
    %3244 = vmatpush.bf16.msra.mxu0 %v3111
    %3245 = vmatpush.bf16.msra.mxu0 %v3110
    %3246 = vmatpush.bf16.msra.mxu0 %v3109
    %3247 = vmatpush.bf16.msra.mxu0 %v3108
    %3248 = vmatpush.bf16.msra.mxu0 %v3107
    %3249 = vmatpush.bf16.msra.mxu0 %v3106
    %3250 = vmatpush.bf16.msra.mxu0 %v3105
    %3251 = vmatmul.bf16.gmra.mxu0 %v2698
    %v3252 = vpop.f32.mrf.mxu0
    %v3253 = vadd.f32 %v3240, %v3252
    %v3254 = vpop.f32.mrf.mxu0
    %3255 = vdwg.mxu0
    %3256 = vmatpush.bf16.msra.mxu0 %v3120
    %3257 = vmatpush.bf16.msra.mxu0 %v3119
    %3258 = vmatpush.bf16.msra.mxu0 %v3118
    %3259 = vmatpush.bf16.msra.mxu0 %v3117
    %3260 = vmatpush.bf16.msra.mxu0 %v3116
    %3261 = vmatpush.bf16.msra.mxu0 %v3115
    %3262 = vmatpush.bf16.msra.mxu0 %v3114
    %3263 = vmatpush.bf16.msra.mxu0 %v3113
    %3264 = vmatmul.bf16.gmra.mxu0 %v2184
    %v3265 = vpop.f32.mrf.mxu0
    %v3266 = vadd.f32 %v3253, %v3265
    %v3267 = vpop.f32.mrf.mxu0
    %3268 = vdwg.mxu0
    %3269 = vmatpush.bf16.msra.mxu0 %v3128
    %3270 = vmatpush.bf16.msra.mxu0 %v3127
    %3271 = vmatpush.bf16.msra.mxu0 %v3126
    %3272 = vmatpush.bf16.msra.mxu0 %v3125
    %3273 = vmatpush.bf16.msra.mxu0 %v3124
    %3274 = vmatpush.bf16.msra.mxu0 %v3123
    %3275 = vmatpush.bf16.msra.mxu0 %v3122
    %3276 = vmatpush.bf16.msra.mxu0 %v3121
    %3277 = vmatmul.bf16.gmra.mxu0 %v1028
    %v3278 = vpop.f32.mrf.mxu0
    %v3279 = vadd.f32 %v3266, %v3278
    %v3280 = vpop.f32.mrf.mxu0
    %3281 = vdwg.mxu0
    %3282 = vmatpush.bf16.msra.mxu0 %v3136
    %3283 = vmatpush.bf16.msra.mxu0 %v3135
    %3284 = vmatpush.bf16.msra.mxu0 %v3134
    %3285 = vmatpush.bf16.msra.mxu0 %v3133
    %3286 = vmatpush.bf16.msra.mxu0 %v3132
    %3287 = vmatpush.bf16.msra.mxu0 %v3131
    %3288 = vmatpush.bf16.msra.mxu0 %v3130
    %3289 = vmatpush.bf16.msra.mxu0 %v3129
    %3290 = vmatmul.bf16.gmra.mxu0 %v1586
    %v3291 = vpop.f32.mrf.mxu0
    %v3292 = vadd.f32 %v3279, %v3291
    %v3293 = vpop.f32.mrf.mxu0
    %3294 = vdwg.mxu0
    %3295 = vmatpush.bf16.msra.mxu0 %v3144
    %3296 = vmatpush.bf16.msra.mxu0 %v3143
    %3297 = vmatpush.bf16.msra.mxu0 %v3142
    %3298 = vmatpush.bf16.msra.mxu0 %v3141
    %3299 = vmatpush.bf16.msra.mxu0 %v3140
    %3300 = vmatpush.bf16.msra.mxu0 %v3139
    %3301 = vmatpush.bf16.msra.mxu0 %v3138
    %3302 = vmatpush.bf16.msra.mxu0 %v3137
    %3303 = vmatmul.bf16.gmra.mxu0 %v2136
    %v3304 = vpop.f32.mrf.mxu0
    %v3305 = vadd.f32 %v3292, %v3304
    %v3306 = vpop.f32.mrf.mxu0
    %3307 = vdwg.mxu0
    %3308 = vmatpush.bf16.msra.mxu0 %v3152
    %3309 = vmatpush.bf16.msra.mxu0 %v3151
    %3310 = vmatpush.bf16.msra.mxu0 %v3150
    %3311 = vmatpush.bf16.msra.mxu0 %v3149
    %3312 = vmatpush.bf16.msra.mxu0 %v3148
    %3313 = vmatpush.bf16.msra.mxu0 %v3147
    %3314 = vmatpush.bf16.msra.mxu0 %v3146
    %3315 = vmatpush.bf16.msra.mxu0 %v3145
    %3316 = vmatmul.bf16.gmra.mxu0 %v2694
    %v3317 = vpop.f32.mrf.mxu0
    %v3318 = vadd.f32 %v3305, %v3317
    %v3319 = vpop.f32.mrf.mxu0
    %3320 = vdwg.mxu0
    %3321 = vst [vmem:[#allocation19] sm:$0xff] %v3318
    // Predicated region
    $region90: #{tpu_custom_call.1} parent=1 // pred_check
      _
    $region91: #{tpu_custom_call.1} parent=1 // pred_check_branch
      %3323 = sbr.rel (0) target = $region93
    $region92: #{tpu_custom_call.1} parent=1 // pred_region
      %3325 = vsyncadd [#allocation4], 0
      %s3327 = sshll.u32 [#allocation19], 4
      %s3328 = int_to_ptr.vmem [resolvable:$true] %s3327
      %s3329 = sshll.u32 %s12, 4
      %s3330 = int_to_ptr.hbm [resolvable:$true] %s3329
      %3332 = dma.vmem_to_hbm [thread:$0]  %s3328, 128, %s3330, [#allocation4]
    $region93: #{tpu_custom_call.1} parent=1 // pred_fallthru
      _
    // Predicated region
    $region94: #{tpu_custom_call.1} parent=1 // pred_check
      _
    $region95: #{tpu_custom_call.1} parent=1 // pred_check_branch
      %3334 = sbr.rel (0) target = $region97
    $region96: #{tpu_custom_call.1} parent=1 // pred_region
      %3336 = dma.done [#allocation4], 128
    $region97: #{tpu_custom_call.1} parent=1 // pred_fallthru
      _
    %3337 = vsyncpa [#allocation3], 1
    %3338 = vsyncpa [#allocation6], 1
    %3339 = vsyncpa [#allocation9], 1
    %3340 = vsyncpa [#allocation12], 1
    %3341 = vsyncpa [#allocation15], 1
    %3342 = vsyncpa [#allocation18], 1
    %3343 = vsyncpa [#allocation4], 1

</llo_original>
